<compile_context>
chip_gen: v7x
topology: tpu7x:2x2x1
jax: 0.10.0
libtpu: 0.0.40
codegen_flags: <defaults>
</compile_context>

<pallas_src>
import functools

import jax
import jax.numpy as jnp
from jax.experimental import pallas as pl
from jax.experimental.pallas import tpu as pltpu


def _round_up(v, m):
    return ((v + m - 1) // m) * m


def _vmem_limit_bytes():
    # Per-generation budget: ~75% of physical VMEM, capped at 100 MiB.
    #   v5e/v6e (128 MiB physical) -> 96 MiB, v7x (64 MiB physical) -> 48 MiB.
    cap = 64 * 1024 * 1024
    try:
        cap = int(getattr(pltpu.get_tpu_info(), "vmem_capacity_bytes", cap))
    except Exception:
        pass
    return min(int(cap * 0.75), 100 * 1024 * 1024)


_VMEM_LIMIT = _vmem_limit_bytes()


# --------------------------------------------------------------------------
# Kernels
# --------------------------------------------------------------------------
def _proj_kernel(x_ref, w_ref, z_ref, acc_ref):
    # z = x @ w1 : feature projection done BEFORE the NxN propagation.
    # K-tiled over the feature axis with an f32 VMEM accumulator.
    k = pl.program_id(1)

    @pl.when(k == 0)
    def _():
        acc_ref[...] = jnp.zeros_like(acc_ref)

    acc_ref[...] += jnp.dot(
        x_ref[...], w_ref[...], preferred_element_type=jnp.float32
    )

    @pl.when(k == pl.num_programs(1) - 1)
    def _():
        z_ref[...] = acc_ref[...].astype(z_ref.dtype)


def _prop_fused_kernel(adj_ref, z_ref, b_ref, w_ref, out_ref, acc_ref):
    # out = relu(adj @ z + b) @ w   (layer-1 propagation + fused next projection)
    k = pl.program_id(1)

    @pl.when(k == 0)
    def _():
        acc_ref[...] = jnp.zeros_like(acc_ref)

    acc_ref[...] += jnp.dot(
        adj_ref[...], z_ref[...], preferred_element_type=jnp.float32
    )

    @pl.when(k == pl.num_programs(1) - 1)
    def _():
        h = jnp.maximum(acc_ref[...] + b_ref[...], 0.0)          # f32 epilogue
        out_ref[...] = jnp.dot(
            h.astype(w_ref.dtype), w_ref[...], preferred_element_type=jnp.float32
        ).astype(out_ref.dtype)


def _prop_bias_kernel(adj_ref, z_ref, b_ref, out_ref, acc_ref):
    # out = adj @ z + b   (layer-2 propagation, narrow contraction already done)
    k = pl.program_id(1)

    @pl.when(k == 0)
    def _():
        acc_ref[...] = jnp.zeros_like(acc_ref)

    acc_ref[...] += jnp.dot(
        adj_ref[...], z_ref[...], preferred_element_type=jnp.float32
    )

    @pl.when(k == pl.num_programs(1) - 1)
    def _():
        out_ref[...] = (acc_ref[...] + b_ref[...]).astype(out_ref.dtype)


# --------------------------------------------------------------------------
# Wrapper
# --------------------------------------------------------------------------
@functools.partial(jax.jit, static_argnames=("use_bf16",))
def gcn_forward(x, adj, w1, b1, w2, b2, *, use_bf16=True):
    """x: [N, nfeat], adj: [N, N] dense, w1: [nfeat, nhid], b1: [1, nhid],
    w2: [nhid, nclass], b2: [1, nclass] -> [N, nclass] float32."""
    N, nfeat = x.shape
    nhid = w1.shape[1]
    nclass = w2.shape[1]

    cdt = jnp.bfloat16 if use_bf16 else jnp.float32
    isz = 2 if use_bf16 else 4

    # Lane-dense padding of feature axes.
    NF = _round_up(nfeat, 128)
    NH = _round_up(nhid, 128)
    NC = _round_up(nclass, 128)

    # Node axis: pad UP TO the tile (multiple of 512) so TM/TK stay big, and
    # keep grid_rows >= 2 so the "parallel" row axis can feed both v7x cores.
    NP = _round_up(N, 512)
    TM = 512 if NP >= 1024 else 256               # node-row tile (>= 2 row tiles)
    TK = 1024 if NP % 1024 == 0 else 512          # adj contraction tile
    grid_rows = NP // TM
    grid_k = NP // TK

    # Feature-contraction tile for the projection kernel.
    if NF <= 4096:
        TKF = NF
    else:
        TKF = next(t for t in (4096, 2048, 1024, 512, 256, 128) if NF % t == 0)
    grid_kf = NF // TKF

    pad2 = lambda a, r, c: jnp.pad(a, ((0, r - a.shape[0]), (0, c - a.shape[1])))
    b1 = b1.reshape(1, -1)
    b2 = b2.reshape(1, -1)

    # Zero padding everywhere (adj's padded rows/cols MUST stay exactly zero).
    x_p = pad2(x, NP, NF).astype(cdt)
    adj_p = pad2(adj, NP, NP).astype(cdt)
    w1_p = pad2(w1, NF, NH).astype(cdt)
    w2_p = pad2(w2, NH, NC).astype(cdt)
    b1_p = pad2(b1, 1, NH).astype(jnp.float32)
    b2_p = pad2(b2, 1, NC).astype(jnp.float32)

    cparams = lambda: pltpu.CompilerParams(
        dimension_semantics=("parallel", "arbitrary"),
        vmem_limit_bytes=_VMEM_LIMIT,
    )

    # ---- 1) z1 = x @ w1 ---------------------------------------------------
    z1 = pl.pallas_call(
        _proj_kernel,
        out_shape=jax.ShapeDtypeStruct((NP, NH), cdt),
        grid_spec=pltpu.PrefetchScalarGridSpec(
            num_scalar_prefetch=0,
            grid=(grid_rows, grid_kf),
            in_specs=[
                pl.BlockSpec((TM, TKF), lambda i, k: (i, k)),   # x tile
                pl.BlockSpec((TKF, NH), lambda i, k: (k, 0)),   # w1 tile
            ],
            out_specs=pl.BlockSpec((TM, NH), lambda i, k: (i, 0)),
            scratch_shapes=[pltpu.VMEM((TM, NH), jnp.float32)],
        ),
        compiler_params=cparams(),
        cost_estimate=pl.CostEstimate(
            flops=2 * NP * NF * NH,
            transcendentals=0,
            bytes_accessed=(NP * NF + grid_rows * NF * NH + NP * NH) * isz,
        ),
    )(x_p, w1_p)

    # ---- 2) z2 = relu(adj @ z1 + b1) @ w2 ----------------------------------
    z2 = pl.pallas_call(
        _prop_fused_kernel,
        out_shape=jax.ShapeDtypeStruct((NP, NC), cdt),
        grid_spec=pltpu.PrefetchScalarGridSpec(
            num_scalar_prefetch=0,
            grid=(grid_rows, grid_k),
            in_specs=[
                pl.BlockSpec((TM, TK), lambda i, k: (i, k)),   # adj tile
                pl.BlockSpec((TK, NH), lambda i, k: (k, 0)),   # z1 tile
                pl.BlockSpec((1, NH), lambda i, k: (0, 0)),    # b1
                pl.BlockSpec((NH, NC), lambda i, k: (0, 0)),   # w2
            ],
            out_specs=pl.BlockSpec((TM, NC), lambda i, k: (i, 0)),
            scratch_shapes=[pltpu.VMEM((TM, NH), jnp.float32)],
        ),
        compiler_params=cparams(),
        cost_estimate=pl.CostEstimate(
            flops=2 * NP * NP * NH + 2 * NP * NH * NC,
            transcendentals=0,
            bytes_accessed=(NP * NP + grid_rows * NP * NH + NP * NC + NH * NC) * isz,
        ),
    )(adj_p, z1, b1_p, w2_p)

    # ---- 3) out = adj @ z2 + b2 --------------------------------------------
    out_p = pl.pallas_call(
        _prop_bias_kernel,
        out_shape=jax.ShapeDtypeStruct((NP, NC), jnp.float32),
        grid_spec=pltpu.PrefetchScalarGridSpec(
            num_scalar_prefetch=0,
            grid=(grid_rows, grid_k),
            in_specs=[
                pl.BlockSpec((TM, TK), lambda i, k: (i, k)),   # adj tile
                pl.BlockSpec((TK, NC), lambda i, k: (k, 0)),   # z2 tile
                pl.BlockSpec((1, NC), lambda i, k: (0, 0)),    # b2
            ],
            out_specs=pl.BlockSpec((TM, NC), lambda i, k: (i, 0)),
            scratch_shapes=[pltpu.VMEM((TM, NC), jnp.float32)],
        ),
        compiler_params=cparams(),
        cost_estimate=pl.CostEstimate(
            flops=2 * NP * NP * NC,
            transcendentals=0,
            bytes_accessed=(NP * NP + grid_rows * NP * NC) * isz + NP * NC * 4,
        ),
    )(adj_p, z2, b2_p)

    return out_p[:N, :nclass]


# --------------------------------------------------------------------------
# Reference + demo
# --------------------------------------------------------------------------
def _init_linear(key, fan_in, fan_out):
    # torch.nn.Linear default init: U(-1/sqrt(fan_in), 1/sqrt(fan_in)).
    kw, kb = jax.random.split(key)
    bound = 1.0 / jnp.sqrt(jnp.float32(fan_in))
    w = jax.random.uniform(kw, (fan_in, fan_out), jnp.float32, -bound, bound)
    b = jax.random.uniform(kb, (1, fan_out), jnp.float32, -bound, bound)
    return w, b


def _ref_forward(x, adj, w1, b1, w2, b2, use_bf16):
    # Plain-JAX reference; with use_bf16 it mirrors the kernel numerics
    # (bf16 MXU operands, f32 accumulation), otherwise full f32 module math.
    cast = (lambda a: a.astype(jnp.bfloat16)) if use_bf16 else (lambda a: a)
    z1 = jnp.dot(cast(x), cast(w1), preferred_element_type=jnp.float32)
    h = jnp.maximum(
        jnp.dot(cast(adj), cast(z1), preferred_element_type=jnp.float32) + b1, 0.0
    )
    z2 = jnp.dot(cast(h), cast(w2), preferred_element_type=jnp.float32)
    return jnp.dot(cast(adj), cast(z2), preferred_element_type=jnp.float32) + b2


if __name__ == "__main__":
    # Small, module-consistent shapes: N nodes, nfeat -> nhid -> nclass.
    N, nfeat, nhid, nclass = 16, 16, 32, 8

    key = jax.random.PRNGKey(0)
    kx, kadj, k1, k2 = jax.random.split(key, 4)

    x = jax.random.normal(kx, (N, nfeat), jnp.float32)
    # Symmetric row-normalized dense adjacency (stand-in for the sparse adj).
    a = (jax.random.uniform(kadj, (N, N)) < 0.3).astype(jnp.float32)
    a = jnp.maximum(a, a.T) + jnp.eye(N, dtype=jnp.float32)
    adj = a / jnp.sum(a, axis=1, keepdims=True)

    w1, b1 = _init_linear(k1, nfeat, nhid)   # gc1.linear
    w2, b2 = _init_linear(k2, nhid, nclass)  # gc2

    out = gcn_forward(x, adj, w1, b1, w2, b2, use_bf16=True)
    out = jax.block_until_ready(out)
    assert out.shape == (N, nclass)

    # Tight check vs a reference mirroring the kernel numerics (bf16 feeds).
    ref_mirror = _ref_forward(x, adj, w1, b1, w2, b2, use_bf16=True)
    assert jnp.allclose(out, ref_mirror, atol=5e-3, rtol=5e-3)

    # Loose check vs the exact f32 module math (bf16 streaming tolerance).
    ref_f32 = _ref_forward(x, adj, w1, b1, w2, b2, use_bf16=False)
    assert jnp.allclose(out, ref_f32, atol=5e-2, rtol=5e-2)

    print("KERNEL_OK")
</pallas_src>

<mosaic_0001>
module attributes {stable_mosaic.version = 11 : i64} {
  func.func @_proj_kernel(%arg0: i32, %arg1: i32, %arg2: memref<256x128xbf16, #tpu.memory_space<vmem>>, %arg3: memref<128x128xbf16, #tpu.memory_space<vmem>>, %arg4: memref<256x128xbf16, #tpu.memory_space<vmem>>, %arg5: memref<256x128xf32, #tpu.memory_space<vmem>>) attributes {dimension_semantics = [#tpu.dimension_semantics<parallel>, #tpu.dimension_semantics<arbitrary>], iteration_bounds = array<i64: 2, 1>, scalar_prefetch = 0 : i64, scratch_operands = 1 : i64, tpu.core_type = #tpu.core_type<tc>, window_params = [{transform_indices = @transform_0, window_bounds = array<i64: 256, 128>}, {transform_indices = @transform_1, window_bounds = array<i64: 128, 128>}, {transform_indices = @transform_2, window_bounds = array<i64: 256, 128>}]} {
    %c0_i32 = arith.constant 0 : i32
    %0 = arith.cmpi eq, %arg1, %c0_i32 : i32
    %1 = arith.extui %0 : i1 to i32
    %c0_i32_0 = arith.constant 0 : i32
    %2 = arith.cmpi ne, %1, %c0_i32_0 : i32
    scf.if %2 {
      %cst_10 = arith.constant 0.000000e+00 : f32
      %12 = vector.broadcast %cst_10 : f32 to vector<256x128xf32>
      %c0_11 = arith.constant 0 : index
      %c0_12 = arith.constant 0 : index
      %13 = vector.load %arg5[%c0_11, %c0_12] : memref<256x128xf32, #tpu.memory_space<vmem>>, vector<256x128xf32>
      tpu.vector_store %arg5[%c0_11, %c0_12], %12 {strides = array<i32>} : memref<256x128xf32, #tpu.memory_space<vmem>>, vector<256x128xf32>,
    } else {
    }
    %c0 = arith.constant 0 : index
    %c0_1 = arith.constant 0 : index
    %3 = vector.load %arg5[%c0, %c0_1] : memref<256x128xf32, #tpu.memory_space<vmem>>, vector<256x128xf32>
    %c0_2 = arith.constant 0 : index
    %c0_3 = arith.constant 0 : index
    %4 = vector.load %arg2[%c0_2, %c0_3] : memref<256x128xbf16, #tpu.memory_space<vmem>>, vector<256x128xbf16>
    %c0_4 = arith.constant 0 : index
    %c0_5 = arith.constant 0 : index
    %5 = vector.load %arg3[%c0_4, %c0_5] : memref<128x128xbf16, #tpu.memory_space<vmem>>, vector<128x128xbf16>
    %cst = arith.constant dense<0.000000e+00> : vector<256x128xf32>
    %6 = tpu.matmul %4, %5, %cst {dimension_numbers = #tpu.dot_dimension_numbers<[1], [0], [0], [1], [0, 0, 1, 1], [], []>} : vector<256x128xbf16>, vector<128x128xbf16>, vector<256x128xf32> -> vector<256x128xf32>
    %7 = arith.addf %3, %6 : vector<256x128xf32>
    %c0_6 = arith.constant 0 : index
    %c0_7 = arith.constant 0 : index
    %8 = vector.load %arg5[%c0_6, %c0_7] : memref<256x128xf32, #tpu.memory_space<vmem>>, vector<256x128xf32>
    tpu.vector_store %arg5[%c0_6, %c0_7], %7 {strides = array<i32>} : memref<256x128xf32, #tpu.memory_space<vmem>>, vector<256x128xf32>,
    %c0_i32_8 = arith.constant 0 : i32
    %9 = arith.cmpi eq, %arg1, %c0_i32_8 : i32
    %10 = arith.extui %9 : i1 to i32
    %c0_i32_9 = arith.constant 0 : i32
    %11 = arith.cmpi ne, %10, %c0_i32_9 : i32
    scf.if %11 {
      %c0_10 = arith.constant 0 : index
      %c0_11 = arith.constant 0 : index
      %12 = vector.load %arg5[%c0_10, %c0_11] : memref<256x128xf32, #tpu.memory_space<vmem>>, vector<256x128xf32>
      %13 = arith.truncf %12 : vector<256x128xf32> to vector<256x128xbf16>
      %c0_12 = arith.constant 0 : index
      %c0_13 = arith.constant 0 : index
      %14 = vector.load %arg4[%c0_12, %c0_13] : memref<256x128xbf16, #tpu.memory_space<vmem>>, vector<256x128xbf16>
      tpu.vector_store %arg4[%c0_12, %c0_13], %13 {strides = array<i32>} : memref<256x128xbf16, #tpu.memory_space<vmem>>, vector<256x128xbf16>,
    } else {
    }
    return
  }
  func.func @transform_0(%arg0: i32, %arg1: i32) -> (i32, i32) {
    %c0_i32 = arith.constant 0 : i32
    return %arg0, %arg1 : i32, i32
  }
  func.func @transform_1(%arg0: i32, %arg1: i32) -> (i32, i32) {
    %c0_i32 = arith.constant 0 : i32
    %c0_i32_0 = arith.constant 0 : i32
    return %arg1, %c0_i32 : i32, i32
  }
  func.func @transform_2(%arg0: i32, %arg1: i32) -> (i32, i32) {
    %c0_i32 = arith.constant 0 : i32
    %c0_i32_0 = arith.constant 0 : i32
    return %arg0, %c0_i32 : i32, i32
  }
}

module attributes {stable_mosaic.version = 11 : i64} {
  func.func @_prop_bias_kernel(%arg0: i32, %arg1: i32, %arg2: memref<256x512xbf16, #tpu.memory_space<vmem>>, %arg3: memref<512x128xbf16, #tpu.memory_space<vmem>>, %arg4: memref<1x128xf32, #tpu.memory_space<vmem>>, %arg5: memref<256x128xf32, #tpu.memory_space<vmem>>, %arg6: memref<256x128xf32, #tpu.memory_space<vmem>>) attributes {dimension_semantics = [#tpu.dimension_semantics<parallel>, #tpu.dimension_semantics<arbitrary>], iteration_bounds = array<i64: 2, 1>, scalar_prefetch = 0 : i64, scratch_operands = 1 : i64, tpu.core_type = #tpu.core_type<tc>, window_params = [{transform_indices = @transform_0, window_bounds = array<i64: 256, 512>}, {transform_indices = @transform_1, window_bounds = array<i64: 512, 128>}, {pipeline_mode = #tpu.pipeline_mode<synchronous>, transform_indices = @transform_2, window_bounds = array<i64: 1, 128>}, {transform_indices = @transform_3, window_bounds = array<i64: 256, 128>}]} {
    %c0_i32 = arith.constant 0 : i32
    %0 = arith.cmpi eq, %arg1, %c0_i32 : i32
    %1 = arith.extui %0 : i1 to i32
    %c0_i32_0 = arith.constant 0 : i32
    %2 = arith.cmpi ne, %1, %c0_i32_0 : i32
    scf.if %2 {
      %cst_10 = arith.constant 0.000000e+00 : f32
      %12 = vector.broadcast %cst_10 : f32 to vector<256x128xf32>
      %c0_11 = arith.constant 0 : index
      %c0_12 = arith.constant 0 : index
      %13 = vector.load %arg6[%c0_11, %c0_12] : memref<256x128xf32, #tpu.memory_space<vmem>>, vector<256x128xf32>
      tpu.vector_store %arg6[%c0_11, %c0_12], %12 {strides = array<i32>} : memref<256x128xf32, #tpu.memory_space<vmem>>, vector<256x128xf32>,
    } else {
    }
    %c0 = arith.constant 0 : index
    %c0_1 = arith.constant 0 : index
    %3 = vector.load %arg6[%c0, %c0_1] : memref<256x128xf32, #tpu.memory_space<vmem>>, vector<256x128xf32>
    %c0_2 = arith.constant 0 : index
    %c0_3 = arith.constant 0 : index
    %4 = vector.load %arg2[%c0_2, %c0_3] : memref<256x512xbf16, #tpu.memory_space<vmem>>, vector<256x512xbf16>
    %c0_4 = arith.constant 0 : index
    %c0_5 = arith.constant 0 : index
    %5 = vector.load %arg3[%c0_4, %c0_5] : memref<512x128xbf16, #tpu.memory_space<vmem>>, vector<512x128xbf16>
    %cst = arith.constant dense<0.000000e+00> : vector<256x128xf32>
    %6 = tpu.matmul %4, %5, %cst {dimension_numbers = #tpu.dot_dimension_numbers<[1], [0], [0], [1], [0, 0, 1, 1], [], []>} : vector<256x512xbf16>, vector<512x128xbf16>, vector<256x128xf32> -> vector<256x128xf32>
    %7 = arith.addf %3, %6 : vector<256x128xf32>
    %c0_6 = arith.constant 0 : index
    %c0_7 = arith.constant 0 : index
    %8 = vector.load %arg6[%c0_6, %c0_7] : memref<256x128xf32, #tpu.memory_space<vmem>>, vector<256x128xf32>
    tpu.vector_store %arg6[%c0_6, %c0_7], %7 {strides = array<i32>} : memref<256x128xf32, #tpu.memory_space<vmem>>, vector<256x128xf32>,
    %c0_i32_8 = arith.constant 0 : i32
    %9 = arith.cmpi eq, %arg1, %c0_i32_8 : i32
    %10 = arith.extui %9 : i1 to i32
    %c0_i32_9 = arith.constant 0 : i32
    %11 = arith.cmpi ne, %10, %c0_i32_9 : i32
    scf.if %11 {
      %c0_10 = arith.constant 0 : index
      %c0_11 = arith.constant 0 : index
      %12 = vector.load %arg6[%c0_10, %c0_11] : memref<256x128xf32, #tpu.memory_space<vmem>>, vector<256x128xf32>
      %c0_12 = arith.constant 0 : index
      %c0_13 = arith.constant 0 : index
      %13 = vector.load %arg4[%c0_12, %c0_13] : memref<1x128xf32, #tpu.memory_space<vmem>>, vector<1x128xf32>
      %14 = vector.broadcast %13 : vector<1x128xf32> to vector<256x128xf32>
      %15 = arith.addf %12, %14 : vector<256x128xf32>
      %c0_14 = arith.constant 0 : index
      %c0_15 = arith.constant 0 : index
      %16 = vector.load %arg5[%c0_14, %c0_15] : memref<256x128xf32, #tpu.memory_space<vmem>>, vector<256x128xf32>
      tpu.vector_store %arg5[%c0_14, %c0_15], %15 {strides = array<i32>} : memref<256x128xf32, #tpu.memory_space<vmem>>, vector<256x128xf32>,
    } else {
    }
    return
  }
  func.func @transform_0(%arg0: i32, %arg1: i32) -> (i32, i32) {
    %c0_i32 = arith.constant 0 : i32
    return %arg0, %arg1 : i32, i32
  }
  func.func @transform_1(%arg0: i32, %arg1: i32) -> (i32, i32) {
    %c0_i32 = arith.constant 0 : i32
    %c0_i32_0 = arith.constant 0 : i32
    return %arg1, %c0_i32 : i32, i32
  }
  func.func @transform_2(%arg0: i32, %arg1: i32) -> (i32, i32) {
    %c0_i32 = arith.constant 0 : i32
    %c0_i32_0 = arith.constant 0 : i32
    %c0_i32_1 = arith.constant 0 : i32
    return %c0_i32, %c0_i32_0 : i32, i32
  }
  func.func @transform_3(%arg0: i32, %arg1: i32) -> (i32, i32) {
    %c0_i32 = arith.constant 0 : i32
    %c0_i32_0 = arith.constant 0 : i32
    return %arg0, %c0_i32 : i32, i32
  }
}

module attributes {stable_mosaic.version = 11 : i64} {
  func.func @_prop_fused_kernel(%arg0: i32, %arg1: i32, %arg2: memref<256x512xbf16, #tpu.memory_space<vmem>>, %arg3: memref<512x128xbf16, #tpu.memory_space<vmem>>, %arg4: memref<1x128xf32, #tpu.memory_space<vmem>>, %arg5: memref<128x128xbf16, #tpu.memory_space<vmem>>, %arg6: memref<256x128xbf16, #tpu.memory_space<vmem>>, %arg7: memref<256x128xf32, #tpu.memory_space<vmem>>) attributes {dimension_semantics = [#tpu.dimension_semantics<parallel>, #tpu.dimension_semantics<arbitrary>], iteration_bounds = array<i64: 2, 1>, scalar_prefetch = 0 : i64, scratch_operands = 1 : i64, tpu.core_type = #tpu.core_type<tc>, window_params = [{transform_indices = @transform_0, window_bounds = array<i64: 256, 512>}, {transform_indices = @transform_1, window_bounds = array<i64: 512, 128>}, {pipeline_mode = #tpu.pipeline_mode<synchronous>, transform_indices = @transform_2, window_bounds = array<i64: 1, 128>}, {pipeline_mode = #tpu.pipeline_mode<synchronous>, transform_indices = @transform_3, window_bounds = array<i64: 128, 128>}, {transform_indices = @transform_4, window_bounds = array<i64: 256, 128>}]} {
    %c0_i32 = arith.constant 0 : i32
    %0 = arith.cmpi eq, %arg1, %c0_i32 : i32
    %1 = arith.extui %0 : i1 to i32
    %c0_i32_0 = arith.constant 0 : i32
    %2 = arith.cmpi ne, %1, %c0_i32_0 : i32
    scf.if %2 {
      %cst_10 = arith.constant 0.000000e+00 : f32
      %12 = vector.broadcast %cst_10 : f32 to vector<256x128xf32>
      %c0_11 = arith.constant 0 : index
      %c0_12 = arith.constant 0 : index
      %13 = vector.load %arg7[%c0_11, %c0_12] : memref<256x128xf32, #tpu.memory_space<vmem>>, vector<256x128xf32>
      tpu.vector_store %arg7[%c0_11, %c0_12], %12 {strides = array<i32>} : memref<256x128xf32, #tpu.memory_space<vmem>>, vector<256x128xf32>,
    } else {
    }
    %c0 = arith.constant 0 : index
    %c0_1 = arith.constant 0 : index
    %3 = vector.load %arg7[%c0, %c0_1] : memref<256x128xf32, #tpu.memory_space<vmem>>, vector<256x128xf32>
    %c0_2 = arith.constant 0 : index
    %c0_3 = arith.constant 0 : index
    %4 = vector.load %arg2[%c0_2, %c0_3] : memref<256x512xbf16, #tpu.memory_space<vmem>>, vector<256x512xbf16>
    %c0_4 = arith.constant 0 : index
    %c0_5 = arith.constant 0 : index
    %5 = vector.load %arg3[%c0_4, %c0_5] : memref<512x128xbf16, #tpu.memory_space<vmem>>, vector<512x128xbf16>
    %cst = arith.constant dense<0.000000e+00> : vector<256x128xf32>
    %6 = tpu.matmul %4, %5, %cst {dimension_numbers = #tpu.dot_dimension_numbers<[1], [0], [0], [1], [0, 0, 1, 1], [], []>} : vector<256x512xbf16>, vector<512x128xbf16>, vector<256x128xf32> -> vector<256x128xf32>
    %7 = arith.addf %3, %6 : vector<256x128xf32>
    %c0_6 = arith.constant 0 : index
    %c0_7 = arith.constant 0 : index
    %8 = vector.load %arg7[%c0_6, %c0_7] : memref<256x128xf32, #tpu.memory_space<vmem>>, vector<256x128xf32>
    tpu.vector_store %arg7[%c0_6, %c0_7], %7 {strides = array<i32>} : memref<256x128xf32, #tpu.memory_space<vmem>>, vector<256x128xf32>,
    %c0_i32_8 = arith.constant 0 : i32
    %9 = arith.cmpi eq, %arg1, %c0_i32_8 : i32
    %10 = arith.extui %9 : i1 to i32
    %c0_i32_9 = arith.constant 0 : i32
    %11 = arith.cmpi ne, %10, %c0_i32_9 : i32
    scf.if %11 {
      %c0_10 = arith.constant 0 : index
      %c0_11 = arith.constant 0 : index
      %12 = vector.load %arg7[%c0_10, %c0_11] : memref<256x128xf32, #tpu.memory_space<vmem>>, vector<256x128xf32>
      %c0_12 = arith.constant 0 : index
      %c0_13 = arith.constant 0 : index
      %13 = vector.load %arg4[%c0_12, %c0_13] : memref<1x128xf32, #tpu.memory_space<vmem>>, vector<1x128xf32>
      %14 = vector.broadcast %13 : vector<1x128xf32> to vector<256x128xf32>
      %15 = arith.addf %12, %14 : vector<256x128xf32>
      %cst_14 = arith.constant 0.000000e+00 : f32
      %16 = vector.broadcast %cst_14 : f32 to vector<256x128xf32>
      %17 = arith.maximumf %15, %16 : vector<256x128xf32>
      %18 = arith.truncf %17 : vector<256x128xf32> to vector<256x128xbf16>
      %c0_15 = arith.constant 0 : index
      %c0_16 = arith.constant 0 : index
      %19 = vector.load %arg5[%c0_15, %c0_16] : memref<128x128xbf16, #tpu.memory_space<vmem>>, vector<128x128xbf16>
      %cst_17 = arith.constant dense<0.000000e+00> : vector<256x128xf32>
      %20 = tpu.matmul %18, %19, %cst_17 {dimension_numbers = #tpu.dot_dimension_numbers<[1], [0], [0], [1], [0, 0, 1, 1], [], []>} : vector<256x128xbf16>, vector<128x128xbf16>, vector<256x128xf32> -> vector<256x128xf32>
      %21 = arith.truncf %20 : vector<256x128xf32> to vector<256x128xbf16>
      %c0_18 = arith.constant 0 : index
      %c0_19 = arith.constant 0 : index
      %22 = vector.load %arg6[%c0_18, %c0_19] : memref<256x128xbf16, #tpu.memory_space<vmem>>, vector<256x128xbf16>
      tpu.vector_store %arg6[%c0_18, %c0_19], %21 {strides = array<i32>} : memref<256x128xbf16, #tpu.memory_space<vmem>>, vector<256x128xbf16>,
    } else {
    }
    return
  }
  func.func @transform_0(%arg0: i32, %arg1: i32) -> (i32, i32) {
    %c0_i32 = arith.constant 0 : i32
    return %arg0, %arg1 : i32, i32
  }
  func.func @transform_1(%arg0: i32, %arg1: i32) -> (i32, i32) {
    %c0_i32 = arith.constant 0 : i32
    %c0_i32_0 = arith.constant 0 : i32
    return %arg1, %c0_i32 : i32, i32
  }
  func.func @transform_2(%arg0: i32, %arg1: i32) -> (i32, i32) {
    %c0_i32 = arith.constant 0 : i32
    %c0_i32_0 = arith.constant 0 : i32
    %c0_i32_1 = arith.constant 0 : i32
    return %c0_i32, %c0_i32_0 : i32, i32
  }
  func.func @transform_3(%arg0: i32, %arg1: i32) -> (i32, i32) {
    %c0_i32 = arith.constant 0 : i32
    %c0_i32_0 = arith.constant 0 : i32
    %c0_i32_1 = arith.constant 0 : i32
    return %c0_i32, %c0_i32_0 : i32, i32
  }
  func.func @transform_4(%arg0: i32, %arg1: i32) -> (i32, i32) {
    %c0_i32 = arith.constant 0 : i32
    %c0_i32_0 = arith.constant 0 : i32
    return %arg0, %c0_i32 : i32, i32
  }
}

</mosaic_0001>

<llo_original>
// kernel: gcn_forward.3
$region0: #{gcn_forward.3}
  #allocation0 [shape = 'u32[]', space=smem, size = 0x4, offset = 0x4, fixed_abs, tag = 'smem constant byte address 0x4 - core index']
  #allocation1 [shape = 'u32[144,128]{1,0:T(1,128)}', space=vmem, size = 0x12000, scoped, tag = 'internal scratch']
  #allocation2 [shape = 'f32[256,128]{1,0:T(8,128)}', space=vmem, size = 0x20000, scoped, tag = 'scratch operand']
  %s0 = inlined_call_operand.vmem [shape: bf16[512,128], index: 0, kind: input, shape index: {}]
  %s1 = inlined_call_operand.vmem [shape: bf16[128,128], index: 1, kind: input, shape index: {}]
  %s2 = inlined_call_operand.vmem [shape: bf16[512,128], index: 2, kind: output, shape index: {}]
  %s3 = sld [smem:[#allocation0]]
  $region49: #{gcn_forward.3} parent=0
    _
  %s5 = ssub.s32 1, %s3
  %s6 = scalar_select 0, %s5, %s3
  loop: start=0, step=1, limit=4
  $region2: #{gcn_forward.3} parent=0 // loop_pre_header
    _
  $region3: #{gcn_forward.3} parent=0 // loop_header
    %s8 = sphi 0, %s12
    %p9 = scmp.ge.s32.totalorder %s8, 4
    %s15 = sphi 0, %s27
    %s16 = sphi 0, %s23
    %s17 = sphi 0, %s15
    %s18 = sphi 0, %s16
    %s19 = sphi 0, %s17
    %s20 = sphi 0, %s18
    %s32 = sphi 0, %s34
    %s35 = sphi 0, %s32
    %s36 = sphi 0, %s35
    %s52 = sphi 0, %s36
    %s58 = sphi 0, %s60
    %s61 = sphi 0, %s58
    %s62 = sphi 0, %s61
    %s78 = sphi 0, %s62
    %s84 = sphi 0, %s86
    %s87 = sphi 0, %s84
    %s88 = sphi 0, %s87
    %s104 = sphi 0, %s88
  $region4: #{gcn_forward.3} parent=0 // loop_header_branch
    %11 = sbr.rel (%p9) target = $region8
  $region5: #{gcn_forward.3} parent=0 // loop_body
    %s13 = ssub.s32 %s8, 1
    %s14 = ssub.s32 %s8, 2
    %s21 = sadd.s32 1, %s16
    %p22 = scmp.ge.s32.totalorder %s21, 1
    %s23 = scalar_select %p22, 0, %s21
    %s24 = sadd.s32 1, %s15
    %s25 = scalar_select %p22, %s24, %s15
    %p26 = scmp.ge.s32.totalorder %s25, 2
    %s27 = scalar_select %p26, 0, %s25
    %s28 = ssub.s32 %s15, %s27
    %s29 = ssub.s32 %s16, %s23
    %s30 = sor.u32 %s28, %s29
    %p31 = scmp.eq.s32.totalorder %s30, 0
    %s33 = sadd.s32 %s32, 1
    %s34 = scalar_select %p31, %s32, %s33
    %p37 = pneg %p31
    %p38 = scmp.eq.s32.totalorder %s8, 1
    %p39 = por %p37, %p38
    %p40 = scmp.ne.s32.totalorder %s32, %s35
    %p41 = scmp.eq.s32.totalorder %s8, 0
    %p42 = por %p40, %p41
    %p43 = scmp.ne.s32.totalorder %s32, %s35
    %p44 = scmp.eq.s32.totalorder %s13, 1
    %p45 = por %p43, %p44
    %p46 = scmp.ne.s32.totalorder %s35, %s36
    %p47 = scmp.eq.s32.totalorder %s13, 0
    %p48 = por %p46, %p47
    %p49 = scmp.ne.s32.totalorder %s35, %s36
    %p50 = scmp.eq.s32.totalorder %s14, 1
    %p51 = por %p49, %p50
    %p53 = scmp.ne.s32.totalorder %s36, %s52
    %p54 = scmp.eq.s32.totalorder %s14, 0
    %p55 = por %p53, %p54
    %s56 = ssub.s32 %s16, %s23
    %p57 = scmp.eq.s32.totalorder %s56, 0
    %s59 = sadd.s32 %s58, 1
    %s60 = scalar_select %p57, %s58, %s59
    %p63 = pneg %p57
    %p64 = scmp.eq.s32.totalorder %s8, 1
    %p65 = por %p63, %p64
    %p66 = scmp.ne.s32.totalorder %s58, %s61
    %p67 = scmp.eq.s32.totalorder %s8, 0
    %p68 = por %p66, %p67
    %p69 = scmp.ne.s32.totalorder %s58, %s61
    %p70 = scmp.eq.s32.totalorder %s13, 1
    %p71 = por %p69, %p70
    %p72 = scmp.ne.s32.totalorder %s61, %s62
    %p73 = scmp.eq.s32.totalorder %s13, 0
    %p74 = por %p72, %p73
    %p75 = scmp.ne.s32.totalorder %s61, %s62
    %p76 = scmp.eq.s32.totalorder %s14, 1
    %p77 = por %p75, %p76
    %p79 = scmp.ne.s32.totalorder %s62, %s78
    %p80 = scmp.eq.s32.totalorder %s14, 0
    %p81 = por %p79, %p80
    %s82 = ssub.s32 %s15, %s27
    %p83 = scmp.eq.s32.totalorder %s82, 0
    %s85 = sadd.s32 %s84, 1
    %s86 = scalar_select %p83, %s84, %s85
    %p89 = pneg %p83
    %p90 = scmp.eq.s32.totalorder %s8, 1
    %p91 = por %p89, %p90
    %p92 = scmp.ne.s32.totalorder %s84, %s87
    %p93 = scmp.eq.s32.totalorder %s8, 0
    %p94 = por %p92, %p93
    %p95 = scmp.ne.s32.totalorder %s84, %s87
    %p96 = scmp.eq.s32.totalorder %s13, 1
    %p97 = por %p95, %p96
    %p98 = scmp.ne.s32.totalorder %s87, %s88
    %p99 = scmp.eq.s32.totalorder %s13, 0
    %p100 = por %p98, %p99
    %p101 = scmp.ne.s32.totalorder %s87, %s88
    %p102 = scmp.eq.s32.totalorder %s14, 1
    %p103 = por %p101, %p102
    %p105 = scmp.ne.s32.totalorder %s88, %s104
    %p106 = scmp.eq.s32.totalorder %s14, 0
    %p107 = por %p105, %p106
    %p108 = scmp.le.s32.totalorder 1, %s8
    %p109 = scmp.lt.s32.totalorder %s8, 3
    %p110 = pnand %p108, %p109
    %p111 = pneg %p110
    // Predicated region
    $region9: #{gcn_forward.3} parent=5 // pred_check
      _
    $region10: #{gcn_forward.3} parent=5 // pred_check_branch
      %113 = sbr.rel (%p110) target = $region12
    $region11: #{gcn_forward.3} parent=5 // pred_region
      %s114 = ssub.s32 %s8, 1
      // Predicated region
      $region13: #{gcn_forward.3} parent=11 // pred_check
        %p115 = pneg %p74
      $region14: #{gcn_forward.3} parent=11 // pred_check_branch
        %117 = sbr.rel (%p115) target = $region16
      $region15: #{gcn_forward.3} parent=11 // pred_region
        %s118 = smul.u32 16, %s18
        %p119 = scmp.lt.s32.totalorder %s118, 15
        %s120 = scalar_select %p119, %s118, 15
        %s121 = smul.addr %s120, 4
        %s122 = scalar_lea.vmem %s1, %s121
        %s123 = smul.u32 16, %s18
      $region16: #{gcn_forward.3} parent=11 // pred_fallthru
        _
    $region12: #{gcn_forward.3} parent=5 // pred_fallthru
      _
    %p124 = scmp.lt.s32.totalorder %s8, 2
    // Predicated region
    $region17: #{gcn_forward.3} parent=5 // pred_check
      %p125 = pneg %p124
    $region18: #{gcn_forward.3} parent=5 // pred_check_branch
      %127 = sbr.rel (%p125) target = $region20
    $region19: #{gcn_forward.3} parent=5 // pred_region
      // Predicated region
      $region21: #{gcn_forward.3} parent=19 // pred_check
        %p128 = pneg %p42
      $region22: #{gcn_forward.3} parent=19 // pred_check_branch
        %130 = sbr.rel (%p128) target = $region24
      $region23: #{gcn_forward.3} parent=19 // pred_region
        %s131 = smul.u32 32, %s15
        %p132 = scmp.lt.s32.totalorder %s131, 63
        %s133 = scalar_select %p132, %s131, 63
        %p134 = scmp.lt.s32.totalorder %s16, 0
        %s135 = scalar_select %p134, %s16, 0
        %s136 = sadd.s32 %s135, %s133
        %s137 = smul.addr %s136, 4
        %s138 = scalar_lea.vmem %s0, %s137
        %s139 = smul.u32 32, %s15
      $region24: #{gcn_forward.3} parent=19 // pred_fallthru
        _
    $region20: #{gcn_forward.3} parent=5 // pred_fallthru
      _
    %p140 = scmp.le.s32.totalorder 1, %s8
    %p141 = scmp.lt.s32.totalorder %s8, 3
    %p142 = pnand %p140, %p141
    %p143 = pneg %p142
    // Predicated region
    $region25: #{gcn_forward.3} parent=5 // pred_check
      _
    $region26: #{gcn_forward.3} parent=5 // pred_check_branch
      %145 = sbr.rel (%p142) target = $region28
    $region27: #{gcn_forward.3} parent=5 // pred_region
      %s146 = ssub.s32 %s8, 1
      %s147 = smul.u32 32, %s17
      %p148 = scmp.lt.s32.totalorder %s147, 63
      %s149 = scalar_select %p148, %s147, 63
      %p150 = scmp.lt.s32.totalorder %s18, 0
      %s151 = scalar_select %p150, %s18, 0
      %s152 = sadd.s32 %s151, %s149
      %s153 = smul.addr %s152, 4
      %s154 = scalar_lea.vmem %s0, %s153
      %p155 = pneg %p48
      %p156 = pneg %p45
      %s157 = smul.u32 16, %s18
      %p158 = scmp.lt.s32.totalorder %s157, 15
      %s159 = scalar_select %p158, %s157, 15
      %s160 = smul.addr %s159, 4
      %s161 = scalar_lea.vmem %s1, %s160
      %p162 = pneg %p74
      %p163 = pneg %p71
      %p164 = pneg %p100
      %p165 = pneg %p97
      %s166 = smul.u32 32, %s17
      %p167 = scmp.lt.s32.totalorder %s166, 63
      %s168 = scalar_select %p167, %s166, 63
      %s169 = smul.addr %s168, 4
      %s170 = scalar_lea.vmem %s2, %s169
      %s171 = smul.u32 32, %s17
      %p172 = scmp.lt.s32.totalorder %s171, 63
      %s173 = scalar_select %p172, %s171, 63
      %p174 = scmp.lt.s32.totalorder %s18, 0
      %s175 = scalar_select %p174, %s18, 0
      %s176 = sadd.s32 %s175, %s173
      %s177 = smul.addr %s176, 4
      %s178 = scalar_lea.vmem %s0, %s177
      %s179 = smul.u32 32, %s17
      %s180 = smul.u32 16, %s18
      %p181 = scmp.lt.s32.totalorder %s180, 15
      %s182 = scalar_select %p181, %s180, 15
      %s183 = smul.addr %s182, 4
      %s184 = scalar_lea.vmem %s1, %s183
      %s185 = smul.u32 16, %s18
      %s186 = smul.u32 32, %s17
      %p187 = scmp.lt.s32.totalorder %s186, 63
      %s188 = scalar_select %p187, %s186, 63
      %s189 = smul.addr %s188, 4
      %s190 = scalar_lea.vmem %s2, %s189
      %s191 = smul.u32 32, %s17
      %p193 = scmp.eq.s32.totalorder %s18, 0
      // Predicated region
      $region29: #{gcn_forward.3} parent=27 // pred_check
        %p194 = pneg %p193
      $region30: #{gcn_forward.3} parent=27 // pred_check_branch
        %196 = sbr.rel (%p194) target = $region32
      $region31: #{gcn_forward.3} parent=27 // pred_region
        %197 = vst [vmem:[#allocation2] sm:$0xff] 0.0
        %198 = vst [vmem:[#allocation2 + $0x8] sm:$0xff] 0.0
        %199 = vst [vmem:[#allocation2 + $0x10] sm:$0xff] 0.0
        %200 = vst [vmem:[#allocation2 + $0x18] sm:$0xff] 0.0
        %201 = vst [vmem:[#allocation2 + $0x20] sm:$0xff] 0.0
        %202 = vst [vmem:[#allocation2 + $0x28] sm:$0xff] 0.0
        %203 = vst [vmem:[#allocation2 + $0x30] sm:$0xff] 0.0
        %204 = vst [vmem:[#allocation2 + $0x38] sm:$0xff] 0.0
        %205 = vst [vmem:[#allocation2 + $0x40] sm:$0xff] 0.0
        %206 = vst [vmem:[#allocation2 + $0x48] sm:$0xff] 0.0
        %207 = vst [vmem:[#allocation2 + $0x50] sm:$0xff] 0.0
        %208 = vst [vmem:[#allocation2 + $0x58] sm:$0xff] 0.0
        %209 = vst [vmem:[#allocation2 + $0x60] sm:$0xff] 0.0
        %210 = vst [vmem:[#allocation2 + $0x68] sm:$0xff] 0.0
        %211 = vst [vmem:[#allocation2 + $0x70] sm:$0xff] 0.0
        %212 = vst [vmem:[#allocation2 + $0x78] sm:$0xff] 0.0
        %213 = vst [vmem:[#allocation2 + $0x80] sm:$0xff] 0.0
        %214 = vst [vmem:[#allocation2 + $0x88] sm:$0xff] 0.0
        %215 = vst [vmem:[#allocation2 + $0x90] sm:$0xff] 0.0
        %216 = vst [vmem:[#allocation2 + $0x98] sm:$0xff] 0.0
        %217 = vst [vmem:[#allocation2 + $0xa0] sm:$0xff] 0.0
        %218 = vst [vmem:[#allocation2 + $0xa8] sm:$0xff] 0.0
        %219 = vst [vmem:[#allocation2 + $0xb0] sm:$0xff] 0.0
        %220 = vst [vmem:[#allocation2 + $0xb8] sm:$0xff] 0.0
        %221 = vst [vmem:[#allocation2 + $0xc0] sm:$0xff] 0.0
        %222 = vst [vmem:[#allocation2 + $0xc8] sm:$0xff] 0.0
        %223 = vst [vmem:[#allocation2 + $0xd0] sm:$0xff] 0.0
        %224 = vst [vmem:[#allocation2 + $0xd8] sm:$0xff] 0.0
        %225 = vst [vmem:[#allocation2 + $0xe0] sm:$0xff] 0.0
        %226 = vst [vmem:[#allocation2 + $0xe8] sm:$0xff] 0.0
        %227 = vst [vmem:[#allocation2 + $0xf0] sm:$0xff] 0.0
        %228 = vst [vmem:[#allocation2 + $0xf8] sm:$0xff] 0.0
      $region32: #{gcn_forward.3} parent=27 // pred_fallthru
        _
      %v229 = vld [vmem:[#allocation2] sm:$0xff]
      %v230 = vld [vmem:[#allocation2 + $0x8] sm:$0xff]
      %v231 = vld [vmem:[#allocation2 + $0x10] sm:$0xff]
      %v232 = vld [vmem:[#allocation2 + $0x18] sm:$0xff]
      %v233 = vld [vmem:[#allocation2 + $0x20] sm:$0xff]
      %v234 = vld [vmem:[#allocation2 + $0x28] sm:$0xff]
      %v235 = vld [vmem:[#allocation2 + $0x30] sm:$0xff]
      %v236 = vld [vmem:[#allocation2 + $0x38] sm:$0xff]
      %v237 = vld [vmem:[#allocation2 + $0x40] sm:$0xff]
      %v238 = vld [vmem:[#allocation2 + $0x48] sm:$0xff]
      %v239 = vld [vmem:[#allocation2 + $0x50] sm:$0xff]
      %v240 = vld [vmem:[#allocation2 + $0x58] sm:$0xff]
      %v241 = vld [vmem:[#allocation2 + $0x60] sm:$0xff]
      %v242 = vld [vmem:[#allocation2 + $0x68] sm:$0xff]
      %v243 = vld [vmem:[#allocation2 + $0x70] sm:$0xff]
      %v244 = vld [vmem:[#allocation2 + $0x78] sm:$0xff]
      %v245 = vld [vmem:[#allocation2 + $0x80] sm:$0xff]
      %v246 = vld [vmem:[#allocation2 + $0x88] sm:$0xff]
      %v247 = vld [vmem:[#allocation2 + $0x90] sm:$0xff]
      %v248 = vld [vmem:[#allocation2 + $0x98] sm:$0xff]
      %v249 = vld [vmem:[#allocation2 + $0xa0] sm:$0xff]
      %v250 = vld [vmem:[#allocation2 + $0xa8] sm:$0xff]
      %v251 = vld [vmem:[#allocation2 + $0xb0] sm:$0xff]
      %v252 = vld [vmem:[#allocation2 + $0xb8] sm:$0xff]
      %v253 = vld [vmem:[#allocation2 + $0xc0] sm:$0xff]
      %v254 = vld [vmem:[#allocation2 + $0xc8] sm:$0xff]
      %v255 = vld [vmem:[#allocation2 + $0xd0] sm:$0xff]
      %v256 = vld [vmem:[#allocation2 + $0xd8] sm:$0xff]
      %v257 = vld [vmem:[#allocation2 + $0xe0] sm:$0xff]
      %v258 = vld [vmem:[#allocation2 + $0xe8] sm:$0xff]
      %v259 = vld [vmem:[#allocation2 + $0xf0] sm:$0xff]
      %v260 = vld [vmem:[#allocation2 + $0xf8] sm:$0xff]
      %v261 = vld [vmem:[%s178] sm:$0xf]
      %v262 = vld [vmem:[%s178 + $0x4] sm:$0xf]
      %v263 = vld [vmem:[%s178 + $0x8] sm:$0xf]
      %v264 = vld [vmem:[%s178 + $0xc] sm:$0xf]
      %v265 = vld [vmem:[%s178 + $0x10] sm:$0xf]
      %v266 = vld [vmem:[%s178 + $0x14] sm:$0xf]
      %v267 = vld [vmem:[%s178 + $0x18] sm:$0xf]
      %v268 = vld [vmem:[%s178 + $0x1c] sm:$0xf]
      %v269 = vld [vmem:[%s178 + $0x20] sm:$0xf]
      %v270 = vld [vmem:[%s178 + $0x24] sm:$0xf]
      %v271 = vld [vmem:[%s178 + $0x28] sm:$0xf]
      %v272 = vld [vmem:[%s178 + $0x2c] sm:$0xf]
      %v273 = vld [vmem:[%s178 + $0x30] sm:$0xf]
      %v274 = vld [vmem:[%s178 + $0x34] sm:$0xf]
      %v275 = vld [vmem:[%s178 + $0x38] sm:$0xf]
      %v276 = vld [vmem:[%s178 + $0x3c] sm:$0xf]
      %v277 = vld [vmem:[%s178 + $0x40] sm:$0xf]
      %v278 = vld [vmem:[%s178 + $0x44] sm:$0xf]
      %v279 = vld [vmem:[%s178 + $0x48] sm:$0xf]
      %v280 = vld [vmem:[%s178 + $0x4c] sm:$0xf]
      %v281 = vld [vmem:[%s178 + $0x50] sm:$0xf]
      %v282 = vld [vmem:[%s178 + $0x54] sm:$0xf]
      %v283 = vld [vmem:[%s178 + $0x58] sm:$0xf]
      %v284 = vld [vmem:[%s178 + $0x5c] sm:$0xf]
      %v285 = vld [vmem:[%s178 + $0x60] sm:$0xf]
      %v286 = vld [vmem:[%s178 + $0x64] sm:$0xf]
      %v287 = vld [vmem:[%s178 + $0x68] sm:$0xf]
      %v288 = vld [vmem:[%s178 + $0x6c] sm:$0xf]
      %v289 = vld [vmem:[%s178 + $0x70] sm:$0xf]
      %v290 = vld [vmem:[%s178 + $0x74] sm:$0xf]
      %v291 = vld [vmem:[%s178 + $0x78] sm:$0xf]
      %v292 = vld [vmem:[%s178 + $0x7c] sm:$0xf]
      %v293 = vld [vmem:[%s184] sm:$0xf]
      %v294 = vld [vmem:[%s184 + $0x4] sm:$0xf]
      %v295 = vld [vmem:[%s184 + $0x8] sm:$0xf]
      %v296 = vld [vmem:[%s184 + $0xc] sm:$0xf]
      %v297 = vld [vmem:[%s184 + $0x10] sm:$0xf]
      %v298 = vld [vmem:[%s184 + $0x14] sm:$0xf]
      %v299 = vld [vmem:[%s184 + $0x18] sm:$0xf]
      %v300 = vld [vmem:[%s184 + $0x1c] sm:$0xf]
      %v301 = vld [vmem:[%s184 + $0x20] sm:$0xf]
      %v302 = vld [vmem:[%s184 + $0x24] sm:$0xf]
      %v303 = vld [vmem:[%s184 + $0x28] sm:$0xf]
      %v304 = vld [vmem:[%s184 + $0x2c] sm:$0xf]
      %v305 = vld [vmem:[%s184 + $0x30] sm:$0xf]
      %v306 = vld [vmem:[%s184 + $0x34] sm:$0xf]
      %v307 = vld [vmem:[%s184 + $0x38] sm:$0xf]
      %v308 = vld [vmem:[%s184 + $0x3c] sm:$0xf]
      %v341 = vunpack.c.l.b16 %v261
      %v342 = vunpack.c.l.b16 %v262
      %v343 = vunpack.c.l.b16 %v263
      %v344 = vunpack.c.l.b16 %v264
      %v345 = vunpack.c.l.b16 %v265
      %v346 = vunpack.c.l.b16 %v266
      %v347 = vunpack.c.l.b16 %v267
      %v348 = vunpack.c.l.b16 %v268
      %v349 = vunpack.c.l.b16 %v269
      %v350 = vunpack.c.l.b16 %v270
      %v351 = vunpack.c.l.b16 %v271
      %v352 = vunpack.c.l.b16 %v272
      %v353 = vunpack.c.l.b16 %v273
      %v354 = vunpack.c.l.b16 %v274
      %v355 = vunpack.c.l.b16 %v275
      %v356 = vunpack.c.l.b16 %v276
      %v357 = vunpack.c.l.b16 %v277
      %v358 = vunpack.c.l.b16 %v278
      %v359 = vunpack.c.l.b16 %v279
      %v360 = vunpack.c.l.b16 %v280
      %v361 = vunpack.c.l.b16 %v281
      %v362 = vunpack.c.l.b16 %v282
      %v363 = vunpack.c.l.b16 %v283
      %v364 = vunpack.c.l.b16 %v284
      %v365 = vunpack.c.l.b16 %v285
      %v366 = vunpack.c.l.b16 %v286
      %v367 = vunpack.c.l.b16 %v287
      %v368 = vunpack.c.l.b16 %v288
      %v369 = vunpack.c.l.b16 %v289
      %v370 = vunpack.c.l.b16 %v290
      %v371 = vunpack.c.l.b16 %v291
      %v372 = vunpack.c.l.b16 %v292
      %v373 = vpack.c.b16 %v342, %v341
      %v374 = vpack.c.b16 %v344, %v343
      %v375 = vpack.c.b16 %v346, %v345
      %v376 = vpack.c.b16 %v348, %v347
      %v377 = vpack.c.b16 %v350, %v349
      %v378 = vpack.c.b16 %v352, %v351
      %v379 = vpack.c.b16 %v354, %v353
      %v380 = vpack.c.b16 %v356, %v355
      %v381 = vpack.c.b16 %v358, %v357
      %v382 = vpack.c.b16 %v360, %v359
      %v383 = vpack.c.b16 %v362, %v361
      %v384 = vpack.c.b16 %v364, %v363
      %v385 = vpack.c.b16 %v366, %v365
      %v386 = vpack.c.b16 %v368, %v367
      %v387 = vpack.c.b16 %v370, %v369
      %v388 = vpack.c.b16 %v372, %v371
      %v421 = vunpack.c.l.b16 %v293
      %v422 = vunpack.c.l.b16 %v294
      %v423 = vunpack.c.l.b16 %v295
      %v424 = vunpack.c.l.b16 %v296
      %v425 = vunpack.c.l.b16 %v297
      %v426 = vunpack.c.l.b16 %v298
      %v427 = vunpack.c.l.b16 %v299
      %v428 = vunpack.c.l.b16 %v300
      %v429 = vunpack.c.l.b16 %v301
      %v430 = vunpack.c.l.b16 %v302
      %v431 = vunpack.c.l.b16 %v303
      %v432 = vunpack.c.l.b16 %v304
      %v433 = vunpack.c.l.b16 %v305
      %v434 = vunpack.c.l.b16 %v306
      %v435 = vunpack.c.l.b16 %v307
      %v436 = vunpack.c.l.b16 %v308
      %v437 = vpack.c.b16 %v422, %v421
      %v438 = vpack.c.b16 %v424, %v423
      %v439 = vpack.c.b16 %v426, %v425
      %v440 = vpack.c.b16 %v428, %v427
      %v441 = vpack.c.b16 %v430, %v429
      %v442 = vpack.c.b16 %v432, %v431
      %v443 = vpack.c.b16 %v434, %v433
      %v444 = vpack.c.b16 %v436, %v435
      %453 = vmatprep.subr.bf16.mxu0 0
      %454 = vmatpush1.bf16.msra.mxu0 %v437
      %455 = vmatprep.subr.bf16.mxu0 0
      %456 = vmatpush1.bf16.msra.mxu0 %v438
      %457 = vmatprep.subr.bf16.mxu0 0
      %458 = vmatpush1.bf16.msra.mxu0 %v439
      %459 = vmatprep.subr.bf16.mxu0 0
      %460 = vmatpush1.bf16.msra.mxu0 %v440
      %461 = vmatprep.subr.bf16.mxu0 0
      %462 = vmatpush1.bf16.msra.mxu0 %v441
      %463 = vmatprep.subr.bf16.mxu0 0
      %464 = vmatpush1.bf16.msra.mxu0 %v442
      %465 = vmatprep.subr.bf16.mxu0 0
      %466 = vmatpush1.bf16.msra.mxu0 %v443
      %467 = vmatprep.subr.bf16.mxu0 0
      %468 = vmatpush1.bf16.msra.mxu0 %v444
      %469 = vmatprep.subr.bf16.mxu0 0
      %470 = vmatpush1.bf16.msra.mxu0 0
      %471 = vmatprep.subr.bf16.mxu0 0
      %472 = vmatpush1.bf16.msra.mxu0 0
      %473 = vmatprep.subr.bf16.mxu0 0
      %474 = vmatpush1.bf16.msra.mxu0 0
      %475 = vmatprep.subr.bf16.mxu0 0
      %476 = vmatpush1.bf16.msra.mxu0 0
      %477 = vmatprep.subr.bf16.mxu0 0
      %478 = vmatpush1.bf16.msra.mxu0 0
      %479 = vmatprep.subr.bf16.mxu0 0
      %480 = vmatpush1.bf16.msra.mxu0 0
      %481 = vmatprep.subr.bf16.mxu0 0
      %482 = vmatpush1.bf16.msra.mxu0 0
      %483 = vmatprep.subr.bf16.mxu0 0
      %484 = vmatpush1.bf16.msra.mxu0 0
      %485 = vmatprep.mubr.bf16.mxu0 0
      %486 = vmatmul.mubr.bf16.gmra.mrb[0].mxu0 %v373
      %v487 = vpop.f32.mrb[0].mxu0
      %v488 = vadd.f32 0.0, %v487
      %v489 = vpop.f32.mrb[0].mxu0
      %v490 = vpop.f32.mrb[0].mxu0
      %v491 = vadd.f32 0.0, %v490
      %v492 = vpop.f32.mrb[0].mxu0
      %493 = vmatprep.mubr.bf16.mxu0 0
      %494 = vmatmul.mubr.bf16.gmra.mrb[0].mxu0 %v374
      %v495 = vpop.f32.mrb[0].mxu0
      %v496 = vadd.f32 0.0, %v495
      %v497 = vpop.f32.mrb[0].mxu0
      %v498 = vpop.f32.mrb[0].mxu0
      %v499 = vadd.f32 0.0, %v498
      %v500 = vpop.f32.mrb[0].mxu0
      %501 = vmatprep.mubr.bf16.mxu0 0
      %502 = vmatmul.mubr.bf16.gmra.mrb[0].mxu0 %v375
      %v503 = vpop.f32.mrb[0].mxu0
      %v504 = vadd.f32 0.0, %v503
      %v505 = vpop.f32.mrb[0].mxu0
      %v506 = vpop.f32.mrb[0].mxu0
      %v507 = vadd.f32 0.0, %v506
      %v508 = vpop.f32.mrb[0].mxu0
      %509 = vmatprep.mubr.bf16.mxu0 0
      %510 = vmatmul.mubr.bf16.gmra.mrb[0].mxu0 %v376
      %v511 = vpop.f32.mrb[0].mxu0
      %v512 = vadd.f32 0.0, %v511
      %v513 = vpop.f32.mrb[0].mxu0
      %v514 = vpop.f32.mrb[0].mxu0
      %v515 = vadd.f32 0.0, %v514
      %v516 = vpop.f32.mrb[0].mxu0
      %517 = vmatprep.mubr.bf16.mxu0 0
      %518 = vmatmul.mubr.bf16.gmra.mrb[0].mxu0 %v377
      %v519 = vpop.f32.mrb[0].mxu0
      %v520 = vadd.f32 0.0, %v519
      %v521 = vpop.f32.mrb[0].mxu0
      %v522 = vpop.f32.mrb[0].mxu0
      %v523 = vadd.f32 0.0, %v522
      %v524 = vpop.f32.mrb[0].mxu0
      %525 = vmatprep.mubr.bf16.mxu0 0
      %526 = vmatmul.mubr.bf16.gmra.mrb[0].mxu0 %v378
      %v527 = vpop.f32.mrb[0].mxu0
      %v528 = vadd.f32 0.0, %v527
      %v529 = vpop.f32.mrb[0].mxu0
      %v530 = vpop.f32.mrb[0].mxu0
      %v531 = vadd.f32 0.0, %v530
      %v532 = vpop.f32.mrb[0].mxu0
      %533 = vmatprep.mubr.bf16.mxu0 0
      %534 = vmatmul.mubr.bf16.gmra.mrb[0].mxu0 %v379
      %v535 = vpop.f32.mrb[0].mxu0
      %v536 = vadd.f32 0.0, %v535
      %v537 = vpop.f32.mrb[0].mxu0
      %v538 = vpop.f32.mrb[0].mxu0
      %v539 = vadd.f32 0.0, %v538
      %v540 = vpop.f32.mrb[0].mxu0
      %541 = vmatprep.mubr.bf16.mxu0 0
      %542 = vmatmul.mubr.bf16.gmra.mrb[0].mxu0 %v380
      %v543 = vpop.f32.mrb[0].mxu0
      %v544 = vadd.f32 0.0, %v543
      %v545 = vpop.f32.mrb[0].mxu0
      %v546 = vpop.f32.mrb[0].mxu0
      %v547 = vadd.f32 0.0, %v546
      %v548 = vpop.f32.mrb[0].mxu0
      %549 = vmatprep.mubr.bf16.mxu0 0
      %550 = vmatmul.mubr.bf16.gmra.mrb[0].mxu0 %v381
      %v551 = vpop.f32.mrb[0].mxu0
      %v552 = vadd.f32 0.0, %v551
      %v553 = vpop.f32.mrb[0].mxu0
      %v554 = vpop.f32.mrb[0].mxu0
      %v555 = vadd.f32 0.0, %v554
      %v556 = vpop.f32.mrb[0].mxu0
      %557 = vmatprep.mubr.bf16.mxu0 0
      %558 = vmatmul.mubr.bf16.gmra.mrb[0].mxu0 %v382
      %v559 = vpop.f32.mrb[0].mxu0
      %v560 = vadd.f32 0.0, %v559
      %v561 = vpop.f32.mrb[0].mxu0
      %v562 = vpop.f32.mrb[0].mxu0
      %v563 = vadd.f32 0.0, %v562
      %v564 = vpop.f32.mrb[0].mxu0
      %565 = vmatprep.mubr.bf16.mxu0 0
      %566 = vmatmul.mubr.bf16.gmra.mrb[0].mxu0 %v383
      %v567 = vpop.f32.mrb[0].mxu0
      %v568 = vadd.f32 0.0, %v567
      %v569 = vpop.f32.mrb[0].mxu0
      %v570 = vpop.f32.mrb[0].mxu0
      %v571 = vadd.f32 0.0, %v570
      %v572 = vpop.f32.mrb[0].mxu0
      %573 = vmatprep.mubr.bf16.mxu0 0
      %574 = vmatmul.mubr.bf16.gmra.mrb[0].mxu0 %v384
      %v575 = vpop.f32.mrb[0].mxu0
      %v576 = vadd.f32 0.0, %v575
      %v577 = vpop.f32.mrb[0].mxu0
      %v578 = vpop.f32.mrb[0].mxu0
      %v579 = vadd.f32 0.0, %v578
      %v580 = vpop.f32.mrb[0].mxu0
      %581 = vmatprep.mubr.bf16.mxu0 0
      %582 = vmatmul.mubr.bf16.gmra.mrb[0].mxu0 %v385
      %v583 = vpop.f32.mrb[0].mxu0
      %v584 = vadd.f32 0.0, %v583
      %v585 = vpop.f32.mrb[0].mxu0
      %v586 = vpop.f32.mrb[0].mxu0
      %v587 = vadd.f32 0.0, %v586
      %v588 = vpop.f32.mrb[0].mxu0
      %589 = vmatprep.mubr.bf16.mxu0 0
      %590 = vmatmul.mubr.bf16.gmra.mrb[0].mxu0 %v386
      %v591 = vpop.f32.mrb[0].mxu0
      %v592 = vadd.f32 0.0, %v591
      %v593 = vpop.f32.mrb[0].mxu0
      %v594 = vpop.f32.mrb[0].mxu0
      %v595 = vadd.f32 0.0, %v594
      %v596 = vpop.f32.mrb[0].mxu0
      %597 = vmatprep.mubr.bf16.mxu0 0
      %598 = vmatmul.mubr.bf16.gmra.mrb[0].mxu0 %v387
      %v599 = vpop.f32.mrb[0].mxu0
      %v600 = vadd.f32 0.0, %v599
      %v601 = vpop.f32.mrb[0].mxu0
      %v602 = vpop.f32.mrb[0].mxu0
      %v603 = vadd.f32 0.0, %v602
      %v604 = vpop.f32.mrb[0].mxu0
      %605 = vmatprep.mubr.bf16.mxu0 0
      %606 = vmatmul.mubr.bf16.gmra.mrb[0].mxu0 %v388
      %v607 = vpop.f32.mrb[0].mxu0
      %v608 = vadd.f32 0.0, %v607
      %v609 = vpop.f32.mrb[0].mxu0
      %v610 = vpop.f32.mrb[0].mxu0
      %v611 = vadd.f32 0.0, %v610
      %v612 = vpop.f32.mrb[0].mxu0
      %613 = vdwg.mxu0
      %v614 = vadd.f32 %v229, %v488
      %v615 = vadd.f32 %v230, %v491
      %v616 = vadd.f32 %v231, %v496
      %v617 = vadd.f32 %v232, %v499
      %v618 = vadd.f32 %v233, %v504
      %v619 = vadd.f32 %v234, %v507
      %v620 = vadd.f32 %v235, %v512
      %v621 = vadd.f32 %v236, %v515
      %v622 = vadd.f32 %v237, %v520
      %v623 = vadd.f32 %v238, %v523
      %v624 = vadd.f32 %v239, %v528
      %v625 = vadd.f32 %v240, %v531
      %v626 = vadd.f32 %v241, %v536
      %v627 = vadd.f32 %v242, %v539
      %v628 = vadd.f32 %v243, %v544
      %v629 = vadd.f32 %v244, %v547
      %v630 = vadd.f32 %v245, %v552
      %v631 = vadd.f32 %v246, %v555
      %v632 = vadd.f32 %v247, %v560
      %v633 = vadd.f32 %v248, %v563
      %v634 = vadd.f32 %v249, %v568
      %v635 = vadd.f32 %v250, %v571
      %v636 = vadd.f32 %v251, %v576
      %v637 = vadd.f32 %v252, %v579
      %v638 = vadd.f32 %v253, %v584
      %v639 = vadd.f32 %v254, %v587
      %v640 = vadd.f32 %v255, %v592
      %v641 = vadd.f32 %v256, %v595
      %v642 = vadd.f32 %v257, %v600
      %v643 = vadd.f32 %v258, %v603
      %v644 = vadd.f32 %v259, %v608
      %v645 = vadd.f32 %v260, %v611
      %646 = vst [vmem:[#allocation2] sm:$0xff] %v614
      %647 = vst [vmem:[#allocation2 + $0x8] sm:$0xff] %v615
      %648 = vst [vmem:[#allocation2 + $0x10] sm:$0xff] %v616
      %649 = vst [vmem:[#allocation2 + $0x18] sm:$0xff] %v617
      %650 = vst [vmem:[#allocation2 + $0x20] sm:$0xff] %v618
      %651 = vst [vmem:[#allocation2 + $0x28] sm:$0xff] %v619
      %652 = vst [vmem:[#allocation2 + $0x30] sm:$0xff] %v620
      %653 = vst [vmem:[#allocation2 + $0x38] sm:$0xff] %v621
      %654 = vst [vmem:[#allocation2 + $0x40] sm:$0xff] %v622
      %655 = vst [vmem:[#allocation2 + $0x48] sm:$0xff] %v623
      %656 = vst [vmem:[#allocation2 + $0x50] sm:$0xff] %v624
      %657 = vst [vmem:[#allocation2 + $0x58] sm:$0xff] %v625
      %658 = vst [vmem:[#allocation2 + $0x60] sm:$0xff] %v626
      %659 = vst [vmem:[#allocation2 + $0x68] sm:$0xff] %v627
      %660 = vst [vmem:[#allocation2 + $0x70] sm:$0xff] %v628
      %661 = vst [vmem:[#allocation2 + $0x78] sm:$0xff] %v629
      %662 = vst [vmem:[#allocation2 + $0x80] sm:$0xff] %v630
      %663 = vst [vmem:[#allocation2 + $0x88] sm:$0xff] %v631
      %664 = vst [vmem:[#allocation2 + $0x90] sm:$0xff] %v632
      %665 = vst [vmem:[#allocation2 + $0x98] sm:$0xff] %v633
      %666 = vst [vmem:[#allocation2 + $0xa0] sm:$0xff] %v634
      %667 = vst [vmem:[#allocation2 + $0xa8] sm:$0xff] %v635
      %668 = vst [vmem:[#allocation2 + $0xb0] sm:$0xff] %v636
      %669 = vst [vmem:[#allocation2 + $0xb8] sm:$0xff] %v637
      %670 = vst [vmem:[#allocation2 + $0xc0] sm:$0xff] %v638
      %671 = vst [vmem:[#allocation2 + $0xc8] sm:$0xff] %v639
      %672 = vst [vmem:[#allocation2 + $0xd0] sm:$0xff] %v640
      %673 = vst [vmem:[#allocation2 + $0xd8] sm:$0xff] %v641
      %674 = vst [vmem:[#allocation2 + $0xe0] sm:$0xff] %v642
      %675 = vst [vmem:[#allocation2 + $0xe8] sm:$0xff] %v643
      %676 = vst [vmem:[#allocation2 + $0xf0] sm:$0xff] %v644
      %677 = vst [vmem:[#allocation2 + $0xf8] sm:$0xff] %v645
      // Predicated region
      $region33: #{gcn_forward.3} parent=27 // pred_check
        %p678 = pneg %p193
      $region34: #{gcn_forward.3} parent=27 // pred_check_branch
        %680 = sbr.rel (%p678) target = $region36
      $region35: #{gcn_forward.3} parent=27 // pred_region
        %v681 = vld [vmem:[#allocation2] sm:$0xff]
        %v682 = vld [vmem:[#allocation2 + $0x8] sm:$0xff]
        %v683 = vld [vmem:[#allocation2 + $0x10] sm:$0xff]
        %v684 = vld [vmem:[#allocation2 + $0x18] sm:$0xff]
        %v685 = vld [vmem:[#allocation2 + $0x20] sm:$0xff]
        %v686 = vld [vmem:[#allocation2 + $0x28] sm:$0xff]
        %v687 = vld [vmem:[#allocation2 + $0x30] sm:$0xff]
        %v688 = vld [vmem:[#allocation2 + $0x38] sm:$0xff]
        %v689 = vld [vmem:[#allocation2 + $0x40] sm:$0xff]
        %v690 = vld [vmem:[#allocation2 + $0x48] sm:$0xff]
        %v691 = vld [vmem:[#allocation2 + $0x50] sm:$0xff]
        %v692 = vld [vmem:[#allocation2 + $0x58] sm:$0xff]
        %v693 = vld [vmem:[#allocation2 + $0x60] sm:$0xff]
        %v694 = vld [vmem:[#allocation2 + $0x68] sm:$0xff]
        %v695 = vld [vmem:[#allocation2 + $0x70] sm:$0xff]
        %v696 = vld [vmem:[#allocation2 + $0x78] sm:$0xff]
        %v697 = vld [vmem:[#allocation2 + $0x80] sm:$0xff]
        %v698 = vld [vmem:[#allocation2 + $0x88] sm:$0xff]
        %v699 = vld [vmem:[#allocation2 + $0x90] sm:$0xff]
        %v700 = vld [vmem:[#allocation2 + $0x98] sm:$0xff]
        %v701 = vld [vmem:[#allocation2 + $0xa0] sm:$0xff]
        %v702 = vld [vmem:[#allocation2 + $0xa8] sm:$0xff]
        %v703 = vld [vmem:[#allocation2 + $0xb0] sm:$0xff]
        %v704 = vld [vmem:[#allocation2 + $0xb8] sm:$0xff]
        %v705 = vld [vmem:[#allocation2 + $0xc0] sm:$0xff]
        %v706 = vld [vmem:[#allocation2 + $0xc8] sm:$0xff]
        %v707 = vld [vmem:[#allocation2 + $0xd0] sm:$0xff]
        %v708 = vld [vmem:[#allocation2 + $0xd8] sm:$0xff]
        %v709 = vld [vmem:[#allocation2 + $0xe0] sm:$0xff]
        %v710 = vld [vmem:[#allocation2 + $0xe8] sm:$0xff]
        %v711 = vld [vmem:[#allocation2 + $0xf0] sm:$0xff]
        %v712 = vld [vmem:[#allocation2 + $0xf8] sm:$0xff]
        %v713 = vpack.c.bf16 %v682, %v681
        %v714 = vpack.c.bf16 %v684, %v683
        %v715 = vpack.c.bf16 %v686, %v685
        %v716 = vpack.c.bf16 %v688, %v687
        %v717 = vpack.c.bf16 %v690, %v689
        %v718 = vpack.c.bf16 %v692, %v691
        %v719 = vpack.c.bf16 %v694, %v693
        %v720 = vpack.c.bf16 %v696, %v695
        %v721 = vpack.c.bf16 %v698, %v697
        %v722 = vpack.c.bf16 %v700, %v699
        %v723 = vpack.c.bf16 %v702, %v701
        %v724 = vpack.c.bf16 %v704, %v703
        %v725 = vpack.c.bf16 %v706, %v705
        %v726 = vpack.c.bf16 %v708, %v707
        %v727 = vpack.c.bf16 %v710, %v709
        %v728 = vpack.c.bf16 %v712, %v711
        %v745 = vunpack.c.l.b16 %v713
        %v746 = vunpack.c.h.b16 %v713
        %v747 = vunpack.c.l.b16 %v714
        %v748 = vunpack.c.h.b16 %v714
        %v749 = vunpack.c.l.b16 %v715
        %v750 = vunpack.c.h.b16 %v715
        %v751 = vunpack.c.l.b16 %v716
        %v752 = vunpack.c.h.b16 %v716
        %v753 = vunpack.c.l.b16 %v717
        %v754 = vunpack.c.h.b16 %v717
        %v755 = vunpack.c.l.b16 %v718
        %v756 = vunpack.c.h.b16 %v718
        %v757 = vunpack.c.l.b16 %v719
        %v758 = vunpack.c.h.b16 %v719
        %v759 = vunpack.c.l.b16 %v720
        %v760 = vunpack.c.h.b16 %v720
        %v761 = vunpack.c.l.b16 %v721
        %v762 = vunpack.c.h.b16 %v721
        %v763 = vunpack.c.l.b16 %v722
        %v764 = vunpack.c.h.b16 %v722
        %v765 = vunpack.c.l.b16 %v723
        %v766 = vunpack.c.h.b16 %v723
        %v767 = vunpack.c.l.b16 %v724
        %v768 = vunpack.c.h.b16 %v724
        %v769 = vunpack.c.l.b16 %v725
        %v770 = vunpack.c.h.b16 %v725
        %v771 = vunpack.c.l.b16 %v726
        %v772 = vunpack.c.h.b16 %v726
        %v773 = vunpack.c.l.b16 %v727
        %v774 = vunpack.c.h.b16 %v727
        %v775 = vunpack.c.l.b16 %v728
        %v776 = vunpack.c.h.b16 %v728
        %v777 = vpack.c.b16 %v745, %v745
        %v778 = vpack.c.b16 %v746, %v746
        %v779 = vpack.c.b16 %v747, %v747
        %v780 = vpack.c.b16 %v748, %v748
        %v781 = vpack.c.b16 %v749, %v749
        %v782 = vpack.c.b16 %v750, %v750
        %v783 = vpack.c.b16 %v751, %v751
        %v784 = vpack.c.b16 %v752, %v752
        %v785 = vpack.c.b16 %v753, %v753
        %v786 = vpack.c.b16 %v754, %v754
        %v787 = vpack.c.b16 %v755, %v755
        %v788 = vpack.c.b16 %v756, %v756
        %v789 = vpack.c.b16 %v757, %v757
        %v790 = vpack.c.b16 %v758, %v758
        %v791 = vpack.c.b16 %v759, %v759
        %v792 = vpack.c.b16 %v760, %v760
        %v793 = vpack.c.b16 %v761, %v761
        %v794 = vpack.c.b16 %v762, %v762
        %v795 = vpack.c.b16 %v763, %v763
        %v796 = vpack.c.b16 %v764, %v764
        %v797 = vpack.c.b16 %v765, %v765
        %v798 = vpack.c.b16 %v766, %v766
        %v799 = vpack.c.b16 %v767, %v767
        %v800 = vpack.c.b16 %v768, %v768
        %v801 = vpack.c.b16 %v769, %v769
        %v802 = vpack.c.b16 %v770, %v770
        %v803 = vpack.c.b16 %v771, %v771
        %v804 = vpack.c.b16 %v772, %v772
        %v805 = vpack.c.b16 %v773, %v773
        %v806 = vpack.c.b16 %v774, %v774
        %v807 = vpack.c.b16 %v775, %v775
        %v808 = vpack.c.b16 %v776, %v776
        %841 = vst [vmem:[%s190] sm:$0xf] %v777
        %842 = vst [vmem:[%s190 + $0x4] sm:$0xf] %v778
        %843 = vst [vmem:[%s190 + $0x8] sm:$0xf] %v779
        %844 = vst [vmem:[%s190 + $0xc] sm:$0xf] %v780
        %845 = vst [vmem:[%s190 + $0x10] sm:$0xf] %v781
        %846 = vst [vmem:[%s190 + $0x14] sm:$0xf] %v782
        %847 = vst [vmem:[%s190 + $0x18] sm:$0xf] %v783
        %848 = vst [vmem:[%s190 + $0x1c] sm:$0xf] %v784
        %849 = vst [vmem:[%s190 + $0x20] sm:$0xf] %v785
        %850 = vst [vmem:[%s190 + $0x24] sm:$0xf] %v786
        %851 = vst [vmem:[%s190 + $0x28] sm:$0xf] %v787
        %852 = vst [vmem:[%s190 + $0x2c] sm:$0xf] %v788
        %853 = vst [vmem:[%s190 + $0x30] sm:$0xf] %v789
        %854 = vst [vmem:[%s190 + $0x34] sm:$0xf] %v790
        %855 = vst [vmem:[%s190 + $0x38] sm:$0xf] %v791
        %856 = vst [vmem:[%s190 + $0x3c] sm:$0xf] %v792
        %857 = vst [vmem:[%s190 + $0x40] sm:$0xf] %v793
        %858 = vst [vmem:[%s190 + $0x44] sm:$0xf] %v794
        %859 = vst [vmem:[%s190 + $0x48] sm:$0xf] %v795
        %860 = vst [vmem:[%s190 + $0x4c] sm:$0xf] %v796
        %861 = vst [vmem:[%s190 + $0x50] sm:$0xf] %v797
        %862 = vst [vmem:[%s190 + $0x54] sm:$0xf] %v798
        %863 = vst [vmem:[%s190 + $0x58] sm:$0xf] %v799
        %864 = vst [vmem:[%s190 + $0x5c] sm:$0xf] %v800
        %865 = vst [vmem:[%s190 + $0x60] sm:$0xf] %v801
        %866 = vst [vmem:[%s190 + $0x64] sm:$0xf] %v802
        %867 = vst [vmem:[%s190 + $0x68] sm:$0xf] %v803
        %868 = vst [vmem:[%s190 + $0x6c] sm:$0xf] %v804
        %869 = vst [vmem:[%s190 + $0x70] sm:$0xf] %v805
        %870 = vst [vmem:[%s190 + $0x74] sm:$0xf] %v806
        %871 = vst [vmem:[%s190 + $0x78] sm:$0xf] %v807
        %872 = vst [vmem:[%s190 + $0x7c] sm:$0xf] %v808
      $region36: #{gcn_forward.3} parent=27 // pred_fallthru
        _
      %s873 = smul.u32 32, %s17
      %p874 = scmp.lt.s32.totalorder %s873, 63
      %s875 = scalar_select %p874, %s873, 63
      %s876 = smul.addr %s875, 4
      %s877 = scalar_lea.vmem %s2, %s876
      // Predicated region
      $region37: #{gcn_forward.3} parent=27 // pred_check
        %p878 = pneg %p97
      $region38: #{gcn_forward.3} parent=27 // pred_check_branch
        %880 = sbr.rel (%p878) target = $region40
      $region39: #{gcn_forward.3} parent=27 // pred_region
        %s881 = smul.u32 32, %s17
      $region40: #{gcn_forward.3} parent=27 // pred_fallthru
        _
    $region28: #{gcn_forward.3} parent=5 // pred_fallthru
      _
    %p882 = scmp.le.s32.totalorder 2, %s8
    // Predicated region
    $region41: #{gcn_forward.3} parent=5 // pred_check
      %p883 = pneg %p882
    $region42: #{gcn_forward.3} parent=5 // pred_check_branch
      %885 = sbr.rel (%p883) target = $region44
    $region43: #{gcn_forward.3} parent=5 // pred_region
      %s886 = ssub.s32 %s8, 2
      // Predicated region
      $region45: #{gcn_forward.3} parent=43 // pred_check
        %p887 = pneg %p103
      $region46: #{gcn_forward.3} parent=43 // pred_check_branch
        %889 = sbr.rel (%p887) target = $region48
      $region47: #{gcn_forward.3} parent=43 // pred_region
        %s890 = smul.u32 32, %s19
        %p891 = scmp.lt.s32.totalorder %s890, 63
        %s892 = scalar_select %p891, %s890, 63
        %s893 = smul.addr %s892, 4
        %s894 = scalar_lea.vmem %s2, %s893
      $region48: #{gcn_forward.3} parent=43 // pred_fallthru
        _
    $region44: #{gcn_forward.3} parent=5 // pred_fallthru
      _
  $region6: #{gcn_forward.3} parent=0 // loop_footer
    %s12 = sadd.s32 1, %s8
  $region7: #{gcn_forward.3} parent=0 // loop_footer_branch
    %7 = sbr.rel target = $region3
  $region8: #{gcn_forward.3} parent=0 // loop_exit
    _

// kernel: gcn_forward.5
$region0: #{gcn_forward.5}
  #allocation0 [shape = 'u32[]', space=smem, size = 0x4, offset = 0x4, fixed_abs, tag = 'smem constant byte address 0x4 - core index']
  #allocation1 [shape = 'u32[144,128]{1,0:T(1,128)}', space=vmem, size = 0x12000, scoped, tag = 'internal scratch']
  #allocation2 [shape = 'f32[256,128]{1,0:T(8,128)}', space=vmem, size = 0x20000, scoped, tag = 'scratch operand']
  %s0 = inlined_call_operand.vmem [shape: bf16[512,512], index: 0, kind: input, shape index: {}]
  %s1 = inlined_call_operand.vmem [shape: bf16[512,128], index: 1, kind: input, shape index: {}]
  %s2 = inlined_call_operand.vmem [shape: f32[1,128], index: 2, kind: input, shape index: {}]
  %s3 = inlined_call_operand.vmem [shape: f32[512,128], index: 3, kind: output, shape index: {}]
  %s4 = sld [smem:[#allocation0]]
  $region53: #{gcn_forward.5} parent=0
    _
  %s6 = ssub.s32 1, %s4
  %s7 = scalar_select 0, %s6, %s4
  loop: start=0, step=1, limit=4
  $region2: #{gcn_forward.5} parent=0 // loop_pre_header
    _
  $region3: #{gcn_forward.5} parent=0 // loop_header
    %s9 = sphi 0, %s13
    %p10 = scmp.ge.s32.totalorder %s9, 4
    %s16 = sphi 0, %s28
    %s17 = sphi 0, %s24
    %s18 = sphi 0, %s16
    %s19 = sphi 0, %s17
    %s20 = sphi 0, %s18
    %s21 = sphi 0, %s19
    %s33 = sphi 0, %s35
    %s36 = sphi 0, %s33
    %s37 = sphi 0, %s36
    %s53 = sphi 0, %s37
    %s59 = sphi 0, %s61
    %s62 = sphi 0, %s59
    %s63 = sphi 0, %s62
    %s79 = sphi 0, %s63
    %s83 = sphi 0, %s83
    %s85 = sphi 0, %s83
    %s86 = sphi 0, %s85
    %s100 = sphi 0, %s86
    %s106 = sphi 0, %s108
    %s109 = sphi 0, %s106
    %s110 = sphi 0, %s109
    %s126 = sphi 0, %s110
  $region4: #{gcn_forward.5} parent=0 // loop_header_branch
    %12 = sbr.rel (%p10) target = $region8
  $region5: #{gcn_forward.5} parent=0 // loop_body
    %s14 = ssub.s32 %s9, 1
    %s15 = ssub.s32 %s9, 2
    %s22 = sadd.s32 1, %s17
    %p23 = scmp.ge.s32.totalorder %s22, 1
    %s24 = scalar_select %p23, 0, %s22
    %s25 = sadd.s32 1, %s16
    %s26 = scalar_select %p23, %s25, %s16
    %p27 = scmp.ge.s32.totalorder %s26, 2
    %s28 = scalar_select %p27, 0, %s26
    %s29 = ssub.s32 %s16, %s28
    %s30 = ssub.s32 %s17, %s24
    %s31 = sor.u32 %s29, %s30
    %p32 = scmp.eq.s32.totalorder %s31, 0
    %s34 = sadd.s32 %s33, 1
    %s35 = scalar_select %p32, %s33, %s34
    %p38 = pneg %p32
    %p39 = scmp.eq.s32.totalorder %s9, 1
    %p40 = por %p38, %p39
    %p41 = scmp.ne.s32.totalorder %s33, %s36
    %p42 = scmp.eq.s32.totalorder %s9, 0
    %p43 = por %p41, %p42
    %p44 = scmp.ne.s32.totalorder %s33, %s36
    %p45 = scmp.eq.s32.totalorder %s14, 1
    %p46 = por %p44, %p45
    %p47 = scmp.ne.s32.totalorder %s36, %s37
    %p48 = scmp.eq.s32.totalorder %s14, 0
    %p49 = por %p47, %p48
    %p50 = scmp.ne.s32.totalorder %s36, %s37
    %p51 = scmp.eq.s32.totalorder %s15, 1
    %p52 = por %p50, %p51
    %p54 = scmp.ne.s32.totalorder %s37, %s53
    %p55 = scmp.eq.s32.totalorder %s15, 0
    %p56 = por %p54, %p55
    %s57 = ssub.s32 %s17, %s24
    %p58 = scmp.eq.s32.totalorder %s57, 0
    %s60 = sadd.s32 %s59, 1
    %s61 = scalar_select %p58, %s59, %s60
    %p64 = pneg %p58
    %p65 = scmp.eq.s32.totalorder %s9, 1
    %p66 = por %p64, %p65
    %p67 = scmp.ne.s32.totalorder %s59, %s62
    %p68 = scmp.eq.s32.totalorder %s9, 0
    %p69 = por %p67, %p68
    %p70 = scmp.ne.s32.totalorder %s59, %s62
    %p71 = scmp.eq.s32.totalorder %s14, 1
    %p72 = por %p70, %p71
    %p73 = scmp.ne.s32.totalorder %s62, %s63
    %p74 = scmp.eq.s32.totalorder %s14, 0
    %p75 = por %p73, %p74
    %p76 = scmp.ne.s32.totalorder %s62, %s63
    %p77 = scmp.eq.s32.totalorder %s15, 1
    %p78 = por %p76, %p77
    %p80 = scmp.ne.s32.totalorder %s63, %s79
    %p81 = scmp.eq.s32.totalorder %s15, 0
    %p82 = por %p80, %p81
    %s84 = sadd.s32 %s83, 1
    %p87 = scmp.eq.s32.totalorder %s9, 1
    %p88 = scmp.ne.s32.totalorder %s83, %s85
    %p89 = scmp.eq.s32.totalorder %s9, 0
    %p90 = por %p88, %p89
    %p91 = scmp.ne.s32.totalorder %s83, %s85
    %p92 = scmp.eq.s32.totalorder %s14, 1
    %p93 = por %p91, %p92
    %p94 = scmp.ne.s32.totalorder %s85, %s86
    %p95 = scmp.eq.s32.totalorder %s14, 0
    %p96 = por %p94, %p95
    %p97 = scmp.ne.s32.totalorder %s85, %s86
    %p98 = scmp.eq.s32.totalorder %s15, 1
    %p99 = por %p97, %p98
    %p101 = scmp.ne.s32.totalorder %s86, %s100
    %p102 = scmp.eq.s32.totalorder %s15, 0
    %p103 = por %p101, %p102
    %s104 = ssub.s32 %s16, %s28
    %p105 = scmp.eq.s32.totalorder %s104, 0
    %s107 = sadd.s32 %s106, 1
    %s108 = scalar_select %p105, %s106, %s107
    %p111 = pneg %p105
    %p112 = scmp.eq.s32.totalorder %s9, 1
    %p113 = por %p111, %p112
    %p114 = scmp.ne.s32.totalorder %s106, %s109
    %p115 = scmp.eq.s32.totalorder %s9, 0
    %p116 = por %p114, %p115
    %p117 = scmp.ne.s32.totalorder %s106, %s109
    %p118 = scmp.eq.s32.totalorder %s14, 1
    %p119 = por %p117, %p118
    %p120 = scmp.ne.s32.totalorder %s109, %s110
    %p121 = scmp.eq.s32.totalorder %s14, 0
    %p122 = por %p120, %p121
    %p123 = scmp.ne.s32.totalorder %s109, %s110
    %p124 = scmp.eq.s32.totalorder %s15, 1
    %p125 = por %p123, %p124
    %p127 = scmp.ne.s32.totalorder %s110, %s126
    %p128 = scmp.eq.s32.totalorder %s15, 0
    %p129 = por %p127, %p128
    %p130 = scmp.le.s32.totalorder 1, %s9
    %p131 = scmp.lt.s32.totalorder %s9, 3
    %p132 = pnand %p130, %p131
    %p133 = pneg %p132
    // Predicated region
    $region9: #{gcn_forward.5} parent=5 // pred_check
      _
    $region10: #{gcn_forward.5} parent=5 // pred_check_branch
      %135 = sbr.rel (%p132) target = $region12
    $region11: #{gcn_forward.5} parent=5 // pred_region
      %s136 = ssub.s32 %s9, 1
      // Predicated region
      $region13: #{gcn_forward.5} parent=11 // pred_check
        %p137 = pneg %p75
      $region14: #{gcn_forward.5} parent=11 // pred_check_branch
        %139 = sbr.rel (%p137) target = $region16
      $region15: #{gcn_forward.5} parent=11 // pred_region
        %s140 = smul.u32 64, %s19
        %p141 = scmp.lt.s32.totalorder %s140, 63
        %s142 = scalar_select %p141, %s140, 63
        %s143 = smul.addr %s142, 4
        %s144 = scalar_lea.vmem %s1, %s143
        %s145 = smul.u32 64, %s19
      $region16: #{gcn_forward.5} parent=11 // pred_fallthru
        _
      // Predicated region
      $region17: #{gcn_forward.5} parent=11 // pred_check
        %p146 = pneg %p96
      $region18: #{gcn_forward.5} parent=11 // pred_check_branch
        %148 = sbr.rel (%p146) target = $region20
      $region19: #{gcn_forward.5} parent=11 // pred_region
        _
      $region20: #{gcn_forward.5} parent=11 // pred_fallthru
        _
    $region12: #{gcn_forward.5} parent=5 // pred_fallthru
      _
    %p149 = scmp.lt.s32.totalorder %s9, 2
    // Predicated region
    $region21: #{gcn_forward.5} parent=5 // pred_check
      %p150 = pneg %p149
    $region22: #{gcn_forward.5} parent=5 // pred_check_branch
      %152 = sbr.rel (%p150) target = $region24
    $region23: #{gcn_forward.5} parent=5 // pred_region
      // Predicated region
      $region25: #{gcn_forward.5} parent=23 // pred_check
        %p153 = pneg %p43
      $region26: #{gcn_forward.5} parent=23 // pred_check_branch
        %155 = sbr.rel (%p153) target = $region28
      $region27: #{gcn_forward.5} parent=23 // pred_region
        %s156 = smul.u32 32, %s16
        %s157 = smul.u32 4, %s17
        %p158 = scmp.lt.s32.totalorder %s156, 63
        %s159 = scalar_select %p158, %s156, 63
        %p160 = scmp.lt.s32.totalorder %s157, 3
        %s161 = scalar_select %p160, %s157, 3
        %s162 = smul.addr %s159, 4
        %s163 = sadd.s32 %s161, %s162
        %s164 = smul.addr %s163, 4
        %s165 = scalar_lea.vmem %s0, %s164
        %s166 = smul.u32 32, %s16
        %s167 = smul.u32 4, %s17
      $region28: #{gcn_forward.5} parent=23 // pred_fallthru
        _
    $region24: #{gcn_forward.5} parent=5 // pred_fallthru
      _
    %p168 = scmp.le.s32.totalorder 1, %s9
    %p169 = scmp.lt.s32.totalorder %s9, 3
    %p170 = pnand %p168, %p169
    %p171 = pneg %p170
    // Predicated region
    $region29: #{gcn_forward.5} parent=5 // pred_check
      _
    $region30: #{gcn_forward.5} parent=5 // pred_check_branch
      %173 = sbr.rel (%p170) target = $region32
    $region31: #{gcn_forward.5} parent=5 // pred_region
      %s174 = ssub.s32 %s9, 1
      %s175 = smul.u32 32, %s18
      %s176 = smul.u32 4, %s19
      %p177 = scmp.lt.s32.totalorder %s175, 63
      %s178 = scalar_select %p177, %s175, 63
      %p179 = scmp.lt.s32.totalorder %s176, 3
      %s180 = scalar_select %p179, %s176, 3
      %s181 = smul.addr %s178, 4
      %s182 = sadd.s32 %s180, %s181
      %s183 = smul.addr %s182, 4
      %s184 = scalar_lea.vmem %s0, %s183
      %p185 = pneg %p49
      %p186 = pneg %p46
      %s187 = smul.u32 64, %s19
      %p188 = scmp.lt.s32.totalorder %s187, 63
      %s189 = scalar_select %p188, %s187, 63
      %s190 = smul.addr %s189, 4
      %s191 = scalar_lea.vmem %s1, %s190
      %p192 = pneg %p75
      %p193 = pneg %p72
      %p194 = pneg %p96
      %p195 = pneg %p93
      %p196 = pneg %p122
      %p197 = pneg %p119
      %s198 = smul.u32 32, %s18
      %p199 = scmp.lt.s32.totalorder %s198, 63
      %s200 = scalar_select %p199, %s198, 63
      %s201 = smul.addr %s200, 8
      %s202 = scalar_lea.vmem %s3, %s201
      %s203 = smul.u32 32, %s18
      %s204 = smul.u32 4, %s19
      %p205 = scmp.lt.s32.totalorder %s203, 63
      %s206 = scalar_select %p205, %s203, 63
      %p207 = scmp.lt.s32.totalorder %s204, 3
      %s208 = scalar_select %p207, %s204, 3
      %s209 = smul.addr %s206, 4
      %s210 = sadd.s32 %s208, %s209
      %s211 = smul.addr %s210, 4
      %s212 = scalar_lea.vmem %s0, %s211
      %s213 = smul.u32 32, %s18
      %s214 = smul.u32 4, %s19
      %s215 = smul.u32 64, %s19
      %p216 = scmp.lt.s32.totalorder %s215, 63
      %s217 = scalar_select %p216, %s215, 63
      %s218 = smul.addr %s217, 4
      %s219 = scalar_lea.vmem %s1, %s218
      %s220 = smul.u32 64, %s19
      %s221 = smul.u32 32, %s18
      %p222 = scmp.lt.s32.totalorder %s221, 63
      %s223 = scalar_select %p222, %s221, 63
      %s224 = smul.addr %s223, 8
      %s225 = scalar_lea.vmem %s3, %s224
      %s226 = smul.u32 32, %s18
      %p228 = scmp.eq.s32.totalorder %s19, 0
      // Predicated region
      $region33: #{gcn_forward.5} parent=31 // pred_check
        %p229 = pneg %p228
      $region34: #{gcn_forward.5} parent=31 // pred_check_branch
        %231 = sbr.rel (%p229) target = $region36
      $region35: #{gcn_forward.5} parent=31 // pred_region
        %232 = vst [vmem:[#allocation2] sm:$0xff] 0.0
        %233 = vst [vmem:[#allocation2 + $0x8] sm:$0xff] 0.0
        %234 = vst [vmem:[#allocation2 + $0x10] sm:$0xff] 0.0
        %235 = vst [vmem:[#allocation2 + $0x18] sm:$0xff] 0.0
        %236 = vst [vmem:[#allocation2 + $0x20] sm:$0xff] 0.0
        %237 = vst [vmem:[#allocation2 + $0x28] sm:$0xff] 0.0
        %238 = vst [vmem:[#allocation2 + $0x30] sm:$0xff] 0.0
        %239 = vst [vmem:[#allocation2 + $0x38] sm:$0xff] 0.0
        %240 = vst [vmem:[#allocation2 + $0x40] sm:$0xff] 0.0
        %241 = vst [vmem:[#allocation2 + $0x48] sm:$0xff] 0.0
        %242 = vst [vmem:[#allocation2 + $0x50] sm:$0xff] 0.0
        %243 = vst [vmem:[#allocation2 + $0x58] sm:$0xff] 0.0
        %244 = vst [vmem:[#allocation2 + $0x60] sm:$0xff] 0.0
        %245 = vst [vmem:[#allocation2 + $0x68] sm:$0xff] 0.0
        %246 = vst [vmem:[#allocation2 + $0x70] sm:$0xff] 0.0
        %247 = vst [vmem:[#allocation2 + $0x78] sm:$0xff] 0.0
        %248 = vst [vmem:[#allocation2 + $0x80] sm:$0xff] 0.0
        %249 = vst [vmem:[#allocation2 + $0x88] sm:$0xff] 0.0
        %250 = vst [vmem:[#allocation2 + $0x90] sm:$0xff] 0.0
        %251 = vst [vmem:[#allocation2 + $0x98] sm:$0xff] 0.0
        %252 = vst [vmem:[#allocation2 + $0xa0] sm:$0xff] 0.0
        %253 = vst [vmem:[#allocation2 + $0xa8] sm:$0xff] 0.0
        %254 = vst [vmem:[#allocation2 + $0xb0] sm:$0xff] 0.0
        %255 = vst [vmem:[#allocation2 + $0xb8] sm:$0xff] 0.0
        %256 = vst [vmem:[#allocation2 + $0xc0] sm:$0xff] 0.0
        %257 = vst [vmem:[#allocation2 + $0xc8] sm:$0xff] 0.0
        %258 = vst [vmem:[#allocation2 + $0xd0] sm:$0xff] 0.0
        %259 = vst [vmem:[#allocation2 + $0xd8] sm:$0xff] 0.0
        %260 = vst [vmem:[#allocation2 + $0xe0] sm:$0xff] 0.0
        %261 = vst [vmem:[#allocation2 + $0xe8] sm:$0xff] 0.0
        %262 = vst [vmem:[#allocation2 + $0xf0] sm:$0xff] 0.0
        %263 = vst [vmem:[#allocation2 + $0xf8] sm:$0xff] 0.0
      $region36: #{gcn_forward.5} parent=31 // pred_fallthru
        _
      %v264 = vld [vmem:[#allocation2] sm:$0xff]
      %v265 = vld [vmem:[#allocation2 + $0x8] sm:$0xff]
      %v266 = vld [vmem:[#allocation2 + $0x10] sm:$0xff]
      %v267 = vld [vmem:[#allocation2 + $0x18] sm:$0xff]
      %v268 = vld [vmem:[#allocation2 + $0x20] sm:$0xff]
      %v269 = vld [vmem:[#allocation2 + $0x28] sm:$0xff]
      %v270 = vld [vmem:[#allocation2 + $0x30] sm:$0xff]
      %v271 = vld [vmem:[#allocation2 + $0x38] sm:$0xff]
      %v272 = vld [vmem:[#allocation2 + $0x40] sm:$0xff]
      %v273 = vld [vmem:[#allocation2 + $0x48] sm:$0xff]
      %v274 = vld [vmem:[#allocation2 + $0x50] sm:$0xff]
      %v275 = vld [vmem:[#allocation2 + $0x58] sm:$0xff]
      %v276 = vld [vmem:[#allocation2 + $0x60] sm:$0xff]
      %v277 = vld [vmem:[#allocation2 + $0x68] sm:$0xff]
      %v278 = vld [vmem:[#allocation2 + $0x70] sm:$0xff]
      %v279 = vld [vmem:[#allocation2 + $0x78] sm:$0xff]
      %v280 = vld [vmem:[#allocation2 + $0x80] sm:$0xff]
      %v281 = vld [vmem:[#allocation2 + $0x88] sm:$0xff]
      %v282 = vld [vmem:[#allocation2 + $0x90] sm:$0xff]
      %v283 = vld [vmem:[#allocation2 + $0x98] sm:$0xff]
      %v284 = vld [vmem:[#allocation2 + $0xa0] sm:$0xff]
      %v285 = vld [vmem:[#allocation2 + $0xa8] sm:$0xff]
      %v286 = vld [vmem:[#allocation2 + $0xb0] sm:$0xff]
      %v287 = vld [vmem:[#allocation2 + $0xb8] sm:$0xff]
      %v288 = vld [vmem:[#allocation2 + $0xc0] sm:$0xff]
      %v289 = vld [vmem:[#allocation2 + $0xc8] sm:$0xff]
      %v290 = vld [vmem:[#allocation2 + $0xd0] sm:$0xff]
      %v291 = vld [vmem:[#allocation2 + $0xd8] sm:$0xff]
      %v292 = vld [vmem:[#allocation2 + $0xe0] sm:$0xff]
      %v293 = vld [vmem:[#allocation2 + $0xe8] sm:$0xff]
      %v294 = vld [vmem:[#allocation2 + $0xf0] sm:$0xff]
      %v295 = vld [vmem:[#allocation2 + $0xf8] sm:$0xff]
      %v296 = vld [vmem:[%s212] sm:$0xff]
      %v297 = vld [vmem:[%s212 + $0x8] sm:$0xff]
      %v298 = vld [vmem:[%s212 + $0x10] sm:$0xff]
      %v299 = vld [vmem:[%s212 + $0x18] sm:$0xff]
      %v300 = vld [vmem:[%s212 + $0x20] sm:$0xff]
      %v301 = vld [vmem:[%s212 + $0x28] sm:$0xff]
      %v302 = vld [vmem:[%s212 + $0x30] sm:$0xff]
      %v303 = vld [vmem:[%s212 + $0x38] sm:$0xff]
      %v304 = vld [vmem:[%s212 + $0x40] sm:$0xff]
      %v305 = vld [vmem:[%s212 + $0x48] sm:$0xff]
      %v306 = vld [vmem:[%s212 + $0x50] sm:$0xff]
      %v307 = vld [vmem:[%s212 + $0x58] sm:$0xff]
      %v308 = vld [vmem:[%s212 + $0x60] sm:$0xff]
      %v309 = vld [vmem:[%s212 + $0x68] sm:$0xff]
      %v310 = vld [vmem:[%s212 + $0x70] sm:$0xff]
      %v311 = vld [vmem:[%s212 + $0x78] sm:$0xff]
      %v312 = vld [vmem:[%s212 + $0x80] sm:$0xff]
      %v313 = vld [vmem:[%s212 + $0x88] sm:$0xff]
      %v314 = vld [vmem:[%s212 + $0x90] sm:$0xff]
      %v315 = vld [vmem:[%s212 + $0x98] sm:$0xff]
      %v316 = vld [vmem:[%s212 + $0xa0] sm:$0xff]
      %v317 = vld [vmem:[%s212 + $0xa8] sm:$0xff]
      %v318 = vld [vmem:[%s212 + $0xb0] sm:$0xff]
      %v319 = vld [vmem:[%s212 + $0xb8] sm:$0xff]
      %v320 = vld [vmem:[%s212 + $0xc0] sm:$0xff]
      %v321 = vld [vmem:[%s212 + $0xc8] sm:$0xff]
      %v322 = vld [vmem:[%s212 + $0xd0] sm:$0xff]
      %v323 = vld [vmem:[%s212 + $0xd8] sm:$0xff]
      %v324 = vld [vmem:[%s212 + $0xe0] sm:$0xff]
      %v325 = vld [vmem:[%s212 + $0xe8] sm:$0xff]
      %v326 = vld [vmem:[%s212 + $0xf0] sm:$0xff]
      %v327 = vld [vmem:[%s212 + $0xf8] sm:$0xff]
      %v328 = vld [vmem:[%s212 + $0x100] sm:$0xff]
      %v329 = vld [vmem:[%s212 + $0x108] sm:$0xff]
      %v330 = vld [vmem:[%s212 + $0x110] sm:$0xff]
      %v331 = vld [vmem:[%s212 + $0x118] sm:$0xff]
      %v332 = vld [vmem:[%s212 + $0x120] sm:$0xff]
      %v333 = vld [vmem:[%s212 + $0x128] sm:$0xff]
      %v334 = vld [vmem:[%s212 + $0x130] sm:$0xff]
      %v335 = vld [vmem:[%s212 + $0x138] sm:$0xff]
      %v336 = vld [vmem:[%s212 + $0x140] sm:$0xff]
      %v337 = vld [vmem:[%s212 + $0x148] sm:$0xff]
      %v338 = vld [vmem:[%s212 + $0x150] sm:$0xff]
      %v339 = vld [vmem:[%s212 + $0x158] sm:$0xff]
      %v340 = vld [vmem:[%s212 + $0x160] sm:$0xff]
      %v341 = vld [vmem:[%s212 + $0x168] sm:$0xff]
      %v342 = vld [vmem:[%s212 + $0x170] sm:$0xff]
      %v343 = vld [vmem:[%s212 + $0x178] sm:$0xff]
      %v344 = vld [vmem:[%s212 + $0x180] sm:$0xff]
      %v345 = vld [vmem:[%s212 + $0x188] sm:$0xff]
      %v346 = vld [vmem:[%s212 + $0x190] sm:$0xff]
      %v347 = vld [vmem:[%s212 + $0x198] sm:$0xff]
      %v348 = vld [vmem:[%s212 + $0x1a0] sm:$0xff]
      %v349 = vld [vmem:[%s212 + $0x1a8] sm:$0xff]
      %v350 = vld [vmem:[%s212 + $0x1b0] sm:$0xff]
      %v351 = vld [vmem:[%s212 + $0x1b8] sm:$0xff]
      %v352 = vld [vmem:[%s212 + $0x1c0] sm:$0xff]
      %v353 = vld [vmem:[%s212 + $0x1c8] sm:$0xff]
      %v354 = vld [vmem:[%s212 + $0x1d0] sm:$0xff]
      %v355 = vld [vmem:[%s212 + $0x1d8] sm:$0xff]
      %v356 = vld [vmem:[%s212 + $0x1e0] sm:$0xff]
      %v357 = vld [vmem:[%s212 + $0x1e8] sm:$0xff]
      %v358 = vld [vmem:[%s212 + $0x1f0] sm:$0xff]
      %v359 = vld [vmem:[%s212 + $0x1f8] sm:$0xff]
      %v360 = vld [vmem:[%s219] sm:$0xf]
      %v361 = vld [vmem:[%s219 + $0x4] sm:$0xf]
      %v362 = vld [vmem:[%s219 + $0x8] sm:$0xf]
      %v363 = vld [vmem:[%s219 + $0xc] sm:$0xf]
      %v364 = vld [vmem:[%s219 + $0x10] sm:$0xf]
      %v365 = vld [vmem:[%s219 + $0x14] sm:$0xf]
      %v366 = vld [vmem:[%s219 + $0x18] sm:$0xf]
      %v367 = vld [vmem:[%s219 + $0x1c] sm:$0xf]
      %v368 = vld [vmem:[%s219 + $0x20] sm:$0xf]
      %v369 = vld [vmem:[%s219 + $0x24] sm:$0xf]
      %v370 = vld [vmem:[%s219 + $0x28] sm:$0xf]
      %v371 = vld [vmem:[%s219 + $0x2c] sm:$0xf]
      %v372 = vld [vmem:[%s219 + $0x30] sm:$0xf]
      %v373 = vld [vmem:[%s219 + $0x34] sm:$0xf]
      %v374 = vld [vmem:[%s219 + $0x38] sm:$0xf]
      %v375 = vld [vmem:[%s219 + $0x3c] sm:$0xf]
      %v376 = vld [vmem:[%s219 + $0x40] sm:$0xf]
      %v377 = vld [vmem:[%s219 + $0x44] sm:$0xf]
      %v378 = vld [vmem:[%s219 + $0x48] sm:$0xf]
      %v379 = vld [vmem:[%s219 + $0x4c] sm:$0xf]
      %v380 = vld [vmem:[%s219 + $0x50] sm:$0xf]
      %v381 = vld [vmem:[%s219 + $0x54] sm:$0xf]
      %v382 = vld [vmem:[%s219 + $0x58] sm:$0xf]
      %v383 = vld [vmem:[%s219 + $0x5c] sm:$0xf]
      %v384 = vld [vmem:[%s219 + $0x60] sm:$0xf]
      %v385 = vld [vmem:[%s219 + $0x64] sm:$0xf]
      %v386 = vld [vmem:[%s219 + $0x68] sm:$0xf]
      %v387 = vld [vmem:[%s219 + $0x6c] sm:$0xf]
      %v388 = vld [vmem:[%s219 + $0x70] sm:$0xf]
      %v389 = vld [vmem:[%s219 + $0x74] sm:$0xf]
      %v390 = vld [vmem:[%s219 + $0x78] sm:$0xf]
      %v391 = vld [vmem:[%s219 + $0x7c] sm:$0xf]
      %v392 = vld [vmem:[%s219 + $0x80] sm:$0xf]
      %v393 = vld [vmem:[%s219 + $0x84] sm:$0xf]
      %v394 = vld [vmem:[%s219 + $0x88] sm:$0xf]
      %v395 = vld [vmem:[%s219 + $0x8c] sm:$0xf]
      %v396 = vld [vmem:[%s219 + $0x90] sm:$0xf]
      %v397 = vld [vmem:[%s219 + $0x94] sm:$0xf]
      %v398 = vld [vmem:[%s219 + $0x98] sm:$0xf]
      %v399 = vld [vmem:[%s219 + $0x9c] sm:$0xf]
      %v400 = vld [vmem:[%s219 + $0xa0] sm:$0xf]
      %v401 = vld [vmem:[%s219 + $0xa4] sm:$0xf]
      %v402 = vld [vmem:[%s219 + $0xa8] sm:$0xf]
      %v403 = vld [vmem:[%s219 + $0xac] sm:$0xf]
      %v404 = vld [vmem:[%s219 + $0xb0] sm:$0xf]
      %v405 = vld [vmem:[%s219 + $0xb4] sm:$0xf]
      %v406 = vld [vmem:[%s219 + $0xb8] sm:$0xf]
      %v407 = vld [vmem:[%s219 + $0xbc] sm:$0xf]
      %v408 = vld [vmem:[%s219 + $0xc0] sm:$0xf]
      %v409 = vld [vmem:[%s219 + $0xc4] sm:$0xf]
      %v410 = vld [vmem:[%s219 + $0xc8] sm:$0xf]
      %v411 = vld [vmem:[%s219 + $0xcc] sm:$0xf]
      %v412 = vld [vmem:[%s219 + $0xd0] sm:$0xf]
      %v413 = vld [vmem:[%s219 + $0xd4] sm:$0xf]
      %v414 = vld [vmem:[%s219 + $0xd8] sm:$0xf]
      %v415 = vld [vmem:[%s219 + $0xdc] sm:$0xf]
      %v416 = vld [vmem:[%s219 + $0xe0] sm:$0xf]
      %v417 = vld [vmem:[%s219 + $0xe4] sm:$0xf]
      %v418 = vld [vmem:[%s219 + $0xe8] sm:$0xf]
      %v419 = vld [vmem:[%s219 + $0xec] sm:$0xf]
      %v420 = vld [vmem:[%s219 + $0xf0] sm:$0xf]
      %v421 = vld [vmem:[%s219 + $0xf4] sm:$0xf]
      %v422 = vld [vmem:[%s219 + $0xf8] sm:$0xf]
      %v423 = vld [vmem:[%s219 + $0xfc] sm:$0xf]
      %v488 = vunpack.c.l.b16 %v296
      %v489 = vunpack.c.h.b16 %v296
      %v490 = vunpack.c.l.b16 %v297
      %v491 = vunpack.c.h.b16 %v297
      %v492 = vunpack.c.l.b16 %v298
      %v493 = vunpack.c.h.b16 %v298
      %v494 = vunpack.c.l.b16 %v299
      %v495 = vunpack.c.h.b16 %v299
      %v496 = vunpack.c.l.b16 %v300
      %v497 = vunpack.c.h.b16 %v300
      %v498 = vunpack.c.l.b16 %v301
      %v499 = vunpack.c.h.b16 %v301
      %v500 = vunpack.c.l.b16 %v302
      %v501 = vunpack.c.h.b16 %v302
      %v502 = vunpack.c.l.b16 %v303
      %v503 = vunpack.c.h.b16 %v303
      %v504 = vunpack.c.l.b16 %v304
      %v505 = vunpack.c.h.b16 %v304
      %v506 = vunpack.c.l.b16 %v305
      %v507 = vunpack.c.h.b16 %v305
      %v508 = vunpack.c.l.b16 %v306
      %v509 = vunpack.c.h.b16 %v306
      %v510 = vunpack.c.l.b16 %v307
      %v511 = vunpack.c.h.b16 %v307
      %v512 = vunpack.c.l.b16 %v308
      %v513 = vunpack.c.h.b16 %v308
      %v514 = vunpack.c.l.b16 %v309
      %v515 = vunpack.c.h.b16 %v309
      %v516 = vunpack.c.l.b16 %v310
      %v517 = vunpack.c.h.b16 %v310
      %v518 = vunpack.c.l.b16 %v311
      %v519 = vunpack.c.h.b16 %v311
      %v520 = vunpack.c.l.b16 %v312
      %v521 = vunpack.c.h.b16 %v312
      %v522 = vunpack.c.l.b16 %v313
      %v523 = vunpack.c.h.b16 %v313
      %v524 = vunpack.c.l.b16 %v314
      %v525 = vunpack.c.h.b16 %v314
      %v526 = vunpack.c.l.b16 %v315
      %v527 = vunpack.c.h.b16 %v315
      %v528 = vunpack.c.l.b16 %v316
      %v529 = vunpack.c.h.b16 %v316
      %v530 = vunpack.c.l.b16 %v317
      %v531 = vunpack.c.h.b16 %v317
      %v532 = vunpack.c.l.b16 %v318
      %v533 = vunpack.c.h.b16 %v318
      %v534 = vunpack.c.l.b16 %v319
      %v535 = vunpack.c.h.b16 %v319
      %v536 = vunpack.c.l.b16 %v320
      %v537 = vunpack.c.h.b16 %v320
      %v538 = vunpack.c.l.b16 %v321
      %v539 = vunpack.c.h.b16 %v321
      %v540 = vunpack.c.l.b16 %v322
      %v541 = vunpack.c.h.b16 %v322
      %v542 = vunpack.c.l.b16 %v323
      %v543 = vunpack.c.h.b16 %v323
      %v544 = vunpack.c.l.b16 %v324
      %v545 = vunpack.c.h.b16 %v324
      %v546 = vunpack.c.l.b16 %v325
      %v547 = vunpack.c.h.b16 %v325
      %v548 = vunpack.c.l.b16 %v326
      %v549 = vunpack.c.h.b16 %v326
      %v550 = vunpack.c.l.b16 %v327
      %v551 = vunpack.c.h.b16 %v327
      %v552 = vunpack.c.l.b16 %v328
      %v553 = vunpack.c.h.b16 %v328
      %v554 = vunpack.c.l.b16 %v329
      %v555 = vunpack.c.h.b16 %v329
      %v556 = vunpack.c.l.b16 %v330
      %v557 = vunpack.c.h.b16 %v330
      %v558 = vunpack.c.l.b16 %v331
      %v559 = vunpack.c.h.b16 %v331
      %v560 = vunpack.c.l.b16 %v332
      %v561 = vunpack.c.h.b16 %v332
      %v562 = vunpack.c.l.b16 %v333
      %v563 = vunpack.c.h.b16 %v333
      %v564 = vunpack.c.l.b16 %v334
      %v565 = vunpack.c.h.b16 %v334
      %v566 = vunpack.c.l.b16 %v335
      %v567 = vunpack.c.h.b16 %v335
      %v568 = vunpack.c.l.b16 %v336
      %v569 = vunpack.c.h.b16 %v336
      %v570 = vunpack.c.l.b16 %v337
      %v571 = vunpack.c.h.b16 %v337
      %v572 = vunpack.c.l.b16 %v338
      %v573 = vunpack.c.h.b16 %v338
      %v574 = vunpack.c.l.b16 %v339
      %v575 = vunpack.c.h.b16 %v339
      %v576 = vunpack.c.l.b16 %v340
      %v577 = vunpack.c.h.b16 %v340
      %v578 = vunpack.c.l.b16 %v341
      %v579 = vunpack.c.h.b16 %v341
      %v580 = vunpack.c.l.b16 %v342
      %v581 = vunpack.c.h.b16 %v342
      %v582 = vunpack.c.l.b16 %v343
      %v583 = vunpack.c.h.b16 %v343
      %v584 = vunpack.c.l.b16 %v344
      %v585 = vunpack.c.h.b16 %v344
      %v586 = vunpack.c.l.b16 %v345
      %v587 = vunpack.c.h.b16 %v345
      %v588 = vunpack.c.l.b16 %v346
      %v589 = vunpack.c.h.b16 %v346
      %v590 = vunpack.c.l.b16 %v347
      %v591 = vunpack.c.h.b16 %v347
      %v592 = vunpack.c.l.b16 %v348
      %v593 = vunpack.c.h.b16 %v348
      %v594 = vunpack.c.l.b16 %v349
      %v595 = vunpack.c.h.b16 %v349
      %v596 = vunpack.c.l.b16 %v350
      %v597 = vunpack.c.h.b16 %v350
      %v598 = vunpack.c.l.b16 %v351
      %v599 = vunpack.c.h.b16 %v351
      %v600 = vunpack.c.l.b16 %v352
      %v601 = vunpack.c.h.b16 %v352
      %v602 = vunpack.c.l.b16 %v353
      %v603 = vunpack.c.h.b16 %v353
      %v604 = vunpack.c.l.b16 %v354
      %v605 = vunpack.c.h.b16 %v354
      %v606 = vunpack.c.l.b16 %v355
      %v607 = vunpack.c.h.b16 %v355
      %v608 = vunpack.c.l.b16 %v356
      %v609 = vunpack.c.h.b16 %v356
      %v610 = vunpack.c.l.b16 %v357
      %v611 = vunpack.c.h.b16 %v357
      %v612 = vunpack.c.l.b16 %v358
      %v613 = vunpack.c.h.b16 %v358
      %v614 = vunpack.c.l.b16 %v359
      %v615 = vunpack.c.h.b16 %v359
      %v616 = vpack.c.b16 %v492, %v488
      %v617 = vpack.c.b16 %v493, %v489
      %v618 = vpack.c.b16 %v494, %v490
      %v619 = vpack.c.b16 %v495, %v491
      %v620 = vpack.c.b16 %v500, %v496
      %v621 = vpack.c.b16 %v501, %v497
      %v622 = vpack.c.b16 %v502, %v498
      %v623 = vpack.c.b16 %v503, %v499
      %v624 = vpack.c.b16 %v508, %v504
      %v625 = vpack.c.b16 %v509, %v505
      %v626 = vpack.c.b16 %v510, %v506
      %v627 = vpack.c.b16 %v511, %v507
      %v628 = vpack.c.b16 %v516, %v512
      %v629 = vpack.c.b16 %v517, %v513
      %v630 = vpack.c.b16 %v518, %v514
      %v631 = vpack.c.b16 %v519, %v515
      %v632 = vpack.c.b16 %v524, %v520
      %v633 = vpack.c.b16 %v525, %v521
      %v634 = vpack.c.b16 %v526, %v522
      %v635 = vpack.c.b16 %v527, %v523
      %v636 = vpack.c.b16 %v532, %v528
      %v637 = vpack.c.b16 %v533, %v529
      %v638 = vpack.c.b16 %v534, %v530
      %v639 = vpack.c.b16 %v535, %v531
      %v640 = vpack.c.b16 %v540, %v536
      %v641 = vpack.c.b16 %v541, %v537
      %v642 = vpack.c.b16 %v542, %v538
      %v643 = vpack.c.b16 %v543, %v539
      %v644 = vpack.c.b16 %v548, %v544
      %v645 = vpack.c.b16 %v549, %v545
      %v646 = vpack.c.b16 %v550, %v546
      %v647 = vpack.c.b16 %v551, %v547
      %v648 = vpack.c.b16 %v556, %v552
      %v649 = vpack.c.b16 %v557, %v553
      %v650 = vpack.c.b16 %v558, %v554
      %v651 = vpack.c.b16 %v559, %v555
      %v652 = vpack.c.b16 %v564, %v560
      %v653 = vpack.c.b16 %v565, %v561
      %v654 = vpack.c.b16 %v566, %v562
      %v655 = vpack.c.b16 %v567, %v563
      %v656 = vpack.c.b16 %v572, %v568
      %v657 = vpack.c.b16 %v573, %v569
      %v658 = vpack.c.b16 %v574, %v570
      %v659 = vpack.c.b16 %v575, %v571
      %v660 = vpack.c.b16 %v580, %v576
      %v661 = vpack.c.b16 %v581, %v577
      %v662 = vpack.c.b16 %v582, %v578
      %v663 = vpack.c.b16 %v583, %v579
      %v664 = vpack.c.b16 %v588, %v584
      %v665 = vpack.c.b16 %v589, %v585
      %v666 = vpack.c.b16 %v590, %v586
      %v667 = vpack.c.b16 %v591, %v587
      %v668 = vpack.c.b16 %v596, %v592
      %v669 = vpack.c.b16 %v597, %v593
      %v670 = vpack.c.b16 %v598, %v594
      %v671 = vpack.c.b16 %v599, %v595
      %v672 = vpack.c.b16 %v604, %v600
      %v673 = vpack.c.b16 %v605, %v601
      %v674 = vpack.c.b16 %v606, %v602
      %v675 = vpack.c.b16 %v607, %v603
      %v676 = vpack.c.b16 %v612, %v608
      %v677 = vpack.c.b16 %v613, %v609
      %v678 = vpack.c.b16 %v614, %v610
      %v679 = vpack.c.b16 %v615, %v611
      %v808 = vunpack.c.l.b16 %v360
      %v809 = vunpack.c.l.b16 %v361
      %v810 = vunpack.c.l.b16 %v362
      %v811 = vunpack.c.l.b16 %v363
      %v812 = vunpack.c.l.b16 %v364
      %v813 = vunpack.c.l.b16 %v365
      %v814 = vunpack.c.l.b16 %v366
      %v815 = vunpack.c.l.b16 %v367
      %v816 = vunpack.c.l.b16 %v368
      %v817 = vunpack.c.l.b16 %v369
      %v818 = vunpack.c.l.b16 %v370
      %v819 = vunpack.c.l.b16 %v371
      %v820 = vunpack.c.l.b16 %v372
      %v821 = vunpack.c.l.b16 %v373
      %v822 = vunpack.c.l.b16 %v374
      %v823 = vunpack.c.l.b16 %v375
      %v824 = vunpack.c.l.b16 %v376
      %v825 = vunpack.c.l.b16 %v377
      %v826 = vunpack.c.l.b16 %v378
      %v827 = vunpack.c.l.b16 %v379
      %v828 = vunpack.c.l.b16 %v380
      %v829 = vunpack.c.l.b16 %v381
      %v830 = vunpack.c.l.b16 %v382
      %v831 = vunpack.c.l.b16 %v383
      %v832 = vunpack.c.l.b16 %v384
      %v833 = vunpack.c.l.b16 %v385
      %v834 = vunpack.c.l.b16 %v386
      %v835 = vunpack.c.l.b16 %v387
      %v836 = vunpack.c.l.b16 %v388
      %v837 = vunpack.c.l.b16 %v389
      %v838 = vunpack.c.l.b16 %v390
      %v839 = vunpack.c.l.b16 %v391
      %v840 = vunpack.c.l.b16 %v392
      %v841 = vunpack.c.l.b16 %v393
      %v842 = vunpack.c.l.b16 %v394
      %v843 = vunpack.c.l.b16 %v395
      %v844 = vunpack.c.l.b16 %v396
      %v845 = vunpack.c.l.b16 %v397
      %v846 = vunpack.c.l.b16 %v398
      %v847 = vunpack.c.l.b16 %v399
      %v848 = vunpack.c.l.b16 %v400
      %v849 = vunpack.c.l.b16 %v401
      %v850 = vunpack.c.l.b16 %v402
      %v851 = vunpack.c.l.b16 %v403
      %v852 = vunpack.c.l.b16 %v404
      %v853 = vunpack.c.l.b16 %v405
      %v854 = vunpack.c.l.b16 %v406
      %v855 = vunpack.c.l.b16 %v407
      %v856 = vunpack.c.l.b16 %v408
      %v857 = vunpack.c.l.b16 %v409
      %v858 = vunpack.c.l.b16 %v410
      %v859 = vunpack.c.l.b16 %v411
      %v860 = vunpack.c.l.b16 %v412
      %v861 = vunpack.c.l.b16 %v413
      %v862 = vunpack.c.l.b16 %v414
      %v863 = vunpack.c.l.b16 %v415
      %v864 = vunpack.c.l.b16 %v416
      %v865 = vunpack.c.l.b16 %v417
      %v866 = vunpack.c.l.b16 %v418
      %v867 = vunpack.c.l.b16 %v419
      %v868 = vunpack.c.l.b16 %v420
      %v869 = vunpack.c.l.b16 %v421
      %v870 = vunpack.c.l.b16 %v422
      %v871 = vunpack.c.l.b16 %v423
      %v872 = vpack.c.b16 %v809, %v808
      %v873 = vpack.c.b16 %v811, %v810
      %v874 = vpack.c.b16 %v813, %v812
      %v875 = vpack.c.b16 %v815, %v814
      %v876 = vpack.c.b16 %v817, %v816
      %v877 = vpack.c.b16 %v819, %v818
      %v878 = vpack.c.b16 %v821, %v820
      %v879 = vpack.c.b16 %v823, %v822
      %v880 = vpack.c.b16 %v825, %v824
      %v881 = vpack.c.b16 %v827, %v826
      %v882 = vpack.c.b16 %v829, %v828
      %v883 = vpack.c.b16 %v831, %v830
      %v884 = vpack.c.b16 %v833, %v832
      %v885 = vpack.c.b16 %v835, %v834
      %v886 = vpack.c.b16 %v837, %v836
      %v887 = vpack.c.b16 %v839, %v838
      %v888 = vpack.c.b16 %v841, %v840
      %v889 = vpack.c.b16 %v843, %v842
      %v890 = vpack.c.b16 %v845, %v844
      %v891 = vpack.c.b16 %v847, %v846
      %v892 = vpack.c.b16 %v849, %v848
      %v893 = vpack.c.b16 %v851, %v850
      %v894 = vpack.c.b16 %v853, %v852
      %v895 = vpack.c.b16 %v855, %v854
      %v896 = vpack.c.b16 %v857, %v856
      %v897 = vpack.c.b16 %v859, %v858
      %v898 = vpack.c.b16 %v861, %v860
      %v899 = vpack.c.b16 %v863, %v862
      %v900 = vpack.c.b16 %v865, %v864
      %v901 = vpack.c.b16 %v867, %v866
      %v902 = vpack.c.b16 %v869, %v868
      %v903 = vpack.c.b16 %v871, %v870
      %936 = vmatprep.subr.bf16.mxu0 0
      %937 = vmatpush1.bf16.msra.mxu0 %v872
      %938 = vmatprep.subr.bf16.mxu0 0
      %939 = vmatpush1.bf16.msra.mxu0 %v873
      %940 = vmatprep.subr.bf16.mxu0 0
      %941 = vmatpush1.bf16.msra.mxu0 %v874
      %942 = vmatprep.subr.bf16.mxu0 0
      %943 = vmatpush1.bf16.msra.mxu0 %v875
      %944 = vmatprep.subr.bf16.mxu0 0
      %945 = vmatpush1.bf16.msra.mxu0 %v876
      %946 = vmatprep.subr.bf16.mxu0 0
      %947 = vmatpush1.bf16.msra.mxu0 %v877
      %948 = vmatprep.subr.bf16.mxu0 0
      %949 = vmatpush1.bf16.msra.mxu0 %v878
      %950 = vmatprep.subr.bf16.mxu0 0
      %951 = vmatpush1.bf16.msra.mxu0 %v879
      %952 = vmatprep.subr.bf16.mxu0 0
      %953 = vmatpush1.bf16.msra.mxu0 %v880
      %954 = vmatprep.subr.bf16.mxu0 0
      %955 = vmatpush1.bf16.msra.mxu0 %v881
      %956 = vmatprep.subr.bf16.mxu0 0
      %957 = vmatpush1.bf16.msra.mxu0 %v882
      %958 = vmatprep.subr.bf16.mxu0 0
      %959 = vmatpush1.bf16.msra.mxu0 %v883
      %960 = vmatprep.subr.bf16.mxu0 0
      %961 = vmatpush1.bf16.msra.mxu0 %v884
      %962 = vmatprep.subr.bf16.mxu0 0
      %963 = vmatpush1.bf16.msra.mxu0 %v885
      %964 = vmatprep.subr.bf16.mxu0 0
      %965 = vmatpush1.bf16.msra.mxu0 %v886
      %966 = vmatprep.subr.bf16.mxu0 0
      %967 = vmatpush1.bf16.msra.mxu0 %v887
      %968 = vmatprep.mubr.bf16.mxu0 %v617
      %969 = vmatmul.mubr.bf16.gmra.mrb[0].mxu0 %v616
      %v970 = vpop.f32.mrb[0].mxu0
      %v971 = vadd.f32 0.0, %v970
      %v972 = vpop.f32.mrb[0].mxu0
      %v973 = vpop.f32.mrb[0].mxu0
      %v974 = vadd.f32 0.0, %v973
      %v975 = vpop.f32.mrb[0].mxu0
      %976 = vmatprep.mubr.bf16.mxu0 %v621
      %977 = vmatmul.mubr.bf16.gmra.mrb[0].mxu0 %v620
      %v978 = vpop.f32.mrb[0].mxu0
      %v979 = vadd.f32 0.0, %v978
      %v980 = vpop.f32.mrb[0].mxu0
      %v981 = vpop.f32.mrb[0].mxu0
      %v982 = vadd.f32 0.0, %v981
      %v983 = vpop.f32.mrb[0].mxu0
      %984 = vmatprep.mubr.bf16.mxu0 %v625
      %985 = vmatmul.mubr.bf16.gmra.mrb[0].mxu0 %v624
      %v986 = vpop.f32.mrb[0].mxu0
      %v987 = vadd.f32 0.0, %v986
      %v988 = vpop.f32.mrb[0].mxu0
      %v989 = vpop.f32.mrb[0].mxu0
      %v990 = vadd.f32 0.0, %v989
      %v991 = vpop.f32.mrb[0].mxu0
      %992 = vmatprep.mubr.bf16.mxu0 %v629
      %993 = vmatmul.mubr.bf16.gmra.mrb[0].mxu0 %v628
      %v994 = vpop.f32.mrb[0].mxu0
      %v995 = vadd.f32 0.0, %v994
      %v996 = vpop.f32.mrb[0].mxu0
      %v997 = vpop.f32.mrb[0].mxu0
      %v998 = vadd.f32 0.0, %v997
      %v999 = vpop.f32.mrb[0].mxu0
      %1000 = vmatprep.mubr.bf16.mxu0 %v633
      %1001 = vmatmul.mubr.bf16.gmra.mrb[0].mxu0 %v632
      %v1002 = vpop.f32.mrb[0].mxu0
      %v1003 = vadd.f32 0.0, %v1002
      %v1004 = vpop.f32.mrb[0].mxu0
      %v1005 = vpop.f32.mrb[0].mxu0
      %v1006 = vadd.f32 0.0, %v1005
      %v1007 = vpop.f32.mrb[0].mxu0
      %1008 = vmatprep.mubr.bf16.mxu0 %v637
      %1009 = vmatmul.mubr.bf16.gmra.mrb[0].mxu0 %v636
      %v1010 = vpop.f32.mrb[0].mxu0
      %v1011 = vadd.f32 0.0, %v1010
      %v1012 = vpop.f32.mrb[0].mxu0
      %v1013 = vpop.f32.mrb[0].mxu0
      %v1014 = vadd.f32 0.0, %v1013
      %v1015 = vpop.f32.mrb[0].mxu0
      %1016 = vmatprep.mubr.bf16.mxu0 %v641
      %1017 = vmatmul.mubr.bf16.gmra.mrb[0].mxu0 %v640
      %v1018 = vpop.f32.mrb[0].mxu0
      %v1019 = vadd.f32 0.0, %v1018
      %v1020 = vpop.f32.mrb[0].mxu0
      %v1021 = vpop.f32.mrb[0].mxu0
      %v1022 = vadd.f32 0.0, %v1021
      %v1023 = vpop.f32.mrb[0].mxu0
      %1024 = vmatprep.mubr.bf16.mxu0 %v645
      %1025 = vmatmul.mubr.bf16.gmra.mrb[0].mxu0 %v644
      %v1026 = vpop.f32.mrb[0].mxu0
      %v1027 = vadd.f32 0.0, %v1026
      %v1028 = vpop.f32.mrb[0].mxu0
      %v1029 = vpop.f32.mrb[0].mxu0
      %v1030 = vadd.f32 0.0, %v1029
      %v1031 = vpop.f32.mrb[0].mxu0
      %1032 = vmatprep.mubr.bf16.mxu0 %v649
      %1033 = vmatmul.mubr.bf16.gmra.mrb[0].mxu0 %v648
      %v1034 = vpop.f32.mrb[0].mxu0
      %v1035 = vadd.f32 0.0, %v1034
      %v1036 = vpop.f32.mrb[0].mxu0
      %v1037 = vpop.f32.mrb[0].mxu0
      %v1038 = vadd.f32 0.0, %v1037
      %v1039 = vpop.f32.mrb[0].mxu0
      %1040 = vmatprep.mubr.bf16.mxu0 %v653
      %1041 = vmatmul.mubr.bf16.gmra.mrb[0].mxu0 %v652
      %v1042 = vpop.f32.mrb[0].mxu0
      %v1043 = vadd.f32 0.0, %v1042
      %v1044 = vpop.f32.mrb[0].mxu0
      %v1045 = vpop.f32.mrb[0].mxu0
      %v1046 = vadd.f32 0.0, %v1045
      %v1047 = vpop.f32.mrb[0].mxu0
      %1048 = vmatprep.mubr.bf16.mxu0 %v657
      %1049 = vmatmul.mubr.bf16.gmra.mrb[0].mxu0 %v656
      %v1050 = vpop.f32.mrb[0].mxu0
      %v1051 = vadd.f32 0.0, %v1050
      %v1052 = vpop.f32.mrb[0].mxu0
      %v1053 = vpop.f32.mrb[0].mxu0
      %v1054 = vadd.f32 0.0, %v1053
      %v1055 = vpop.f32.mrb[0].mxu0
      %1056 = vmatprep.mubr.bf16.mxu0 %v661
      %1057 = vmatmul.mubr.bf16.gmra.mrb[0].mxu0 %v660
      %v1058 = vpop.f32.mrb[0].mxu0
      %v1059 = vadd.f32 0.0, %v1058
      %v1060 = vpop.f32.mrb[0].mxu0
      %v1061 = vpop.f32.mrb[0].mxu0
      %v1062 = vadd.f32 0.0, %v1061
      %v1063 = vpop.f32.mrb[0].mxu0
      %1064 = vmatprep.mubr.bf16.mxu0 %v665
      %1065 = vmatmul.mubr.bf16.gmra.mrb[0].mxu0 %v664
      %v1066 = vpop.f32.mrb[0].mxu0
      %v1067 = vadd.f32 0.0, %v1066
      %v1068 = vpop.f32.mrb[0].mxu0
      %v1069 = vpop.f32.mrb[0].mxu0
      %v1070 = vadd.f32 0.0, %v1069
      %v1071 = vpop.f32.mrb[0].mxu0
      %1072 = vmatprep.mubr.bf16.mxu0 %v669
      %1073 = vmatmul.mubr.bf16.gmra.mrb[0].mxu0 %v668
      %v1074 = vpop.f32.mrb[0].mxu0
      %v1075 = vadd.f32 0.0, %v1074
      %v1076 = vpop.f32.mrb[0].mxu0
      %v1077 = vpop.f32.mrb[0].mxu0
      %v1078 = vadd.f32 0.0, %v1077
      %v1079 = vpop.f32.mrb[0].mxu0
      %1080 = vmatprep.mubr.bf16.mxu0 %v673
      %1081 = vmatmul.mubr.bf16.gmra.mrb[0].mxu0 %v672
      %v1082 = vpop.f32.mrb[0].mxu0
      %v1083 = vadd.f32 0.0, %v1082
      %v1084 = vpop.f32.mrb[0].mxu0
      %v1085 = vpop.f32.mrb[0].mxu0
      %v1086 = vadd.f32 0.0, %v1085
      %v1087 = vpop.f32.mrb[0].mxu0
      %1088 = vmatprep.mubr.bf16.mxu0 %v677
      %1089 = vmatmul.mubr.bf16.gmra.mrb[0].mxu0 %v676
      %v1090 = vpop.f32.mrb[0].mxu0
      %v1091 = vadd.f32 0.0, %v1090
      %v1092 = vpop.f32.mrb[0].mxu0
      %v1093 = vpop.f32.mrb[0].mxu0
      %v1094 = vadd.f32 0.0, %v1093
      %v1095 = vpop.f32.mrb[0].mxu0
      %1096 = vdwg.mxu0
      %1097 = vmatprep.subr.bf16.mxu0 0
      %1098 = vmatpush1.bf16.msra.mxu0 %v888
      %1099 = vmatprep.subr.bf16.mxu0 0
      %1100 = vmatpush1.bf16.msra.mxu0 %v889
      %1101 = vmatprep.subr.bf16.mxu0 0
      %1102 = vmatpush1.bf16.msra.mxu0 %v890
      %1103 = vmatprep.subr.bf16.mxu0 0
      %1104 = vmatpush1.bf16.msra.mxu0 %v891
      %1105 = vmatprep.subr.bf16.mxu0 0
      %1106 = vmatpush1.bf16.msra.mxu0 %v892
      %1107 = vmatprep.subr.bf16.mxu0 0
      %1108 = vmatpush1.bf16.msra.mxu0 %v893
      %1109 = vmatprep.subr.bf16.mxu0 0
      %1110 = vmatpush1.bf16.msra.mxu0 %v894
      %1111 = vmatprep.subr.bf16.mxu0 0
      %1112 = vmatpush1.bf16.msra.mxu0 %v895
      %1113 = vmatprep.subr.bf16.mxu0 0
      %1114 = vmatpush1.bf16.msra.mxu0 %v896
      %1115 = vmatprep.subr.bf16.mxu0 0
      %1116 = vmatpush1.bf16.msra.mxu0 %v897
      %1117 = vmatprep.subr.bf16.mxu0 0
      %1118 = vmatpush1.bf16.msra.mxu0 %v898
      %1119 = vmatprep.subr.bf16.mxu0 0
      %1120 = vmatpush1.bf16.msra.mxu0 %v899
      %1121 = vmatprep.subr.bf16.mxu0 0
      %1122 = vmatpush1.bf16.msra.mxu0 %v900
      %1123 = vmatprep.subr.bf16.mxu0 0
      %1124 = vmatpush1.bf16.msra.mxu0 %v901
      %1125 = vmatprep.subr.bf16.mxu0 0
      %1126 = vmatpush1.bf16.msra.mxu0 %v902
      %1127 = vmatprep.subr.bf16.mxu0 0
      %1128 = vmatpush1.bf16.msra.mxu0 %v903
      %1129 = vmatprep.mubr.bf16.mxu0 %v619
      %1130 = vmatmul.mubr.bf16.gmra.mrb[0].mxu0 %v618
      %v1131 = vpop.f32.mrb[0].mxu0
      %v1132 = vadd.f32 %v971, %v1131
      %v1133 = vpop.f32.mrb[0].mxu0
      %v1134 = vpop.f32.mrb[0].mxu0
      %v1135 = vadd.f32 %v974, %v1134
      %v1136 = vpop.f32.mrb[0].mxu0
      %1137 = vmatprep.mubr.bf16.mxu0 %v623
      %1138 = vmatmul.mubr.bf16.gmra.mrb[0].mxu0 %v622
      %v1139 = vpop.f32.mrb[0].mxu0
      %v1140 = vadd.f32 %v979, %v1139
      %v1141 = vpop.f32.mrb[0].mxu0
      %v1142 = vpop.f32.mrb[0].mxu0
      %v1143 = vadd.f32 %v982, %v1142
      %v1144 = vpop.f32.mrb[0].mxu0
      %1145 = vmatprep.mubr.bf16.mxu0 %v627
      %1146 = vmatmul.mubr.bf16.gmra.mrb[0].mxu0 %v626
      %v1147 = vpop.f32.mrb[0].mxu0
      %v1148 = vadd.f32 %v987, %v1147
      %v1149 = vpop.f32.mrb[0].mxu0
      %v1150 = vpop.f32.mrb[0].mxu0
      %v1151 = vadd.f32 %v990, %v1150
      %v1152 = vpop.f32.mrb[0].mxu0
      %1153 = vmatprep.mubr.bf16.mxu0 %v631
      %1154 = vmatmul.mubr.bf16.gmra.mrb[0].mxu0 %v630
      %v1155 = vpop.f32.mrb[0].mxu0
      %v1156 = vadd.f32 %v995, %v1155
      %v1157 = vpop.f32.mrb[0].mxu0
      %v1158 = vpop.f32.mrb[0].mxu0
      %v1159 = vadd.f32 %v998, %v1158
      %v1160 = vpop.f32.mrb[0].mxu0
      %1161 = vmatprep.mubr.bf16.mxu0 %v635
      %1162 = vmatmul.mubr.bf16.gmra.mrb[0].mxu0 %v634
      %v1163 = vpop.f32.mrb[0].mxu0
      %v1164 = vadd.f32 %v1003, %v1163
      %v1165 = vpop.f32.mrb[0].mxu0
      %v1166 = vpop.f32.mrb[0].mxu0
      %v1167 = vadd.f32 %v1006, %v1166
      %v1168 = vpop.f32.mrb[0].mxu0
      %1169 = vmatprep.mubr.bf16.mxu0 %v639
      %1170 = vmatmul.mubr.bf16.gmra.mrb[0].mxu0 %v638
      %v1171 = vpop.f32.mrb[0].mxu0
      %v1172 = vadd.f32 %v1011, %v1171
      %v1173 = vpop.f32.mrb[0].mxu0
      %v1174 = vpop.f32.mrb[0].mxu0
      %v1175 = vadd.f32 %v1014, %v1174
      %v1176 = vpop.f32.mrb[0].mxu0
      %1177 = vmatprep.mubr.bf16.mxu0 %v643
      %1178 = vmatmul.mubr.bf16.gmra.mrb[0].mxu0 %v642
      %v1179 = vpop.f32.mrb[0].mxu0
      %v1180 = vadd.f32 %v1019, %v1179
      %v1181 = vpop.f32.mrb[0].mxu0
      %v1182 = vpop.f32.mrb[0].mxu0
      %v1183 = vadd.f32 %v1022, %v1182
      %v1184 = vpop.f32.mrb[0].mxu0
      %1185 = vmatprep.mubr.bf16.mxu0 %v647
      %1186 = vmatmul.mubr.bf16.gmra.mrb[0].mxu0 %v646
      %v1187 = vpop.f32.mrb[0].mxu0
      %v1188 = vadd.f32 %v1027, %v1187
      %v1189 = vpop.f32.mrb[0].mxu0
      %v1190 = vpop.f32.mrb[0].mxu0
      %v1191 = vadd.f32 %v1030, %v1190
      %v1192 = vpop.f32.mrb[0].mxu0
      %1193 = vmatprep.mubr.bf16.mxu0 %v651
      %1194 = vmatmul.mubr.bf16.gmra.mrb[0].mxu0 %v650
      %v1195 = vpop.f32.mrb[0].mxu0
      %v1196 = vadd.f32 %v1035, %v1195
      %v1197 = vpop.f32.mrb[0].mxu0
      %v1198 = vpop.f32.mrb[0].mxu0
      %v1199 = vadd.f32 %v1038, %v1198
      %v1200 = vpop.f32.mrb[0].mxu0
      %1201 = vmatprep.mubr.bf16.mxu0 %v655
      %1202 = vmatmul.mubr.bf16.gmra.mrb[0].mxu0 %v654
      %v1203 = vpop.f32.mrb[0].mxu0
      %v1204 = vadd.f32 %v1043, %v1203
      %v1205 = vpop.f32.mrb[0].mxu0
      %v1206 = vpop.f32.mrb[0].mxu0
      %v1207 = vadd.f32 %v1046, %v1206
      %v1208 = vpop.f32.mrb[0].mxu0
      %1209 = vmatprep.mubr.bf16.mxu0 %v659
      %1210 = vmatmul.mubr.bf16.gmra.mrb[0].mxu0 %v658
      %v1211 = vpop.f32.mrb[0].mxu0
      %v1212 = vadd.f32 %v1051, %v1211
      %v1213 = vpop.f32.mrb[0].mxu0
      %v1214 = vpop.f32.mrb[0].mxu0
      %v1215 = vadd.f32 %v1054, %v1214
      %v1216 = vpop.f32.mrb[0].mxu0
      %1217 = vmatprep.mubr.bf16.mxu0 %v663
      %1218 = vmatmul.mubr.bf16.gmra.mrb[0].mxu0 %v662
      %v1219 = vpop.f32.mrb[0].mxu0
      %v1220 = vadd.f32 %v1059, %v1219
      %v1221 = vpop.f32.mrb[0].mxu0
      %v1222 = vpop.f32.mrb[0].mxu0
      %v1223 = vadd.f32 %v1062, %v1222
      %v1224 = vpop.f32.mrb[0].mxu0
      %1225 = vmatprep.mubr.bf16.mxu0 %v667
      %1226 = vmatmul.mubr.bf16.gmra.mrb[0].mxu0 %v666
      %v1227 = vpop.f32.mrb[0].mxu0
      %v1228 = vadd.f32 %v1067, %v1227
      %v1229 = vpop.f32.mrb[0].mxu0
      %v1230 = vpop.f32.mrb[0].mxu0
      %v1231 = vadd.f32 %v1070, %v1230
      %v1232 = vpop.f32.mrb[0].mxu0
      %1233 = vmatprep.mubr.bf16.mxu0 %v671
      %1234 = vmatmul.mubr.bf16.gmra.mrb[0].mxu0 %v670
      %v1235 = vpop.f32.mrb[0].mxu0
      %v1236 = vadd.f32 %v1075, %v1235
      %v1237 = vpop.f32.mrb[0].mxu0
      %v1238 = vpop.f32.mrb[0].mxu0
      %v1239 = vadd.f32 %v1078, %v1238
      %v1240 = vpop.f32.mrb[0].mxu0
      %1241 = vmatprep.mubr.bf16.mxu0 %v675
      %1242 = vmatmul.mubr.bf16.gmra.mrb[0].mxu0 %v674
      %v1243 = vpop.f32.mrb[0].mxu0
      %v1244 = vadd.f32 %v1083, %v1243
      %v1245 = vpop.f32.mrb[0].mxu0
      %v1246 = vpop.f32.mrb[0].mxu0
      %v1247 = vadd.f32 %v1086, %v1246
      %v1248 = vpop.f32.mrb[0].mxu0
      %1249 = vmatprep.mubr.bf16.mxu0 %v679
      %1250 = vmatmul.mubr.bf16.gmra.mrb[0].mxu0 %v678
      %v1251 = vpop.f32.mrb[0].mxu0
      %v1252 = vadd.f32 %v1091, %v1251
      %v1253 = vpop.f32.mrb[0].mxu0
      %v1254 = vpop.f32.mrb[0].mxu0
      %v1255 = vadd.f32 %v1094, %v1254
      %v1256 = vpop.f32.mrb[0].mxu0
      %1257 = vdwg.mxu0
      %v1258 = vadd.f32 %v264, %v1132
      %v1259 = vadd.f32 %v265, %v1135
      %v1260 = vadd.f32 %v266, %v1140
      %v1261 = vadd.f32 %v267, %v1143
      %v1262 = vadd.f32 %v268, %v1148
      %v1263 = vadd.f32 %v269, %v1151
      %v1264 = vadd.f32 %v270, %v1156
      %v1265 = vadd.f32 %v271, %v1159
      %v1266 = vadd.f32 %v272, %v1164
      %v1267 = vadd.f32 %v273, %v1167
      %v1268 = vadd.f32 %v274, %v1172
      %v1269 = vadd.f32 %v275, %v1175
      %v1270 = vadd.f32 %v276, %v1180
      %v1271 = vadd.f32 %v277, %v1183
      %v1272 = vadd.f32 %v278, %v1188
      %v1273 = vadd.f32 %v279, %v1191
      %v1274 = vadd.f32 %v280, %v1196
      %v1275 = vadd.f32 %v281, %v1199
      %v1276 = vadd.f32 %v282, %v1204
      %v1277 = vadd.f32 %v283, %v1207
      %v1278 = vadd.f32 %v284, %v1212
      %v1279 = vadd.f32 %v285, %v1215
      %v1280 = vadd.f32 %v286, %v1220
      %v1281 = vadd.f32 %v287, %v1223
      %v1282 = vadd.f32 %v288, %v1228
      %v1283 = vadd.f32 %v289, %v1231
      %v1284 = vadd.f32 %v290, %v1236
      %v1285 = vadd.f32 %v291, %v1239
      %v1286 = vadd.f32 %v292, %v1244
      %v1287 = vadd.f32 %v293, %v1247
      %v1288 = vadd.f32 %v294, %v1252
      %v1289 = vadd.f32 %v295, %v1255
      %1290 = vst [vmem:[#allocation2] sm:$0xff] %v1258
      %1291 = vst [vmem:[#allocation2 + $0x8] sm:$0xff] %v1259
      %1292 = vst [vmem:[#allocation2 + $0x10] sm:$0xff] %v1260
      %1293 = vst [vmem:[#allocation2 + $0x18] sm:$0xff] %v1261
      %1294 = vst [vmem:[#allocation2 + $0x20] sm:$0xff] %v1262
      %1295 = vst [vmem:[#allocation2 + $0x28] sm:$0xff] %v1263
      %1296 = vst [vmem:[#allocation2 + $0x30] sm:$0xff] %v1264
      %1297 = vst [vmem:[#allocation2 + $0x38] sm:$0xff] %v1265
      %1298 = vst [vmem:[#allocation2 + $0x40] sm:$0xff] %v1266
      %1299 = vst [vmem:[#allocation2 + $0x48] sm:$0xff] %v1267
      %1300 = vst [vmem:[#allocation2 + $0x50] sm:$0xff] %v1268
      %1301 = vst [vmem:[#allocation2 + $0x58] sm:$0xff] %v1269
      %1302 = vst [vmem:[#allocation2 + $0x60] sm:$0xff] %v1270
      %1303 = vst [vmem:[#allocation2 + $0x68] sm:$0xff] %v1271
      %1304 = vst [vmem:[#allocation2 + $0x70] sm:$0xff] %v1272
      %1305 = vst [vmem:[#allocation2 + $0x78] sm:$0xff] %v1273
      %1306 = vst [vmem:[#allocation2 + $0x80] sm:$0xff] %v1274
      %1307 = vst [vmem:[#allocation2 + $0x88] sm:$0xff] %v1275
      %1308 = vst [vmem:[#allocation2 + $0x90] sm:$0xff] %v1276
      %1309 = vst [vmem:[#allocation2 + $0x98] sm:$0xff] %v1277
      %1310 = vst [vmem:[#allocation2 + $0xa0] sm:$0xff] %v1278
      %1311 = vst [vmem:[#allocation2 + $0xa8] sm:$0xff] %v1279
      %1312 = vst [vmem:[#allocation2 + $0xb0] sm:$0xff] %v1280
      %1313 = vst [vmem:[#allocation2 + $0xb8] sm:$0xff] %v1281
      %1314 = vst [vmem:[#allocation2 + $0xc0] sm:$0xff] %v1282
      %1315 = vst [vmem:[#allocation2 + $0xc8] sm:$0xff] %v1283
      %1316 = vst [vmem:[#allocation2 + $0xd0] sm:$0xff] %v1284
      %1317 = vst [vmem:[#allocation2 + $0xd8] sm:$0xff] %v1285
      %1318 = vst [vmem:[#allocation2 + $0xe0] sm:$0xff] %v1286
      %1319 = vst [vmem:[#allocation2 + $0xe8] sm:$0xff] %v1287
      %1320 = vst [vmem:[#allocation2 + $0xf0] sm:$0xff] %v1288
      %1321 = vst [vmem:[#allocation2 + $0xf8] sm:$0xff] %v1289
      // Predicated region
      $region37: #{gcn_forward.5} parent=31 // pred_check
        %p1322 = pneg %p228
      $region38: #{gcn_forward.5} parent=31 // pred_check_branch
        %1324 = sbr.rel (%p1322) target = $region40
      $region39: #{gcn_forward.5} parent=31 // pred_region
        %v1325 = vld [vmem:[#allocation2] sm:$0xff]
        %v1326 = vld [vmem:[#allocation2 + $0x8] sm:$0xff]
        %v1327 = vld [vmem:[#allocation2 + $0x10] sm:$0xff]
        %v1328 = vld [vmem:[#allocation2 + $0x18] sm:$0xff]
        %v1329 = vld [vmem:[#allocation2 + $0x20] sm:$0xff]
        %v1330 = vld [vmem:[#allocation2 + $0x28] sm:$0xff]
        %v1331 = vld [vmem:[#allocation2 + $0x30] sm:$0xff]
        %v1332 = vld [vmem:[#allocation2 + $0x38] sm:$0xff]
        %v1333 = vld [vmem:[#allocation2 + $0x40] sm:$0xff]
        %v1334 = vld [vmem:[#allocation2 + $0x48] sm:$0xff]
        %v1335 = vld [vmem:[#allocation2 + $0x50] sm:$0xff]
        %v1336 = vld [vmem:[#allocation2 + $0x58] sm:$0xff]
        %v1337 = vld [vmem:[#allocation2 + $0x60] sm:$0xff]
        %v1338 = vld [vmem:[#allocation2 + $0x68] sm:$0xff]
        %v1339 = vld [vmem:[#allocation2 + $0x70] sm:$0xff]
        %v1340 = vld [vmem:[#allocation2 + $0x78] sm:$0xff]
        %v1341 = vld [vmem:[#allocation2 + $0x80] sm:$0xff]
        %v1342 = vld [vmem:[#allocation2 + $0x88] sm:$0xff]
        %v1343 = vld [vmem:[#allocation2 + $0x90] sm:$0xff]
        %v1344 = vld [vmem:[#allocation2 + $0x98] sm:$0xff]
        %v1345 = vld [vmem:[#allocation2 + $0xa0] sm:$0xff]
        %v1346 = vld [vmem:[#allocation2 + $0xa8] sm:$0xff]
        %v1347 = vld [vmem:[#allocation2 + $0xb0] sm:$0xff]
        %v1348 = vld [vmem:[#allocation2 + $0xb8] sm:$0xff]
        %v1349 = vld [vmem:[#allocation2 + $0xc0] sm:$0xff]
        %v1350 = vld [vmem:[#allocation2 + $0xc8] sm:$0xff]
        %v1351 = vld [vmem:[#allocation2 + $0xd0] sm:$0xff]
        %v1352 = vld [vmem:[#allocation2 + $0xd8] sm:$0xff]
        %v1353 = vld [vmem:[#allocation2 + $0xe0] sm:$0xff]
        %v1354 = vld [vmem:[#allocation2 + $0xe8] sm:$0xff]
        %v1355 = vld [vmem:[#allocation2 + $0xf0] sm:$0xff]
        %v1356 = vld [vmem:[#allocation2 + $0xf8] sm:$0xff]
        %v1357 = vld [vmem:[%s2] sm:$0x1]
        %v1359 = vlaneseq
        %v1360 = vshrl.u32 %v1359, 7
        %v1361 = vsub.s32 0, %v1360
        %v1362 = vrot.slane %v1357, %v1361
        %v1364 = vadd.f32 %v1325, %v1362
        %v1365 = vadd.f32 %v1326, %v1362
        %v1366 = vadd.f32 %v1327, %v1362
        %v1367 = vadd.f32 %v1328, %v1362
        %v1368 = vadd.f32 %v1329, %v1362
        %v1369 = vadd.f32 %v1330, %v1362
        %v1370 = vadd.f32 %v1331, %v1362
        %v1371 = vadd.f32 %v1332, %v1362
        %v1372 = vadd.f32 %v1333, %v1362
        %v1373 = vadd.f32 %v1334, %v1362
        %v1374 = vadd.f32 %v1335, %v1362
        %v1375 = vadd.f32 %v1336, %v1362
        %v1376 = vadd.f32 %v1337, %v1362
        %v1377 = vadd.f32 %v1338, %v1362
        %v1378 = vadd.f32 %v1339, %v1362
        %v1379 = vadd.f32 %v1340, %v1362
        %v1380 = vadd.f32 %v1341, %v1362
        %v1381 = vadd.f32 %v1342, %v1362
        %v1382 = vadd.f32 %v1343, %v1362
        %v1383 = vadd.f32 %v1344, %v1362
        %v1384 = vadd.f32 %v1345, %v1362
        %v1385 = vadd.f32 %v1346, %v1362
        %v1386 = vadd.f32 %v1347, %v1362
        %v1387 = vadd.f32 %v1348, %v1362
        %v1388 = vadd.f32 %v1349, %v1362
        %v1389 = vadd.f32 %v1350, %v1362
        %v1390 = vadd.f32 %v1351, %v1362
        %v1391 = vadd.f32 %v1352, %v1362
        %v1392 = vadd.f32 %v1353, %v1362
        %v1393 = vadd.f32 %v1354, %v1362
        %v1394 = vadd.f32 %v1355, %v1362
        %v1395 = vadd.f32 %v1356, %v1362
        %1396 = vst [vmem:[%s225] sm:$0xff] %v1364
        %1397 = vst [vmem:[%s225 + $0x8] sm:$0xff] %v1365
        %1398 = vst [vmem:[%s225 + $0x10] sm:$0xff] %v1366
        %1399 = vst [vmem:[%s225 + $0x18] sm:$0xff] %v1367
        %1400 = vst [vmem:[%s225 + $0x20] sm:$0xff] %v1368
        %1401 = vst [vmem:[%s225 + $0x28] sm:$0xff] %v1369
        %1402 = vst [vmem:[%s225 + $0x30] sm:$0xff] %v1370
        %1403 = vst [vmem:[%s225 + $0x38] sm:$0xff] %v1371
        %1404 = vst [vmem:[%s225 + $0x40] sm:$0xff] %v1372
        %1405 = vst [vmem:[%s225 + $0x48] sm:$0xff] %v1373
        %1406 = vst [vmem:[%s225 + $0x50] sm:$0xff] %v1374
        %1407 = vst [vmem:[%s225 + $0x58] sm:$0xff] %v1375
        %1408 = vst [vmem:[%s225 + $0x60] sm:$0xff] %v1376
        %1409 = vst [vmem:[%s225 + $0x68] sm:$0xff] %v1377
        %1410 = vst [vmem:[%s225 + $0x70] sm:$0xff] %v1378
        %1411 = vst [vmem:[%s225 + $0x78] sm:$0xff] %v1379
        %1412 = vst [vmem:[%s225 + $0x80] sm:$0xff] %v1380
        %1413 = vst [vmem:[%s225 + $0x88] sm:$0xff] %v1381
        %1414 = vst [vmem:[%s225 + $0x90] sm:$0xff] %v1382
        %1415 = vst [vmem:[%s225 + $0x98] sm:$0xff] %v1383
        %1416 = vst [vmem:[%s225 + $0xa0] sm:$0xff] %v1384
        %1417 = vst [vmem:[%s225 + $0xa8] sm:$0xff] %v1385
        %1418 = vst [vmem:[%s225 + $0xb0] sm:$0xff] %v1386
        %1419 = vst [vmem:[%s225 + $0xb8] sm:$0xff] %v1387
        %1420 = vst [vmem:[%s225 + $0xc0] sm:$0xff] %v1388
        %1421 = vst [vmem:[%s225 + $0xc8] sm:$0xff] %v1389
        %1422 = vst [vmem:[%s225 + $0xd0] sm:$0xff] %v1390
        %1423 = vst [vmem:[%s225 + $0xd8] sm:$0xff] %v1391
        %1424 = vst [vmem:[%s225 + $0xe0] sm:$0xff] %v1392
        %1425 = vst [vmem:[%s225 + $0xe8] sm:$0xff] %v1393
        %1426 = vst [vmem:[%s225 + $0xf0] sm:$0xff] %v1394
        %1427 = vst [vmem:[%s225 + $0xf8] sm:$0xff] %v1395
      $region40: #{gcn_forward.5} parent=31 // pred_fallthru
        _
      %s1428 = smul.u32 32, %s18
      %p1429 = scmp.lt.s32.totalorder %s1428, 63
      %s1430 = scalar_select %p1429, %s1428, 63
      %s1431 = smul.addr %s1430, 8
      %s1432 = scalar_lea.vmem %s3, %s1431
      // Predicated region
      $region41: #{gcn_forward.5} parent=31 // pred_check
        %p1433 = pneg %p119
      $region42: #{gcn_forward.5} parent=31 // pred_check_branch
        %1435 = sbr.rel (%p1433) target = $region44
      $region43: #{gcn_forward.5} parent=31 // pred_region
        %s1436 = smul.u32 32, %s18
      $region44: #{gcn_forward.5} parent=31 // pred_fallthru
        _
    $region32: #{gcn_forward.5} parent=5 // pred_fallthru
      _
    %p1437 = scmp.le.s32.totalorder 2, %s9
    // Predicated region
    $region45: #{gcn_forward.5} parent=5 // pred_check
      %p1438 = pneg %p1437
    $region46: #{gcn_forward.5} parent=5 // pred_check_branch
      %1440 = sbr.rel (%p1438) target = $region48
    $region47: #{gcn_forward.5} parent=5 // pred_region
      %s1441 = ssub.s32 %s9, 2
      // Predicated region
      $region49: #{gcn_forward.5} parent=47 // pred_check
        %p1442 = pneg %p125
      $region50: #{gcn_forward.5} parent=47 // pred_check_branch
        %1444 = sbr.rel (%p1442) target = $region52
      $region51: #{gcn_forward.5} parent=47 // pred_region
        %s1445 = smul.u32 32, %s20
        %p1446 = scmp.lt.s32.totalorder %s1445, 63
        %s1447 = scalar_select %p1446, %s1445, 63
        %s1448 = smul.addr %s1447, 8
        %s1449 = scalar_lea.vmem %s3, %s1448
      $region52: #{gcn_forward.5} parent=47 // pred_fallthru
        _
    $region48: #{gcn_forward.5} parent=5 // pred_fallthru
      _
  $region6: #{gcn_forward.5} parent=0 // loop_footer
    %s13 = sadd.s32 1, %s9
  $region7: #{gcn_forward.5} parent=0 // loop_footer_branch
    %8 = sbr.rel target = $region3
  $region8: #{gcn_forward.5} parent=0 // loop_exit
    _

// kernel: gcn_forward.4
$region0: #{gcn_forward.4}
  #allocation0 [shape = 'u32[]', space=smem, size = 0x4, offset = 0x4, fixed_abs, tag = 'smem constant byte address 0x4 - core index']
  #allocation1 [shape = 'u32[144,128]{1,0:T(1,128)}', space=vmem, size = 0x12000, scoped, tag = 'internal scratch']
  #allocation2 [shape = 'f32[256,128]{1,0:T(8,128)}', space=vmem, size = 0x20000, scoped, tag = 'scratch operand']
  %s0 = inlined_call_operand.vmem [shape: bf16[512,512], index: 0, kind: input, shape index: {}]
  %s1 = inlined_call_operand.vmem [shape: bf16[512,128], index: 1, kind: input, shape index: {}]
  %s2 = inlined_call_operand.vmem [shape: f32[1,128], index: 2, kind: input, shape index: {}]
  %s3 = inlined_call_operand.vmem [shape: bf16[128,128], index: 3, kind: input, shape index: {}]
  %s4 = inlined_call_operand.vmem [shape: bf16[512,128], index: 4, kind: output, shape index: {}]
  %s5 = sld [smem:[#allocation0]]
  $region57: #{gcn_forward.4} parent=0
    _
  %s7 = ssub.s32 1, %s5
  %s8 = scalar_select 0, %s7, %s5
  loop: start=0, step=1, limit=4
  $region2: #{gcn_forward.4} parent=0 // loop_pre_header
    _
  $region3: #{gcn_forward.4} parent=0 // loop_header
    %s10 = sphi 0, %s14
    %p11 = scmp.ge.s32.totalorder %s10, 4
    %s17 = sphi 0, %s29
    %s18 = sphi 0, %s25
    %s19 = sphi 0, %s17
    %s20 = sphi 0, %s18
    %s21 = sphi 0, %s19
    %s22 = sphi 0, %s20
    %s34 = sphi 0, %s36
    %s37 = sphi 0, %s34
    %s38 = sphi 0, %s37
    %s54 = sphi 0, %s38
    %s60 = sphi 0, %s62
    %s63 = sphi 0, %s60
    %s64 = sphi 0, %s63
    %s80 = sphi 0, %s64
    %s84 = sphi 0, %s84
    %s86 = sphi 0, %s84
    %s87 = sphi 0, %s86
    %s101 = sphi 0, %s87
    %s105 = sphi 0, %s105
    %s107 = sphi 0, %s105
    %s108 = sphi 0, %s107
    %s122 = sphi 0, %s108
    %s128 = sphi 0, %s130
    %s131 = sphi 0, %s128
    %s132 = sphi 0, %s131
    %s148 = sphi 0, %s132
  $region4: #{gcn_forward.4} parent=0 // loop_header_branch
    %13 = sbr.rel (%p11) target = $region8
  $region5: #{gcn_forward.4} parent=0 // loop_body
    %s15 = ssub.s32 %s10, 1
    %s16 = ssub.s32 %s10, 2
    %s23 = sadd.s32 1, %s18
    %p24 = scmp.ge.s32.totalorder %s23, 1
    %s25 = scalar_select %p24, 0, %s23
    %s26 = sadd.s32 1, %s17
    %s27 = scalar_select %p24, %s26, %s17
    %p28 = scmp.ge.s32.totalorder %s27, 2
    %s29 = scalar_select %p28, 0, %s27
    %s30 = ssub.s32 %s17, %s29
    %s31 = ssub.s32 %s18, %s25
    %s32 = sor.u32 %s30, %s31
    %p33 = scmp.eq.s32.totalorder %s32, 0
    %s35 = sadd.s32 %s34, 1
    %s36 = scalar_select %p33, %s34, %s35
    %p39 = pneg %p33
    %p40 = scmp.eq.s32.totalorder %s10, 1
    %p41 = por %p39, %p40
    %p42 = scmp.ne.s32.totalorder %s34, %s37
    %p43 = scmp.eq.s32.totalorder %s10, 0
    %p44 = por %p42, %p43
    %p45 = scmp.ne.s32.totalorder %s34, %s37
    %p46 = scmp.eq.s32.totalorder %s15, 1
    %p47 = por %p45, %p46
    %p48 = scmp.ne.s32.totalorder %s37, %s38
    %p49 = scmp.eq.s32.totalorder %s15, 0
    %p50 = por %p48, %p49
    %p51 = scmp.ne.s32.totalorder %s37, %s38
    %p52 = scmp.eq.s32.totalorder %s16, 1
    %p53 = por %p51, %p52
    %p55 = scmp.ne.s32.totalorder %s38, %s54
    %p56 = scmp.eq.s32.totalorder %s16, 0
    %p57 = por %p55, %p56
    %s58 = ssub.s32 %s18, %s25
    %p59 = scmp.eq.s32.totalorder %s58, 0
    %s61 = sadd.s32 %s60, 1
    %s62 = scalar_select %p59, %s60, %s61
    %p65 = pneg %p59
    %p66 = scmp.eq.s32.totalorder %s10, 1
    %p67 = por %p65, %p66
    %p68 = scmp.ne.s32.totalorder %s60, %s63
    %p69 = scmp.eq.s32.totalorder %s10, 0
    %p70 = por %p68, %p69
    %p71 = scmp.ne.s32.totalorder %s60, %s63
    %p72 = scmp.eq.s32.totalorder %s15, 1
    %p73 = por %p71, %p72
    %p74 = scmp.ne.s32.totalorder %s63, %s64
    %p75 = scmp.eq.s32.totalorder %s15, 0
    %p76 = por %p74, %p75
    %p77 = scmp.ne.s32.totalorder %s63, %s64
    %p78 = scmp.eq.s32.totalorder %s16, 1
    %p79 = por %p77, %p78
    %p81 = scmp.ne.s32.totalorder %s64, %s80
    %p82 = scmp.eq.s32.totalorder %s16, 0
    %p83 = por %p81, %p82
    %s85 = sadd.s32 %s84, 1
    %p88 = scmp.eq.s32.totalorder %s10, 1
    %p89 = scmp.ne.s32.totalorder %s84, %s86
    %p90 = scmp.eq.s32.totalorder %s10, 0
    %p91 = por %p89, %p90
    %p92 = scmp.ne.s32.totalorder %s84, %s86
    %p93 = scmp.eq.s32.totalorder %s15, 1
    %p94 = por %p92, %p93
    %p95 = scmp.ne.s32.totalorder %s86, %s87
    %p96 = scmp.eq.s32.totalorder %s15, 0
    %p97 = por %p95, %p96
    %p98 = scmp.ne.s32.totalorder %s86, %s87
    %p99 = scmp.eq.s32.totalorder %s16, 1
    %p100 = por %p98, %p99
    %p102 = scmp.ne.s32.totalorder %s87, %s101
    %p103 = scmp.eq.s32.totalorder %s16, 0
    %p104 = por %p102, %p103
    %s106 = sadd.s32 %s105, 1
    %p109 = scmp.eq.s32.totalorder %s10, 1
    %p110 = scmp.ne.s32.totalorder %s105, %s107
    %p111 = scmp.eq.s32.totalorder %s10, 0
    %p112 = por %p110, %p111
    %p113 = scmp.ne.s32.totalorder %s105, %s107
    %p114 = scmp.eq.s32.totalorder %s15, 1
    %p115 = por %p113, %p114
    %p116 = scmp.ne.s32.totalorder %s107, %s108
    %p117 = scmp.eq.s32.totalorder %s15, 0
    %p118 = por %p116, %p117
    %p119 = scmp.ne.s32.totalorder %s107, %s108
    %p120 = scmp.eq.s32.totalorder %s16, 1
    %p121 = por %p119, %p120
    %p123 = scmp.ne.s32.totalorder %s108, %s122
    %p124 = scmp.eq.s32.totalorder %s16, 0
    %p125 = por %p123, %p124
    %s126 = ssub.s32 %s17, %s29
    %p127 = scmp.eq.s32.totalorder %s126, 0
    %s129 = sadd.s32 %s128, 1
    %s130 = scalar_select %p127, %s128, %s129
    %p133 = pneg %p127
    %p134 = scmp.eq.s32.totalorder %s10, 1
    %p135 = por %p133, %p134
    %p136 = scmp.ne.s32.totalorder %s128, %s131
    %p137 = scmp.eq.s32.totalorder %s10, 0
    %p138 = por %p136, %p137
    %p139 = scmp.ne.s32.totalorder %s128, %s131
    %p140 = scmp.eq.s32.totalorder %s15, 1
    %p141 = por %p139, %p140
    %p142 = scmp.ne.s32.totalorder %s131, %s132
    %p143 = scmp.eq.s32.totalorder %s15, 0
    %p144 = por %p142, %p143
    %p145 = scmp.ne.s32.totalorder %s131, %s132
    %p146 = scmp.eq.s32.totalorder %s16, 1
    %p147 = por %p145, %p146
    %p149 = scmp.ne.s32.totalorder %s132, %s148
    %p150 = scmp.eq.s32.totalorder %s16, 0
    %p151 = por %p149, %p150
    %p152 = scmp.le.s32.totalorder 1, %s10
    %p153 = scmp.lt.s32.totalorder %s10, 3
    %p154 = pnand %p152, %p153
    %p155 = pneg %p154
    // Predicated region
    $region9: #{gcn_forward.4} parent=5 // pred_check
      _
    $region10: #{gcn_forward.4} parent=5 // pred_check_branch
      %157 = sbr.rel (%p154) target = $region12
    $region11: #{gcn_forward.4} parent=5 // pred_region
      %s158 = ssub.s32 %s10, 1
      // Predicated region
      $region13: #{gcn_forward.4} parent=11 // pred_check
        %p159 = pneg %p76
      $region14: #{gcn_forward.4} parent=11 // pred_check_branch
        %161 = sbr.rel (%p159) target = $region16
      $region15: #{gcn_forward.4} parent=11 // pred_region
        %s162 = smul.u32 64, %s20
        %p163 = scmp.lt.s32.totalorder %s162, 63
        %s164 = scalar_select %p163, %s162, 63
        %s165 = smul.addr %s164, 4
        %s166 = scalar_lea.vmem %s1, %s165
        %s167 = smul.u32 64, %s20
      $region16: #{gcn_forward.4} parent=11 // pred_fallthru
        _
      // Predicated region
      $region17: #{gcn_forward.4} parent=11 // pred_check
        %p168 = pneg %p97
      $region18: #{gcn_forward.4} parent=11 // pred_check_branch
        %170 = sbr.rel (%p168) target = $region20
      $region19: #{gcn_forward.4} parent=11 // pred_region
        _
      $region20: #{gcn_forward.4} parent=11 // pred_fallthru
        _
      // Predicated region
      $region21: #{gcn_forward.4} parent=11 // pred_check
        %p171 = pneg %p118
      $region22: #{gcn_forward.4} parent=11 // pred_check_branch
        %173 = sbr.rel (%p171) target = $region24
      $region23: #{gcn_forward.4} parent=11 // pred_region
        _
      $region24: #{gcn_forward.4} parent=11 // pred_fallthru
        _
    $region12: #{gcn_forward.4} parent=5 // pred_fallthru
      _
    %p174 = scmp.lt.s32.totalorder %s10, 2
    // Predicated region
    $region25: #{gcn_forward.4} parent=5 // pred_check
      %p175 = pneg %p174
    $region26: #{gcn_forward.4} parent=5 // pred_check_branch
      %177 = sbr.rel (%p175) target = $region28
    $region27: #{gcn_forward.4} parent=5 // pred_region
      // Predicated region
      $region29: #{gcn_forward.4} parent=27 // pred_check
        %p178 = pneg %p44
      $region30: #{gcn_forward.4} parent=27 // pred_check_branch
        %180 = sbr.rel (%p178) target = $region32
      $region31: #{gcn_forward.4} parent=27 // pred_region
        %s181 = smul.u32 32, %s17
        %s182 = smul.u32 4, %s18
        %p183 = scmp.lt.s32.totalorder %s181, 63
        %s184 = scalar_select %p183, %s181, 63
        %p185 = scmp.lt.s32.totalorder %s182, 3
        %s186 = scalar_select %p185, %s182, 3
        %s187 = smul.addr %s184, 4
        %s188 = sadd.s32 %s186, %s187
        %s189 = smul.addr %s188, 4
        %s190 = scalar_lea.vmem %s0, %s189
        %s191 = smul.u32 32, %s17
        %s192 = smul.u32 4, %s18
      $region32: #{gcn_forward.4} parent=27 // pred_fallthru
        _
    $region28: #{gcn_forward.4} parent=5 // pred_fallthru
      _
    %p193 = scmp.le.s32.totalorder 1, %s10
    %p194 = scmp.lt.s32.totalorder %s10, 3
    %p195 = pnand %p193, %p194
    %p196 = pneg %p195
    // Predicated region
    $region33: #{gcn_forward.4} parent=5 // pred_check
      _
    $region34: #{gcn_forward.4} parent=5 // pred_check_branch
      %198 = sbr.rel (%p195) target = $region36
    $region35: #{gcn_forward.4} parent=5 // pred_region
      %s199 = ssub.s32 %s10, 1
      %s200 = smul.u32 32, %s19
      %s201 = smul.u32 4, %s20
      %p202 = scmp.lt.s32.totalorder %s200, 63
      %s203 = scalar_select %p202, %s200, 63
      %p204 = scmp.lt.s32.totalorder %s201, 3
      %s205 = scalar_select %p204, %s201, 3
      %s206 = smul.addr %s203, 4
      %s207 = sadd.s32 %s205, %s206
      %s208 = smul.addr %s207, 4
      %s209 = scalar_lea.vmem %s0, %s208
      %p210 = pneg %p50
      %p211 = pneg %p47
      %s212 = smul.u32 64, %s20
      %p213 = scmp.lt.s32.totalorder %s212, 63
      %s214 = scalar_select %p213, %s212, 63
      %s215 = smul.addr %s214, 4
      %s216 = scalar_lea.vmem %s1, %s215
      %p217 = pneg %p76
      %p218 = pneg %p73
      %p219 = pneg %p97
      %p220 = pneg %p94
      %p221 = pneg %p118
      %p222 = pneg %p115
      %p223 = pneg %p144
      %p224 = pneg %p141
      %s225 = smul.u32 32, %s19
      %p226 = scmp.lt.s32.totalorder %s225, 63
      %s227 = scalar_select %p226, %s225, 63
      %s228 = smul.addr %s227, 4
      %s229 = scalar_lea.vmem %s4, %s228
      %s230 = smul.u32 32, %s19
      %s231 = smul.u32 4, %s20
      %p232 = scmp.lt.s32.totalorder %s230, 63
      %s233 = scalar_select %p232, %s230, 63
      %p234 = scmp.lt.s32.totalorder %s231, 3
      %s235 = scalar_select %p234, %s231, 3
      %s236 = smul.addr %s233, 4
      %s237 = sadd.s32 %s235, %s236
      %s238 = smul.addr %s237, 4
      %s239 = scalar_lea.vmem %s0, %s238
      %s240 = smul.u32 32, %s19
      %s241 = smul.u32 4, %s20
      %s242 = smul.u32 64, %s20
      %p243 = scmp.lt.s32.totalorder %s242, 63
      %s244 = scalar_select %p243, %s242, 63
      %s245 = smul.addr %s244, 4
      %s246 = scalar_lea.vmem %s1, %s245
      %s247 = smul.u32 64, %s20
      %s248 = smul.u32 32, %s19
      %p249 = scmp.lt.s32.totalorder %s248, 63
      %s250 = scalar_select %p249, %s248, 63
      %s251 = smul.addr %s250, 4
      %s252 = scalar_lea.vmem %s4, %s251
      %s253 = smul.u32 32, %s19
      %p255 = scmp.eq.s32.totalorder %s20, 0
      // Predicated region
      $region37: #{gcn_forward.4} parent=35 // pred_check
        %p256 = pneg %p255
      $region38: #{gcn_forward.4} parent=35 // pred_check_branch
        %258 = sbr.rel (%p256) target = $region40
      $region39: #{gcn_forward.4} parent=35 // pred_region
        %259 = vst [vmem:[#allocation2] sm:$0xff] 0.0
        %260 = vst [vmem:[#allocation2 + $0x8] sm:$0xff] 0.0
        %261 = vst [vmem:[#allocation2 + $0x10] sm:$0xff] 0.0
        %262 = vst [vmem:[#allocation2 + $0x18] sm:$0xff] 0.0
        %263 = vst [vmem:[#allocation2 + $0x20] sm:$0xff] 0.0
        %264 = vst [vmem:[#allocation2 + $0x28] sm:$0xff] 0.0
        %265 = vst [vmem:[#allocation2 + $0x30] sm:$0xff] 0.0
        %266 = vst [vmem:[#allocation2 + $0x38] sm:$0xff] 0.0
        %267 = vst [vmem:[#allocation2 + $0x40] sm:$0xff] 0.0
        %268 = vst [vmem:[#allocation2 + $0x48] sm:$0xff] 0.0
        %269 = vst [vmem:[#allocation2 + $0x50] sm:$0xff] 0.0
        %270 = vst [vmem:[#allocation2 + $0x58] sm:$0xff] 0.0
        %271 = vst [vmem:[#allocation2 + $0x60] sm:$0xff] 0.0
        %272 = vst [vmem:[#allocation2 + $0x68] sm:$0xff] 0.0
        %273 = vst [vmem:[#allocation2 + $0x70] sm:$0xff] 0.0
        %274 = vst [vmem:[#allocation2 + $0x78] sm:$0xff] 0.0
        %275 = vst [vmem:[#allocation2 + $0x80] sm:$0xff] 0.0
        %276 = vst [vmem:[#allocation2 + $0x88] sm:$0xff] 0.0
        %277 = vst [vmem:[#allocation2 + $0x90] sm:$0xff] 0.0
        %278 = vst [vmem:[#allocation2 + $0x98] sm:$0xff] 0.0
        %279 = vst [vmem:[#allocation2 + $0xa0] sm:$0xff] 0.0
        %280 = vst [vmem:[#allocation2 + $0xa8] sm:$0xff] 0.0
        %281 = vst [vmem:[#allocation2 + $0xb0] sm:$0xff] 0.0
        %282 = vst [vmem:[#allocation2 + $0xb8] sm:$0xff] 0.0
        %283 = vst [vmem:[#allocation2 + $0xc0] sm:$0xff] 0.0
        %284 = vst [vmem:[#allocation2 + $0xc8] sm:$0xff] 0.0
        %285 = vst [vmem:[#allocation2 + $0xd0] sm:$0xff] 0.0
        %286 = vst [vmem:[#allocation2 + $0xd8] sm:$0xff] 0.0
        %287 = vst [vmem:[#allocation2 + $0xe0] sm:$0xff] 0.0
        %288 = vst [vmem:[#allocation2 + $0xe8] sm:$0xff] 0.0
        %289 = vst [vmem:[#allocation2 + $0xf0] sm:$0xff] 0.0
        %290 = vst [vmem:[#allocation2 + $0xf8] sm:$0xff] 0.0
      $region40: #{gcn_forward.4} parent=35 // pred_fallthru
        _
      %v291 = vld [vmem:[#allocation2] sm:$0xff]
      %v292 = vld [vmem:[#allocation2 + $0x8] sm:$0xff]
      %v293 = vld [vmem:[#allocation2 + $0x10] sm:$0xff]
      %v294 = vld [vmem:[#allocation2 + $0x18] sm:$0xff]
      %v295 = vld [vmem:[#allocation2 + $0x20] sm:$0xff]
      %v296 = vld [vmem:[#allocation2 + $0x28] sm:$0xff]
      %v297 = vld [vmem:[#allocation2 + $0x30] sm:$0xff]
      %v298 = vld [vmem:[#allocation2 + $0x38] sm:$0xff]
      %v299 = vld [vmem:[#allocation2 + $0x40] sm:$0xff]
      %v300 = vld [vmem:[#allocation2 + $0x48] sm:$0xff]
      %v301 = vld [vmem:[#allocation2 + $0x50] sm:$0xff]
      %v302 = vld [vmem:[#allocation2 + $0x58] sm:$0xff]
      %v303 = vld [vmem:[#allocation2 + $0x60] sm:$0xff]
      %v304 = vld [vmem:[#allocation2 + $0x68] sm:$0xff]
      %v305 = vld [vmem:[#allocation2 + $0x70] sm:$0xff]
      %v306 = vld [vmem:[#allocation2 + $0x78] sm:$0xff]
      %v307 = vld [vmem:[#allocation2 + $0x80] sm:$0xff]
      %v308 = vld [vmem:[#allocation2 + $0x88] sm:$0xff]
      %v309 = vld [vmem:[#allocation2 + $0x90] sm:$0xff]
      %v310 = vld [vmem:[#allocation2 + $0x98] sm:$0xff]
      %v311 = vld [vmem:[#allocation2 + $0xa0] sm:$0xff]
      %v312 = vld [vmem:[#allocation2 + $0xa8] sm:$0xff]
      %v313 = vld [vmem:[#allocation2 + $0xb0] sm:$0xff]
      %v314 = vld [vmem:[#allocation2 + $0xb8] sm:$0xff]
      %v315 = vld [vmem:[#allocation2 + $0xc0] sm:$0xff]
      %v316 = vld [vmem:[#allocation2 + $0xc8] sm:$0xff]
      %v317 = vld [vmem:[#allocation2 + $0xd0] sm:$0xff]
      %v318 = vld [vmem:[#allocation2 + $0xd8] sm:$0xff]
      %v319 = vld [vmem:[#allocation2 + $0xe0] sm:$0xff]
      %v320 = vld [vmem:[#allocation2 + $0xe8] sm:$0xff]
      %v321 = vld [vmem:[#allocation2 + $0xf0] sm:$0xff]
      %v322 = vld [vmem:[#allocation2 + $0xf8] sm:$0xff]
      %v323 = vld [vmem:[%s239] sm:$0xff]
      %v324 = vld [vmem:[%s239 + $0x8] sm:$0xff]
      %v325 = vld [vmem:[%s239 + $0x10] sm:$0xff]
      %v326 = vld [vmem:[%s239 + $0x18] sm:$0xff]
      %v327 = vld [vmem:[%s239 + $0x20] sm:$0xff]
      %v328 = vld [vmem:[%s239 + $0x28] sm:$0xff]
      %v329 = vld [vmem:[%s239 + $0x30] sm:$0xff]
      %v330 = vld [vmem:[%s239 + $0x38] sm:$0xff]
      %v331 = vld [vmem:[%s239 + $0x40] sm:$0xff]
      %v332 = vld [vmem:[%s239 + $0x48] sm:$0xff]
      %v333 = vld [vmem:[%s239 + $0x50] sm:$0xff]
      %v334 = vld [vmem:[%s239 + $0x58] sm:$0xff]
      %v335 = vld [vmem:[%s239 + $0x60] sm:$0xff]
      %v336 = vld [vmem:[%s239 + $0x68] sm:$0xff]
      %v337 = vld [vmem:[%s239 + $0x70] sm:$0xff]
      %v338 = vld [vmem:[%s239 + $0x78] sm:$0xff]
      %v339 = vld [vmem:[%s239 + $0x80] sm:$0xff]
      %v340 = vld [vmem:[%s239 + $0x88] sm:$0xff]
      %v341 = vld [vmem:[%s239 + $0x90] sm:$0xff]
      %v342 = vld [vmem:[%s239 + $0x98] sm:$0xff]
      %v343 = vld [vmem:[%s239 + $0xa0] sm:$0xff]
      %v344 = vld [vmem:[%s239 + $0xa8] sm:$0xff]
      %v345 = vld [vmem:[%s239 + $0xb0] sm:$0xff]
      %v346 = vld [vmem:[%s239 + $0xb8] sm:$0xff]
      %v347 = vld [vmem:[%s239 + $0xc0] sm:$0xff]
      %v348 = vld [vmem:[%s239 + $0xc8] sm:$0xff]
      %v349 = vld [vmem:[%s239 + $0xd0] sm:$0xff]
      %v350 = vld [vmem:[%s239 + $0xd8] sm:$0xff]
      %v351 = vld [vmem:[%s239 + $0xe0] sm:$0xff]
      %v352 = vld [vmem:[%s239 + $0xe8] sm:$0xff]
      %v353 = vld [vmem:[%s239 + $0xf0] sm:$0xff]
      %v354 = vld [vmem:[%s239 + $0xf8] sm:$0xff]
      %v355 = vld [vmem:[%s239 + $0x100] sm:$0xff]
      %v356 = vld [vmem:[%s239 + $0x108] sm:$0xff]
      %v357 = vld [vmem:[%s239 + $0x110] sm:$0xff]
      %v358 = vld [vmem:[%s239 + $0x118] sm:$0xff]
      %v359 = vld [vmem:[%s239 + $0x120] sm:$0xff]
      %v360 = vld [vmem:[%s239 + $0x128] sm:$0xff]
      %v361 = vld [vmem:[%s239 + $0x130] sm:$0xff]
      %v362 = vld [vmem:[%s239 + $0x138] sm:$0xff]
      %v363 = vld [vmem:[%s239 + $0x140] sm:$0xff]
      %v364 = vld [vmem:[%s239 + $0x148] sm:$0xff]
      %v365 = vld [vmem:[%s239 + $0x150] sm:$0xff]
      %v366 = vld [vmem:[%s239 + $0x158] sm:$0xff]
      %v367 = vld [vmem:[%s239 + $0x160] sm:$0xff]
      %v368 = vld [vmem:[%s239 + $0x168] sm:$0xff]
      %v369 = vld [vmem:[%s239 + $0x170] sm:$0xff]
      %v370 = vld [vmem:[%s239 + $0x178] sm:$0xff]
      %v371 = vld [vmem:[%s239 + $0x180] sm:$0xff]
      %v372 = vld [vmem:[%s239 + $0x188] sm:$0xff]
      %v373 = vld [vmem:[%s239 + $0x190] sm:$0xff]
      %v374 = vld [vmem:[%s239 + $0x198] sm:$0xff]
      %v375 = vld [vmem:[%s239 + $0x1a0] sm:$0xff]
      %v376 = vld [vmem:[%s239 + $0x1a8] sm:$0xff]
      %v377 = vld [vmem:[%s239 + $0x1b0] sm:$0xff]
      %v378 = vld [vmem:[%s239 + $0x1b8] sm:$0xff]
      %v379 = vld [vmem:[%s239 + $0x1c0] sm:$0xff]
      %v380 = vld [vmem:[%s239 + $0x1c8] sm:$0xff]
      %v381 = vld [vmem:[%s239 + $0x1d0] sm:$0xff]
      %v382 = vld [vmem:[%s239 + $0x1d8] sm:$0xff]
      %v383 = vld [vmem:[%s239 + $0x1e0] sm:$0xff]
      %v384 = vld [vmem:[%s239 + $0x1e8] sm:$0xff]
      %v385 = vld [vmem:[%s239 + $0x1f0] sm:$0xff]
      %v386 = vld [vmem:[%s239 + $0x1f8] sm:$0xff]
      %v387 = vld [vmem:[%s246] sm:$0xf]
      %v388 = vld [vmem:[%s246 + $0x4] sm:$0xf]
      %v389 = vld [vmem:[%s246 + $0x8] sm:$0xf]
      %v390 = vld [vmem:[%s246 + $0xc] sm:$0xf]
      %v391 = vld [vmem:[%s246 + $0x10] sm:$0xf]
      %v392 = vld [vmem:[%s246 + $0x14] sm:$0xf]
      %v393 = vld [vmem:[%s246 + $0x18] sm:$0xf]
      %v394 = vld [vmem:[%s246 + $0x1c] sm:$0xf]
      %v395 = vld [vmem:[%s246 + $0x20] sm:$0xf]
      %v396 = vld [vmem:[%s246 + $0x24] sm:$0xf]
      %v397 = vld [vmem:[%s246 + $0x28] sm:$0xf]
      %v398 = vld [vmem:[%s246 + $0x2c] sm:$0xf]
      %v399 = vld [vmem:[%s246 + $0x30] sm:$0xf]
      %v400 = vld [vmem:[%s246 + $0x34] sm:$0xf]
      %v401 = vld [vmem:[%s246 + $0x38] sm:$0xf]
      %v402 = vld [vmem:[%s246 + $0x3c] sm:$0xf]
      %v403 = vld [vmem:[%s246 + $0x40] sm:$0xf]
      %v404 = vld [vmem:[%s246 + $0x44] sm:$0xf]
      %v405 = vld [vmem:[%s246 + $0x48] sm:$0xf]
      %v406 = vld [vmem:[%s246 + $0x4c] sm:$0xf]
      %v407 = vld [vmem:[%s246 + $0x50] sm:$0xf]
      %v408 = vld [vmem:[%s246 + $0x54] sm:$0xf]
      %v409 = vld [vmem:[%s246 + $0x58] sm:$0xf]
      %v410 = vld [vmem:[%s246 + $0x5c] sm:$0xf]
      %v411 = vld [vmem:[%s246 + $0x60] sm:$0xf]
      %v412 = vld [vmem:[%s246 + $0x64] sm:$0xf]
      %v413 = vld [vmem:[%s246 + $0x68] sm:$0xf]
      %v414 = vld [vmem:[%s246 + $0x6c] sm:$0xf]
      %v415 = vld [vmem:[%s246 + $0x70] sm:$0xf]
      %v416 = vld [vmem:[%s246 + $0x74] sm:$0xf]
      %v417 = vld [vmem:[%s246 + $0x78] sm:$0xf]
      %v418 = vld [vmem:[%s246 + $0x7c] sm:$0xf]
      %v419 = vld [vmem:[%s246 + $0x80] sm:$0xf]
      %v420 = vld [vmem:[%s246 + $0x84] sm:$0xf]
      %v421 = vld [vmem:[%s246 + $0x88] sm:$0xf]
      %v422 = vld [vmem:[%s246 + $0x8c] sm:$0xf]
      %v423 = vld [vmem:[%s246 + $0x90] sm:$0xf]
      %v424 = vld [vmem:[%s246 + $0x94] sm:$0xf]
      %v425 = vld [vmem:[%s246 + $0x98] sm:$0xf]
      %v426 = vld [vmem:[%s246 + $0x9c] sm:$0xf]
      %v427 = vld [vmem:[%s246 + $0xa0] sm:$0xf]
      %v428 = vld [vmem:[%s246 + $0xa4] sm:$0xf]
      %v429 = vld [vmem:[%s246 + $0xa8] sm:$0xf]
      %v430 = vld [vmem:[%s246 + $0xac] sm:$0xf]
      %v431 = vld [vmem:[%s246 + $0xb0] sm:$0xf]
      %v432 = vld [vmem:[%s246 + $0xb4] sm:$0xf]
      %v433 = vld [vmem:[%s246 + $0xb8] sm:$0xf]
      %v434 = vld [vmem:[%s246 + $0xbc] sm:$0xf]
      %v435 = vld [vmem:[%s246 + $0xc0] sm:$0xf]
      %v436 = vld [vmem:[%s246 + $0xc4] sm:$0xf]
      %v437 = vld [vmem:[%s246 + $0xc8] sm:$0xf]
      %v438 = vld [vmem:[%s246 + $0xcc] sm:$0xf]
      %v439 = vld [vmem:[%s246 + $0xd0] sm:$0xf]
      %v440 = vld [vmem:[%s246 + $0xd4] sm:$0xf]
      %v441 = vld [vmem:[%s246 + $0xd8] sm:$0xf]
      %v442 = vld [vmem:[%s246 + $0xdc] sm:$0xf]
      %v443 = vld [vmem:[%s246 + $0xe0] sm:$0xf]
      %v444 = vld [vmem:[%s246 + $0xe4] sm:$0xf]
      %v445 = vld [vmem:[%s246 + $0xe8] sm:$0xf]
      %v446 = vld [vmem:[%s246 + $0xec] sm:$0xf]
      %v447 = vld [vmem:[%s246 + $0xf0] sm:$0xf]
      %v448 = vld [vmem:[%s246 + $0xf4] sm:$0xf]
      %v449 = vld [vmem:[%s246 + $0xf8] sm:$0xf]
      %v450 = vld [vmem:[%s246 + $0xfc] sm:$0xf]
      %v515 = vunpack.c.l.b16 %v323
      %v516 = vunpack.c.h.b16 %v323
      %v517 = vunpack.c.l.b16 %v324
      %v518 = vunpack.c.h.b16 %v324
      %v519 = vunpack.c.l.b16 %v325
      %v520 = vunpack.c.h.b16 %v325
      %v521 = vunpack.c.l.b16 %v326
      %v522 = vunpack.c.h.b16 %v326
      %v523 = vunpack.c.l.b16 %v327
      %v524 = vunpack.c.h.b16 %v327
      %v525 = vunpack.c.l.b16 %v328
      %v526 = vunpack.c.h.b16 %v328
      %v527 = vunpack.c.l.b16 %v329
      %v528 = vunpack.c.h.b16 %v329
      %v529 = vunpack.c.l.b16 %v330
      %v530 = vunpack.c.h.b16 %v330
      %v531 = vunpack.c.l.b16 %v331
      %v532 = vunpack.c.h.b16 %v331
      %v533 = vunpack.c.l.b16 %v332
      %v534 = vunpack.c.h.b16 %v332
      %v535 = vunpack.c.l.b16 %v333
      %v536 = vunpack.c.h.b16 %v333
      %v537 = vunpack.c.l.b16 %v334
      %v538 = vunpack.c.h.b16 %v334
      %v539 = vunpack.c.l.b16 %v335
      %v540 = vunpack.c.h.b16 %v335
      %v541 = vunpack.c.l.b16 %v336
      %v542 = vunpack.c.h.b16 %v336
      %v543 = vunpack.c.l.b16 %v337
      %v544 = vunpack.c.h.b16 %v337
      %v545 = vunpack.c.l.b16 %v338
      %v546 = vunpack.c.h.b16 %v338
      %v547 = vunpack.c.l.b16 %v339
      %v548 = vunpack.c.h.b16 %v339
      %v549 = vunpack.c.l.b16 %v340
      %v550 = vunpack.c.h.b16 %v340
      %v551 = vunpack.c.l.b16 %v341
      %v552 = vunpack.c.h.b16 %v341
      %v553 = vunpack.c.l.b16 %v342
      %v554 = vunpack.c.h.b16 %v342
      %v555 = vunpack.c.l.b16 %v343
      %v556 = vunpack.c.h.b16 %v343
      %v557 = vunpack.c.l.b16 %v344
      %v558 = vunpack.c.h.b16 %v344
      %v559 = vunpack.c.l.b16 %v345
      %v560 = vunpack.c.h.b16 %v345
      %v561 = vunpack.c.l.b16 %v346
      %v562 = vunpack.c.h.b16 %v346
      %v563 = vunpack.c.l.b16 %v347
      %v564 = vunpack.c.h.b16 %v347
      %v565 = vunpack.c.l.b16 %v348
      %v566 = vunpack.c.h.b16 %v348
      %v567 = vunpack.c.l.b16 %v349
      %v568 = vunpack.c.h.b16 %v349
      %v569 = vunpack.c.l.b16 %v350
      %v570 = vunpack.c.h.b16 %v350
      %v571 = vunpack.c.l.b16 %v351
      %v572 = vunpack.c.h.b16 %v351
      %v573 = vunpack.c.l.b16 %v352
      %v574 = vunpack.c.h.b16 %v352
      %v575 = vunpack.c.l.b16 %v353
      %v576 = vunpack.c.h.b16 %v353
      %v577 = vunpack.c.l.b16 %v354
      %v578 = vunpack.c.h.b16 %v354
      %v579 = vunpack.c.l.b16 %v355
      %v580 = vunpack.c.h.b16 %v355
      %v581 = vunpack.c.l.b16 %v356
      %v582 = vunpack.c.h.b16 %v356
      %v583 = vunpack.c.l.b16 %v357
      %v584 = vunpack.c.h.b16 %v357
      %v585 = vunpack.c.l.b16 %v358
      %v586 = vunpack.c.h.b16 %v358
      %v587 = vunpack.c.l.b16 %v359
      %v588 = vunpack.c.h.b16 %v359
      %v589 = vunpack.c.l.b16 %v360
      %v590 = vunpack.c.h.b16 %v360
      %v591 = vunpack.c.l.b16 %v361
      %v592 = vunpack.c.h.b16 %v361
      %v593 = vunpack.c.l.b16 %v362
      %v594 = vunpack.c.h.b16 %v362
      %v595 = vunpack.c.l.b16 %v363
      %v596 = vunpack.c.h.b16 %v363
      %v597 = vunpack.c.l.b16 %v364
      %v598 = vunpack.c.h.b16 %v364
      %v599 = vunpack.c.l.b16 %v365
      %v600 = vunpack.c.h.b16 %v365
      %v601 = vunpack.c.l.b16 %v366
      %v602 = vunpack.c.h.b16 %v366
      %v603 = vunpack.c.l.b16 %v367
      %v604 = vunpack.c.h.b16 %v367
      %v605 = vunpack.c.l.b16 %v368
      %v606 = vunpack.c.h.b16 %v368
      %v607 = vunpack.c.l.b16 %v369
      %v608 = vunpack.c.h.b16 %v369
      %v609 = vunpack.c.l.b16 %v370
      %v610 = vunpack.c.h.b16 %v370
      %v611 = vunpack.c.l.b16 %v371
      %v612 = vunpack.c.h.b16 %v371
      %v613 = vunpack.c.l.b16 %v372
      %v614 = vunpack.c.h.b16 %v372
      %v615 = vunpack.c.l.b16 %v373
      %v616 = vunpack.c.h.b16 %v373
      %v617 = vunpack.c.l.b16 %v374
      %v618 = vunpack.c.h.b16 %v374
      %v619 = vunpack.c.l.b16 %v375
      %v620 = vunpack.c.h.b16 %v375
      %v621 = vunpack.c.l.b16 %v376
      %v622 = vunpack.c.h.b16 %v376
      %v623 = vunpack.c.l.b16 %v377
      %v624 = vunpack.c.h.b16 %v377
      %v625 = vunpack.c.l.b16 %v378
      %v626 = vunpack.c.h.b16 %v378
      %v627 = vunpack.c.l.b16 %v379
      %v628 = vunpack.c.h.b16 %v379
      %v629 = vunpack.c.l.b16 %v380
      %v630 = vunpack.c.h.b16 %v380
      %v631 = vunpack.c.l.b16 %v381
      %v632 = vunpack.c.h.b16 %v381
      %v633 = vunpack.c.l.b16 %v382
      %v634 = vunpack.c.h.b16 %v382
      %v635 = vunpack.c.l.b16 %v383
      %v636 = vunpack.c.h.b16 %v383
      %v637 = vunpack.c.l.b16 %v384
      %v638 = vunpack.c.h.b16 %v384
      %v639 = vunpack.c.l.b16 %v385
      %v640 = vunpack.c.h.b16 %v385
      %v641 = vunpack.c.l.b16 %v386
      %v642 = vunpack.c.h.b16 %v386
      %v643 = vpack.c.b16 %v519, %v515
      %v644 = vpack.c.b16 %v520, %v516
      %v645 = vpack.c.b16 %v521, %v517
      %v646 = vpack.c.b16 %v522, %v518
      %v647 = vpack.c.b16 %v527, %v523
      %v648 = vpack.c.b16 %v528, %v524
      %v649 = vpack.c.b16 %v529, %v525
      %v650 = vpack.c.b16 %v530, %v526
      %v651 = vpack.c.b16 %v535, %v531
      %v652 = vpack.c.b16 %v536, %v532
      %v653 = vpack.c.b16 %v537, %v533
      %v654 = vpack.c.b16 %v538, %v534
      %v655 = vpack.c.b16 %v543, %v539
      %v656 = vpack.c.b16 %v544, %v540
      %v657 = vpack.c.b16 %v545, %v541
      %v658 = vpack.c.b16 %v546, %v542
      %v659 = vpack.c.b16 %v551, %v547
      %v660 = vpack.c.b16 %v552, %v548
      %v661 = vpack.c.b16 %v553, %v549
      %v662 = vpack.c.b16 %v554, %v550
      %v663 = vpack.c.b16 %v559, %v555
      %v664 = vpack.c.b16 %v560, %v556
      %v665 = vpack.c.b16 %v561, %v557
      %v666 = vpack.c.b16 %v562, %v558
      %v667 = vpack.c.b16 %v567, %v563
      %v668 = vpack.c.b16 %v568, %v564
      %v669 = vpack.c.b16 %v569, %v565
      %v670 = vpack.c.b16 %v570, %v566
      %v671 = vpack.c.b16 %v575, %v571
      %v672 = vpack.c.b16 %v576, %v572
      %v673 = vpack.c.b16 %v577, %v573
      %v674 = vpack.c.b16 %v578, %v574
      %v675 = vpack.c.b16 %v583, %v579
      %v676 = vpack.c.b16 %v584, %v580
      %v677 = vpack.c.b16 %v585, %v581
      %v678 = vpack.c.b16 %v586, %v582
      %v679 = vpack.c.b16 %v591, %v587
      %v680 = vpack.c.b16 %v592, %v588
      %v681 = vpack.c.b16 %v593, %v589
      %v682 = vpack.c.b16 %v594, %v590
      %v683 = vpack.c.b16 %v599, %v595
      %v684 = vpack.c.b16 %v600, %v596
      %v685 = vpack.c.b16 %v601, %v597
      %v686 = vpack.c.b16 %v602, %v598
      %v687 = vpack.c.b16 %v607, %v603
      %v688 = vpack.c.b16 %v608, %v604
      %v689 = vpack.c.b16 %v609, %v605
      %v690 = vpack.c.b16 %v610, %v606
      %v691 = vpack.c.b16 %v615, %v611
      %v692 = vpack.c.b16 %v616, %v612
      %v693 = vpack.c.b16 %v617, %v613
      %v694 = vpack.c.b16 %v618, %v614
      %v695 = vpack.c.b16 %v623, %v619
      %v696 = vpack.c.b16 %v624, %v620
      %v697 = vpack.c.b16 %v625, %v621
      %v698 = vpack.c.b16 %v626, %v622
      %v699 = vpack.c.b16 %v631, %v627
      %v700 = vpack.c.b16 %v632, %v628
      %v701 = vpack.c.b16 %v633, %v629
      %v702 = vpack.c.b16 %v634, %v630
      %v703 = vpack.c.b16 %v639, %v635
      %v704 = vpack.c.b16 %v640, %v636
      %v705 = vpack.c.b16 %v641, %v637
      %v706 = vpack.c.b16 %v642, %v638
      %v835 = vunpack.c.l.b16 %v387
      %v836 = vunpack.c.l.b16 %v388
      %v837 = vunpack.c.l.b16 %v389
      %v838 = vunpack.c.l.b16 %v390
      %v839 = vunpack.c.l.b16 %v391
      %v840 = vunpack.c.l.b16 %v392
      %v841 = vunpack.c.l.b16 %v393
      %v842 = vunpack.c.l.b16 %v394
      %v843 = vunpack.c.l.b16 %v395
      %v844 = vunpack.c.l.b16 %v396
      %v845 = vunpack.c.l.b16 %v397
      %v846 = vunpack.c.l.b16 %v398
      %v847 = vunpack.c.l.b16 %v399
      %v848 = vunpack.c.l.b16 %v400
      %v849 = vunpack.c.l.b16 %v401
      %v850 = vunpack.c.l.b16 %v402
      %v851 = vunpack.c.l.b16 %v403
      %v852 = vunpack.c.l.b16 %v404
      %v853 = vunpack.c.l.b16 %v405
      %v854 = vunpack.c.l.b16 %v406
      %v855 = vunpack.c.l.b16 %v407
      %v856 = vunpack.c.l.b16 %v408
      %v857 = vunpack.c.l.b16 %v409
      %v858 = vunpack.c.l.b16 %v410
      %v859 = vunpack.c.l.b16 %v411
      %v860 = vunpack.c.l.b16 %v412
      %v861 = vunpack.c.l.b16 %v413
      %v862 = vunpack.c.l.b16 %v414
      %v863 = vunpack.c.l.b16 %v415
      %v864 = vunpack.c.l.b16 %v416
      %v865 = vunpack.c.l.b16 %v417
      %v866 = vunpack.c.l.b16 %v418
      %v867 = vunpack.c.l.b16 %v419
      %v868 = vunpack.c.l.b16 %v420
      %v869 = vunpack.c.l.b16 %v421
      %v870 = vunpack.c.l.b16 %v422
      %v871 = vunpack.c.l.b16 %v423
      %v872 = vunpack.c.l.b16 %v424
      %v873 = vunpack.c.l.b16 %v425
      %v874 = vunpack.c.l.b16 %v426
      %v875 = vunpack.c.l.b16 %v427
      %v876 = vunpack.c.l.b16 %v428
      %v877 = vunpack.c.l.b16 %v429
      %v878 = vunpack.c.l.b16 %v430
      %v879 = vunpack.c.l.b16 %v431
      %v880 = vunpack.c.l.b16 %v432
      %v881 = vunpack.c.l.b16 %v433
      %v882 = vunpack.c.l.b16 %v434
      %v883 = vunpack.c.l.b16 %v435
      %v884 = vunpack.c.l.b16 %v436
      %v885 = vunpack.c.l.b16 %v437
      %v886 = vunpack.c.l.b16 %v438
      %v887 = vunpack.c.l.b16 %v439
      %v888 = vunpack.c.l.b16 %v440
      %v889 = vunpack.c.l.b16 %v441
      %v890 = vunpack.c.l.b16 %v442
      %v891 = vunpack.c.l.b16 %v443
      %v892 = vunpack.c.l.b16 %v444
      %v893 = vunpack.c.l.b16 %v445
      %v894 = vunpack.c.l.b16 %v446
      %v895 = vunpack.c.l.b16 %v447
      %v896 = vunpack.c.l.b16 %v448
      %v897 = vunpack.c.l.b16 %v449
      %v898 = vunpack.c.l.b16 %v450
      %v899 = vpack.c.b16 %v836, %v835
      %v900 = vpack.c.b16 %v838, %v837
      %v901 = vpack.c.b16 %v840, %v839
      %v902 = vpack.c.b16 %v842, %v841
      %v903 = vpack.c.b16 %v844, %v843
      %v904 = vpack.c.b16 %v846, %v845
      %v905 = vpack.c.b16 %v848, %v847
      %v906 = vpack.c.b16 %v850, %v849
      %v907 = vpack.c.b16 %v852, %v851
      %v908 = vpack.c.b16 %v854, %v853
      %v909 = vpack.c.b16 %v856, %v855
      %v910 = vpack.c.b16 %v858, %v857
      %v911 = vpack.c.b16 %v860, %v859
      %v912 = vpack.c.b16 %v862, %v861
      %v913 = vpack.c.b16 %v864, %v863
      %v914 = vpack.c.b16 %v866, %v865
      %v915 = vpack.c.b16 %v868, %v867
      %v916 = vpack.c.b16 %v870, %v869
      %v917 = vpack.c.b16 %v872, %v871
      %v918 = vpack.c.b16 %v874, %v873
      %v919 = vpack.c.b16 %v876, %v875
      %v920 = vpack.c.b16 %v878, %v877
      %v921 = vpack.c.b16 %v880, %v879
      %v922 = vpack.c.b16 %v882, %v881
      %v923 = vpack.c.b16 %v884, %v883
      %v924 = vpack.c.b16 %v886, %v885
      %v925 = vpack.c.b16 %v888, %v887
      %v926 = vpack.c.b16 %v890, %v889
      %v927 = vpack.c.b16 %v892, %v891
      %v928 = vpack.c.b16 %v894, %v893
      %v929 = vpack.c.b16 %v896, %v895
      %v930 = vpack.c.b16 %v898, %v897
      %963 = vmatprep.subr.bf16.mxu0 0
      %964 = vmatpush1.bf16.msra.mxu0 %v899
      %965 = vmatprep.subr.bf16.mxu0 0
      %966 = vmatpush1.bf16.msra.mxu0 %v900
      %967 = vmatprep.subr.bf16.mxu0 0
      %968 = vmatpush1.bf16.msra.mxu0 %v901
      %969 = vmatprep.subr.bf16.mxu0 0
      %970 = vmatpush1.bf16.msra.mxu0 %v902
      %971 = vmatprep.subr.bf16.mxu0 0
      %972 = vmatpush1.bf16.msra.mxu0 %v903
      %973 = vmatprep.subr.bf16.mxu0 0
      %974 = vmatpush1.bf16.msra.mxu0 %v904
      %975 = vmatprep.subr.bf16.mxu0 0
      %976 = vmatpush1.bf16.msra.mxu0 %v905
      %977 = vmatprep.subr.bf16.mxu0 0
      %978 = vmatpush1.bf16.msra.mxu0 %v906
      %979 = vmatprep.subr.bf16.mxu0 0
      %980 = vmatpush1.bf16.msra.mxu0 %v907
      %981 = vmatprep.subr.bf16.mxu0 0
      %982 = vmatpush1.bf16.msra.mxu0 %v908
      %983 = vmatprep.subr.bf16.mxu0 0
      %984 = vmatpush1.bf16.msra.mxu0 %v909
      %985 = vmatprep.subr.bf16.mxu0 0
      %986 = vmatpush1.bf16.msra.mxu0 %v910
      %987 = vmatprep.subr.bf16.mxu0 0
      %988 = vmatpush1.bf16.msra.mxu0 %v911
      %989 = vmatprep.subr.bf16.mxu0 0
      %990 = vmatpush1.bf16.msra.mxu0 %v912
      %991 = vmatprep.subr.bf16.mxu0 0
      %992 = vmatpush1.bf16.msra.mxu0 %v913
      %993 = vmatprep.subr.bf16.mxu0 0
      %994 = vmatpush1.bf16.msra.mxu0 %v914
      %995 = vmatprep.mubr.bf16.mxu0 %v644
      %996 = vmatmul.mubr.bf16.gmra.mrb[0].mxu0 %v643
      %v997 = vpop.f32.mrb[0].mxu0
      %v998 = vadd.f32 0.0, %v997
      %v999 = vpop.f32.mrb[0].mxu0
      %v1000 = vpop.f32.mrb[0].mxu0
      %v1001 = vadd.f32 0.0, %v1000
      %v1002 = vpop.f32.mrb[0].mxu0
      %1003 = vmatprep.mubr.bf16.mxu0 %v648
      %1004 = vmatmul.mubr.bf16.gmra.mrb[0].mxu0 %v647
      %v1005 = vpop.f32.mrb[0].mxu0
      %v1006 = vadd.f32 0.0, %v1005
      %v1007 = vpop.f32.mrb[0].mxu0
      %v1008 = vpop.f32.mrb[0].mxu0
      %v1009 = vadd.f32 0.0, %v1008
      %v1010 = vpop.f32.mrb[0].mxu0
      %1011 = vmatprep.mubr.bf16.mxu0 %v652
      %1012 = vmatmul.mubr.bf16.gmra.mrb[0].mxu0 %v651
      %v1013 = vpop.f32.mrb[0].mxu0
      %v1014 = vadd.f32 0.0, %v1013
      %v1015 = vpop.f32.mrb[0].mxu0
      %v1016 = vpop.f32.mrb[0].mxu0
      %v1017 = vadd.f32 0.0, %v1016
      %v1018 = vpop.f32.mrb[0].mxu0
      %1019 = vmatprep.mubr.bf16.mxu0 %v656
      %1020 = vmatmul.mubr.bf16.gmra.mrb[0].mxu0 %v655
      %v1021 = vpop.f32.mrb[0].mxu0
      %v1022 = vadd.f32 0.0, %v1021
      %v1023 = vpop.f32.mrb[0].mxu0
      %v1024 = vpop.f32.mrb[0].mxu0
      %v1025 = vadd.f32 0.0, %v1024
      %v1026 = vpop.f32.mrb[0].mxu0
      %1027 = vmatprep.mubr.bf16.mxu0 %v660
      %1028 = vmatmul.mubr.bf16.gmra.mrb[0].mxu0 %v659
      %v1029 = vpop.f32.mrb[0].mxu0
      %v1030 = vadd.f32 0.0, %v1029
      %v1031 = vpop.f32.mrb[0].mxu0
      %v1032 = vpop.f32.mrb[0].mxu0
      %v1033 = vadd.f32 0.0, %v1032
      %v1034 = vpop.f32.mrb[0].mxu0
      %1035 = vmatprep.mubr.bf16.mxu0 %v664
      %1036 = vmatmul.mubr.bf16.gmra.mrb[0].mxu0 %v663
      %v1037 = vpop.f32.mrb[0].mxu0
      %v1038 = vadd.f32 0.0, %v1037
      %v1039 = vpop.f32.mrb[0].mxu0
      %v1040 = vpop.f32.mrb[0].mxu0
      %v1041 = vadd.f32 0.0, %v1040
      %v1042 = vpop.f32.mrb[0].mxu0
      %1043 = vmatprep.mubr.bf16.mxu0 %v668
      %1044 = vmatmul.mubr.bf16.gmra.mrb[0].mxu0 %v667
      %v1045 = vpop.f32.mrb[0].mxu0
      %v1046 = vadd.f32 0.0, %v1045
      %v1047 = vpop.f32.mrb[0].mxu0
      %v1048 = vpop.f32.mrb[0].mxu0
      %v1049 = vadd.f32 0.0, %v1048
      %v1050 = vpop.f32.mrb[0].mxu0
      %1051 = vmatprep.mubr.bf16.mxu0 %v672
      %1052 = vmatmul.mubr.bf16.gmra.mrb[0].mxu0 %v671
      %v1053 = vpop.f32.mrb[0].mxu0
      %v1054 = vadd.f32 0.0, %v1053
      %v1055 = vpop.f32.mrb[0].mxu0
      %v1056 = vpop.f32.mrb[0].mxu0
      %v1057 = vadd.f32 0.0, %v1056
      %v1058 = vpop.f32.mrb[0].mxu0
      %1059 = vmatprep.mubr.bf16.mxu0 %v676
      %1060 = vmatmul.mubr.bf16.gmra.mrb[0].mxu0 %v675
      %v1061 = vpop.f32.mrb[0].mxu0
      %v1062 = vadd.f32 0.0, %v1061
      %v1063 = vpop.f32.mrb[0].mxu0
      %v1064 = vpop.f32.mrb[0].mxu0
      %v1065 = vadd.f32 0.0, %v1064
      %v1066 = vpop.f32.mrb[0].mxu0
      %1067 = vmatprep.mubr.bf16.mxu0 %v680
      %1068 = vmatmul.mubr.bf16.gmra.mrb[0].mxu0 %v679
      %v1069 = vpop.f32.mrb[0].mxu0
      %v1070 = vadd.f32 0.0, %v1069
      %v1071 = vpop.f32.mrb[0].mxu0
      %v1072 = vpop.f32.mrb[0].mxu0
      %v1073 = vadd.f32 0.0, %v1072
      %v1074 = vpop.f32.mrb[0].mxu0
      %1075 = vmatprep.mubr.bf16.mxu0 %v684
      %1076 = vmatmul.mubr.bf16.gmra.mrb[0].mxu0 %v683
      %v1077 = vpop.f32.mrb[0].mxu0
      %v1078 = vadd.f32 0.0, %v1077
      %v1079 = vpop.f32.mrb[0].mxu0
      %v1080 = vpop.f32.mrb[0].mxu0
      %v1081 = vadd.f32 0.0, %v1080
      %v1082 = vpop.f32.mrb[0].mxu0
      %1083 = vmatprep.mubr.bf16.mxu0 %v688
      %1084 = vmatmul.mubr.bf16.gmra.mrb[0].mxu0 %v687
      %v1085 = vpop.f32.mrb[0].mxu0
      %v1086 = vadd.f32 0.0, %v1085
      %v1087 = vpop.f32.mrb[0].mxu0
      %v1088 = vpop.f32.mrb[0].mxu0
      %v1089 = vadd.f32 0.0, %v1088
      %v1090 = vpop.f32.mrb[0].mxu0
      %1091 = vmatprep.mubr.bf16.mxu0 %v692
      %1092 = vmatmul.mubr.bf16.gmra.mrb[0].mxu0 %v691
      %v1093 = vpop.f32.mrb[0].mxu0
      %v1094 = vadd.f32 0.0, %v1093
      %v1095 = vpop.f32.mrb[0].mxu0
      %v1096 = vpop.f32.mrb[0].mxu0
      %v1097 = vadd.f32 0.0, %v1096
      %v1098 = vpop.f32.mrb[0].mxu0
      %1099 = vmatprep.mubr.bf16.mxu0 %v696
      %1100 = vmatmul.mubr.bf16.gmra.mrb[0].mxu0 %v695
      %v1101 = vpop.f32.mrb[0].mxu0
      %v1102 = vadd.f32 0.0, %v1101
      %v1103 = vpop.f32.mrb[0].mxu0
      %v1104 = vpop.f32.mrb[0].mxu0
      %v1105 = vadd.f32 0.0, %v1104
      %v1106 = vpop.f32.mrb[0].mxu0
      %1107 = vmatprep.mubr.bf16.mxu0 %v700
      %1108 = vmatmul.mubr.bf16.gmra.mrb[0].mxu0 %v699
      %v1109 = vpop.f32.mrb[0].mxu0
      %v1110 = vadd.f32 0.0, %v1109
      %v1111 = vpop.f32.mrb[0].mxu0
      %v1112 = vpop.f32.mrb[0].mxu0
      %v1113 = vadd.f32 0.0, %v1112
      %v1114 = vpop.f32.mrb[0].mxu0
      %1115 = vmatprep.mubr.bf16.mxu0 %v704
      %1116 = vmatmul.mubr.bf16.gmra.mrb[0].mxu0 %v703
      %v1117 = vpop.f32.mrb[0].mxu0
      %v1118 = vadd.f32 0.0, %v1117
      %v1119 = vpop.f32.mrb[0].mxu0
      %v1120 = vpop.f32.mrb[0].mxu0
      %v1121 = vadd.f32 0.0, %v1120
      %v1122 = vpop.f32.mrb[0].mxu0
      %1123 = vdwg.mxu0
      %1124 = vmatprep.subr.bf16.mxu0 0
      %1125 = vmatpush1.bf16.msra.mxu0 %v915
      %1126 = vmatprep.subr.bf16.mxu0 0
      %1127 = vmatpush1.bf16.msra.mxu0 %v916
      %1128 = vmatprep.subr.bf16.mxu0 0
      %1129 = vmatpush1.bf16.msra.mxu0 %v917
      %1130 = vmatprep.subr.bf16.mxu0 0
      %1131 = vmatpush1.bf16.msra.mxu0 %v918
      %1132 = vmatprep.subr.bf16.mxu0 0
      %1133 = vmatpush1.bf16.msra.mxu0 %v919
      %1134 = vmatprep.subr.bf16.mxu0 0
      %1135 = vmatpush1.bf16.msra.mxu0 %v920
      %1136 = vmatprep.subr.bf16.mxu0 0
      %1137 = vmatpush1.bf16.msra.mxu0 %v921
      %1138 = vmatprep.subr.bf16.mxu0 0
      %1139 = vmatpush1.bf16.msra.mxu0 %v922
      %1140 = vmatprep.subr.bf16.mxu0 0
      %1141 = vmatpush1.bf16.msra.mxu0 %v923
      %1142 = vmatprep.subr.bf16.mxu0 0
      %1143 = vmatpush1.bf16.msra.mxu0 %v924
      %1144 = vmatprep.subr.bf16.mxu0 0
      %1145 = vmatpush1.bf16.msra.mxu0 %v925
      %1146 = vmatprep.subr.bf16.mxu0 0
      %1147 = vmatpush1.bf16.msra.mxu0 %v926
      %1148 = vmatprep.subr.bf16.mxu0 0
      %1149 = vmatpush1.bf16.msra.mxu0 %v927
      %1150 = vmatprep.subr.bf16.mxu0 0
      %1151 = vmatpush1.bf16.msra.mxu0 %v928
      %1152 = vmatprep.subr.bf16.mxu0 0
      %1153 = vmatpush1.bf16.msra.mxu0 %v929
      %1154 = vmatprep.subr.bf16.mxu0 0
      %1155 = vmatpush1.bf16.msra.mxu0 %v930
      %1156 = vmatprep.mubr.bf16.mxu0 %v646
      %1157 = vmatmul.mubr.bf16.gmra.mrb[0].mxu0 %v645
      %v1158 = vpop.f32.mrb[0].mxu0
      %v1159 = vadd.f32 %v998, %v1158
      %v1160 = vpop.f32.mrb[0].mxu0
      %v1161 = vpop.f32.mrb[0].mxu0
      %v1162 = vadd.f32 %v1001, %v1161
      %v1163 = vpop.f32.mrb[0].mxu0
      %1164 = vmatprep.mubr.bf16.mxu0 %v650
      %1165 = vmatmul.mubr.bf16.gmra.mrb[0].mxu0 %v649
      %v1166 = vpop.f32.mrb[0].mxu0
      %v1167 = vadd.f32 %v1006, %v1166
      %v1168 = vpop.f32.mrb[0].mxu0
      %v1169 = vpop.f32.mrb[0].mxu0
      %v1170 = vadd.f32 %v1009, %v1169
      %v1171 = vpop.f32.mrb[0].mxu0
      %1172 = vmatprep.mubr.bf16.mxu0 %v654
      %1173 = vmatmul.mubr.bf16.gmra.mrb[0].mxu0 %v653
      %v1174 = vpop.f32.mrb[0].mxu0
      %v1175 = vadd.f32 %v1014, %v1174
      %v1176 = vpop.f32.mrb[0].mxu0
      %v1177 = vpop.f32.mrb[0].mxu0
      %v1178 = vadd.f32 %v1017, %v1177
      %v1179 = vpop.f32.mrb[0].mxu0
      %1180 = vmatprep.mubr.bf16.mxu0 %v658
      %1181 = vmatmul.mubr.bf16.gmra.mrb[0].mxu0 %v657
      %v1182 = vpop.f32.mrb[0].mxu0
      %v1183 = vadd.f32 %v1022, %v1182
      %v1184 = vpop.f32.mrb[0].mxu0
      %v1185 = vpop.f32.mrb[0].mxu0
      %v1186 = vadd.f32 %v1025, %v1185
      %v1187 = vpop.f32.mrb[0].mxu0
      %1188 = vmatprep.mubr.bf16.mxu0 %v662
      %1189 = vmatmul.mubr.bf16.gmra.mrb[0].mxu0 %v661
      %v1190 = vpop.f32.mrb[0].mxu0
      %v1191 = vadd.f32 %v1030, %v1190
      %v1192 = vpop.f32.mrb[0].mxu0
      %v1193 = vpop.f32.mrb[0].mxu0
      %v1194 = vadd.f32 %v1033, %v1193
      %v1195 = vpop.f32.mrb[0].mxu0
      %1196 = vmatprep.mubr.bf16.mxu0 %v666
      %1197 = vmatmul.mubr.bf16.gmra.mrb[0].mxu0 %v665
      %v1198 = vpop.f32.mrb[0].mxu0
      %v1199 = vadd.f32 %v1038, %v1198
      %v1200 = vpop.f32.mrb[0].mxu0
      %v1201 = vpop.f32.mrb[0].mxu0
      %v1202 = vadd.f32 %v1041, %v1201
      %v1203 = vpop.f32.mrb[0].mxu0
      %1204 = vmatprep.mubr.bf16.mxu0 %v670
      %1205 = vmatmul.mubr.bf16.gmra.mrb[0].mxu0 %v669
      %v1206 = vpop.f32.mrb[0].mxu0
      %v1207 = vadd.f32 %v1046, %v1206
      %v1208 = vpop.f32.mrb[0].mxu0
      %v1209 = vpop.f32.mrb[0].mxu0
      %v1210 = vadd.f32 %v1049, %v1209
      %v1211 = vpop.f32.mrb[0].mxu0
      %1212 = vmatprep.mubr.bf16.mxu0 %v674
      %1213 = vmatmul.mubr.bf16.gmra.mrb[0].mxu0 %v673
      %v1214 = vpop.f32.mrb[0].mxu0
      %v1215 = vadd.f32 %v1054, %v1214
      %v1216 = vpop.f32.mrb[0].mxu0
      %v1217 = vpop.f32.mrb[0].mxu0
      %v1218 = vadd.f32 %v1057, %v1217
      %v1219 = vpop.f32.mrb[0].mxu0
      %1220 = vmatprep.mubr.bf16.mxu0 %v678
      %1221 = vmatmul.mubr.bf16.gmra.mrb[0].mxu0 %v677
      %v1222 = vpop.f32.mrb[0].mxu0
      %v1223 = vadd.f32 %v1062, %v1222
      %v1224 = vpop.f32.mrb[0].mxu0
      %v1225 = vpop.f32.mrb[0].mxu0
      %v1226 = vadd.f32 %v1065, %v1225
      %v1227 = vpop.f32.mrb[0].mxu0
      %1228 = vmatprep.mubr.bf16.mxu0 %v682
      %1229 = vmatmul.mubr.bf16.gmra.mrb[0].mxu0 %v681
      %v1230 = vpop.f32.mrb[0].mxu0
      %v1231 = vadd.f32 %v1070, %v1230
      %v1232 = vpop.f32.mrb[0].mxu0
      %v1233 = vpop.f32.mrb[0].mxu0
      %v1234 = vadd.f32 %v1073, %v1233
      %v1235 = vpop.f32.mrb[0].mxu0
      %1236 = vmatprep.mubr.bf16.mxu0 %v686
      %1237 = vmatmul.mubr.bf16.gmra.mrb[0].mxu0 %v685
      %v1238 = vpop.f32.mrb[0].mxu0
      %v1239 = vadd.f32 %v1078, %v1238
      %v1240 = vpop.f32.mrb[0].mxu0
      %v1241 = vpop.f32.mrb[0].mxu0
      %v1242 = vadd.f32 %v1081, %v1241
      %v1243 = vpop.f32.mrb[0].mxu0
      %1244 = vmatprep.mubr.bf16.mxu0 %v690
      %1245 = vmatmul.mubr.bf16.gmra.mrb[0].mxu0 %v689
      %v1246 = vpop.f32.mrb[0].mxu0
      %v1247 = vadd.f32 %v1086, %v1246
      %v1248 = vpop.f32.mrb[0].mxu0
      %v1249 = vpop.f32.mrb[0].mxu0
      %v1250 = vadd.f32 %v1089, %v1249
      %v1251 = vpop.f32.mrb[0].mxu0
      %1252 = vmatprep.mubr.bf16.mxu0 %v694
      %1253 = vmatmul.mubr.bf16.gmra.mrb[0].mxu0 %v693
      %v1254 = vpop.f32.mrb[0].mxu0
      %v1255 = vadd.f32 %v1094, %v1254
      %v1256 = vpop.f32.mrb[0].mxu0
      %v1257 = vpop.f32.mrb[0].mxu0
      %v1258 = vadd.f32 %v1097, %v1257
      %v1259 = vpop.f32.mrb[0].mxu0
      %1260 = vmatprep.mubr.bf16.mxu0 %v698
      %1261 = vmatmul.mubr.bf16.gmra.mrb[0].mxu0 %v697
      %v1262 = vpop.f32.mrb[0].mxu0
      %v1263 = vadd.f32 %v1102, %v1262
      %v1264 = vpop.f32.mrb[0].mxu0
      %v1265 = vpop.f32.mrb[0].mxu0
      %v1266 = vadd.f32 %v1105, %v1265
      %v1267 = vpop.f32.mrb[0].mxu0
      %1268 = vmatprep.mubr.bf16.mxu0 %v702
      %1269 = vmatmul.mubr.bf16.gmra.mrb[0].mxu0 %v701
      %v1270 = vpop.f32.mrb[0].mxu0
      %v1271 = vadd.f32 %v1110, %v1270
      %v1272 = vpop.f32.mrb[0].mxu0
      %v1273 = vpop.f32.mrb[0].mxu0
      %v1274 = vadd.f32 %v1113, %v1273
      %v1275 = vpop.f32.mrb[0].mxu0
      %1276 = vmatprep.mubr.bf16.mxu0 %v706
      %1277 = vmatmul.mubr.bf16.gmra.mrb[0].mxu0 %v705
      %v1278 = vpop.f32.mrb[0].mxu0
      %v1279 = vadd.f32 %v1118, %v1278
      %v1280 = vpop.f32.mrb[0].mxu0
      %v1281 = vpop.f32.mrb[0].mxu0
      %v1282 = vadd.f32 %v1121, %v1281
      %v1283 = vpop.f32.mrb[0].mxu0
      %1284 = vdwg.mxu0
      %v1285 = vadd.f32 %v291, %v1159
      %v1286 = vadd.f32 %v292, %v1162
      %v1287 = vadd.f32 %v293, %v1167
      %v1288 = vadd.f32 %v294, %v1170
      %v1289 = vadd.f32 %v295, %v1175
      %v1290 = vadd.f32 %v296, %v1178
      %v1291 = vadd.f32 %v297, %v1183
      %v1292 = vadd.f32 %v298, %v1186
      %v1293 = vadd.f32 %v299, %v1191
      %v1294 = vadd.f32 %v300, %v1194
      %v1295 = vadd.f32 %v301, %v1199
      %v1296 = vadd.f32 %v302, %v1202
      %v1297 = vadd.f32 %v303, %v1207
      %v1298 = vadd.f32 %v304, %v1210
      %v1299 = vadd.f32 %v305, %v1215
      %v1300 = vadd.f32 %v306, %v1218
      %v1301 = vadd.f32 %v307, %v1223
      %v1302 = vadd.f32 %v308, %v1226
      %v1303 = vadd.f32 %v309, %v1231
      %v1304 = vadd.f32 %v310, %v1234
      %v1305 = vadd.f32 %v311, %v1239
      %v1306 = vadd.f32 %v312, %v1242
      %v1307 = vadd.f32 %v313, %v1247
      %v1308 = vadd.f32 %v314, %v1250
      %v1309 = vadd.f32 %v315, %v1255
      %v1310 = vadd.f32 %v316, %v1258
      %v1311 = vadd.f32 %v317, %v1263
      %v1312 = vadd.f32 %v318, %v1266
      %v1313 = vadd.f32 %v319, %v1271
      %v1314 = vadd.f32 %v320, %v1274
      %v1315 = vadd.f32 %v321, %v1279
      %v1316 = vadd.f32 %v322, %v1282
      %1317 = vst [vmem:[#allocation2] sm:$0xff] %v1285
      %1318 = vst [vmem:[#allocation2 + $0x8] sm:$0xff] %v1286
      %1319 = vst [vmem:[#allocation2 + $0x10] sm:$0xff] %v1287
      %1320 = vst [vmem:[#allocation2 + $0x18] sm:$0xff] %v1288
      %1321 = vst [vmem:[#allocation2 + $0x20] sm:$0xff] %v1289
      %1322 = vst [vmem:[#allocation2 + $0x28] sm:$0xff] %v1290
      %1323 = vst [vmem:[#allocation2 + $0x30] sm:$0xff] %v1291
      %1324 = vst [vmem:[#allocation2 + $0x38] sm:$0xff] %v1292
      %1325 = vst [vmem:[#allocation2 + $0x40] sm:$0xff] %v1293
      %1326 = vst [vmem:[#allocation2 + $0x48] sm:$0xff] %v1294
      %1327 = vst [vmem:[#allocation2 + $0x50] sm:$0xff] %v1295
      %1328 = vst [vmem:[#allocation2 + $0x58] sm:$0xff] %v1296
      %1329 = vst [vmem:[#allocation2 + $0x60] sm:$0xff] %v1297
      %1330 = vst [vmem:[#allocation2 + $0x68] sm:$0xff] %v1298
      %1331 = vst [vmem:[#allocation2 + $0x70] sm:$0xff] %v1299
      %1332 = vst [vmem:[#allocation2 + $0x78] sm:$0xff] %v1300
      %1333 = vst [vmem:[#allocation2 + $0x80] sm:$0xff] %v1301
      %1334 = vst [vmem:[#allocation2 + $0x88] sm:$0xff] %v1302
      %1335 = vst [vmem:[#allocation2 + $0x90] sm:$0xff] %v1303
      %1336 = vst [vmem:[#allocation2 + $0x98] sm:$0xff] %v1304
      %1337 = vst [vmem:[#allocation2 + $0xa0] sm:$0xff] %v1305
      %1338 = vst [vmem:[#allocation2 + $0xa8] sm:$0xff] %v1306
      %1339 = vst [vmem:[#allocation2 + $0xb0] sm:$0xff] %v1307
      %1340 = vst [vmem:[#allocation2 + $0xb8] sm:$0xff] %v1308
      %1341 = vst [vmem:[#allocation2 + $0xc0] sm:$0xff] %v1309
      %1342 = vst [vmem:[#allocation2 + $0xc8] sm:$0xff] %v1310
      %1343 = vst [vmem:[#allocation2 + $0xd0] sm:$0xff] %v1311
      %1344 = vst [vmem:[#allocation2 + $0xd8] sm:$0xff] %v1312
      %1345 = vst [vmem:[#allocation2 + $0xe0] sm:$0xff] %v1313
      %1346 = vst [vmem:[#allocation2 + $0xe8] sm:$0xff] %v1314
      %1347 = vst [vmem:[#allocation2 + $0xf0] sm:$0xff] %v1315
      %1348 = vst [vmem:[#allocation2 + $0xf8] sm:$0xff] %v1316
      // Predicated region
      $region41: #{gcn_forward.4} parent=35 // pred_check
        %p1349 = pneg %p255
      $region42: #{gcn_forward.4} parent=35 // pred_check_branch
        %1351 = sbr.rel (%p1349) target = $region44
      $region43: #{gcn_forward.4} parent=35 // pred_region
        %v1352 = vld [vmem:[#allocation2] sm:$0xff]
        %v1353 = vld [vmem:[#allocation2 + $0x8] sm:$0xff]
        %v1354 = vld [vmem:[#allocation2 + $0x10] sm:$0xff]
        %v1355 = vld [vmem:[#allocation2 + $0x18] sm:$0xff]
        %v1356 = vld [vmem:[#allocation2 + $0x20] sm:$0xff]
        %v1357 = vld [vmem:[#allocation2 + $0x28] sm:$0xff]
        %v1358 = vld [vmem:[#allocation2 + $0x30] sm:$0xff]
        %v1359 = vld [vmem:[#allocation2 + $0x38] sm:$0xff]
        %v1360 = vld [vmem:[#allocation2 + $0x40] sm:$0xff]
        %v1361 = vld [vmem:[#allocation2 + $0x48] sm:$0xff]
        %v1362 = vld [vmem:[#allocation2 + $0x50] sm:$0xff]
        %v1363 = vld [vmem:[#allocation2 + $0x58] sm:$0xff]
        %v1364 = vld [vmem:[#allocation2 + $0x60] sm:$0xff]
        %v1365 = vld [vmem:[#allocation2 + $0x68] sm:$0xff]
        %v1366 = vld [vmem:[#allocation2 + $0x70] sm:$0xff]
        %v1367 = vld [vmem:[#allocation2 + $0x78] sm:$0xff]
        %v1368 = vld [vmem:[#allocation2 + $0x80] sm:$0xff]
        %v1369 = vld [vmem:[#allocation2 + $0x88] sm:$0xff]
        %v1370 = vld [vmem:[#allocation2 + $0x90] sm:$0xff]
        %v1371 = vld [vmem:[#allocation2 + $0x98] sm:$0xff]
        %v1372 = vld [vmem:[#allocation2 + $0xa0] sm:$0xff]
        %v1373 = vld [vmem:[#allocation2 + $0xa8] sm:$0xff]
        %v1374 = vld [vmem:[#allocation2 + $0xb0] sm:$0xff]
        %v1375 = vld [vmem:[#allocation2 + $0xb8] sm:$0xff]
        %v1376 = vld [vmem:[#allocation2 + $0xc0] sm:$0xff]
        %v1377 = vld [vmem:[#allocation2 + $0xc8] sm:$0xff]
        %v1378 = vld [vmem:[#allocation2 + $0xd0] sm:$0xff]
        %v1379 = vld [vmem:[#allocation2 + $0xd8] sm:$0xff]
        %v1380 = vld [vmem:[#allocation2 + $0xe0] sm:$0xff]
        %v1381 = vld [vmem:[#allocation2 + $0xe8] sm:$0xff]
        %v1382 = vld [vmem:[#allocation2 + $0xf0] sm:$0xff]
        %v1383 = vld [vmem:[#allocation2 + $0xf8] sm:$0xff]
        %v1384 = vld [vmem:[%s2] sm:$0x1]
        %v1386 = vlaneseq
        %v1387 = vshrl.u32 %v1386, 7
        %v1388 = vsub.s32 0, %v1387
        %v1389 = vrot.slane %v1384, %v1388
        %v1391 = vadd.f32 %v1352, %v1389
        %v1392 = vadd.f32 %v1353, %v1389
        %v1393 = vadd.f32 %v1354, %v1389
        %v1394 = vadd.f32 %v1355, %v1389
        %v1395 = vadd.f32 %v1356, %v1389
        %v1396 = vadd.f32 %v1357, %v1389
        %v1397 = vadd.f32 %v1358, %v1389
        %v1398 = vadd.f32 %v1359, %v1389
        %v1399 = vadd.f32 %v1360, %v1389
        %v1400 = vadd.f32 %v1361, %v1389
        %v1401 = vadd.f32 %v1362, %v1389
        %v1402 = vadd.f32 %v1363, %v1389
        %v1403 = vadd.f32 %v1364, %v1389
        %v1404 = vadd.f32 %v1365, %v1389
        %v1405 = vadd.f32 %v1366, %v1389
        %v1406 = vadd.f32 %v1367, %v1389
        %v1407 = vadd.f32 %v1368, %v1389
        %v1408 = vadd.f32 %v1369, %v1389
        %v1409 = vadd.f32 %v1370, %v1389
        %v1410 = vadd.f32 %v1371, %v1389
        %v1411 = vadd.f32 %v1372, %v1389
        %v1412 = vadd.f32 %v1373, %v1389
        %v1413 = vadd.f32 %v1374, %v1389
        %v1414 = vadd.f32 %v1375, %v1389
        %v1415 = vadd.f32 %v1376, %v1389
        %v1416 = vadd.f32 %v1377, %v1389
        %v1417 = vadd.f32 %v1378, %v1389
        %v1418 = vadd.f32 %v1379, %v1389
        %v1419 = vadd.f32 %v1380, %v1389
        %v1420 = vadd.f32 %v1381, %v1389
        %v1421 = vadd.f32 %v1382, %v1389
        %v1422 = vadd.f32 %v1383, %v1389
        %v1423 = vmax.f32 %v1391, 0.0
        %v1424 = vmax.f32 %v1392, 0.0
        %v1425 = vmax.f32 %v1393, 0.0
        %v1426 = vmax.f32 %v1394, 0.0
        %v1427 = vmax.f32 %v1395, 0.0
        %v1428 = vmax.f32 %v1396, 0.0
        %v1429 = vmax.f32 %v1397, 0.0
        %v1430 = vmax.f32 %v1398, 0.0
        %v1431 = vmax.f32 %v1399, 0.0
        %v1432 = vmax.f32 %v1400, 0.0
        %v1433 = vmax.f32 %v1401, 0.0
        %v1434 = vmax.f32 %v1402, 0.0
        %v1435 = vmax.f32 %v1403, 0.0
        %v1436 = vmax.f32 %v1404, 0.0
        %v1437 = vmax.f32 %v1405, 0.0
        %v1438 = vmax.f32 %v1406, 0.0
        %v1439 = vmax.f32 %v1407, 0.0
        %v1440 = vmax.f32 %v1408, 0.0
        %v1441 = vmax.f32 %v1409, 0.0
        %v1442 = vmax.f32 %v1410, 0.0
        %v1443 = vmax.f32 %v1411, 0.0
        %v1444 = vmax.f32 %v1412, 0.0
        %v1445 = vmax.f32 %v1413, 0.0
        %v1446 = vmax.f32 %v1414, 0.0
        %v1447 = vmax.f32 %v1415, 0.0
        %v1448 = vmax.f32 %v1416, 0.0
        %v1449 = vmax.f32 %v1417, 0.0
        %v1450 = vmax.f32 %v1418, 0.0
        %v1451 = vmax.f32 %v1419, 0.0
        %v1452 = vmax.f32 %v1420, 0.0
        %v1453 = vmax.f32 %v1421, 0.0
        %v1454 = vmax.f32 %v1422, 0.0
        %v1455 = vpack.c.bf16 %v1424, %v1423
        %v1456 = vpack.c.bf16 %v1426, %v1425
        %v1457 = vpack.c.bf16 %v1428, %v1427
        %v1458 = vpack.c.bf16 %v1430, %v1429
        %v1459 = vpack.c.bf16 %v1432, %v1431
        %v1460 = vpack.c.bf16 %v1434, %v1433
        %v1461 = vpack.c.bf16 %v1436, %v1435
        %v1462 = vpack.c.bf16 %v1438, %v1437
        %v1463 = vpack.c.bf16 %v1440, %v1439
        %v1464 = vpack.c.bf16 %v1442, %v1441
        %v1465 = vpack.c.bf16 %v1444, %v1443
        %v1466 = vpack.c.bf16 %v1446, %v1445
        %v1467 = vpack.c.bf16 %v1448, %v1447
        %v1468 = vpack.c.bf16 %v1450, %v1449
        %v1469 = vpack.c.bf16 %v1452, %v1451
        %v1470 = vpack.c.bf16 %v1454, %v1453
        %v1471 = vld [vmem:[%s3] sm:$0xf]
        %v1472 = vld [vmem:[%s3 + $0x4] sm:$0xf]
        %v1473 = vld [vmem:[%s3 + $0x8] sm:$0xf]
        %v1474 = vld [vmem:[%s3 + $0xc] sm:$0xf]
        %v1475 = vld [vmem:[%s3 + $0x10] sm:$0xf]
        %v1476 = vld [vmem:[%s3 + $0x14] sm:$0xf]
        %v1477 = vld [vmem:[%s3 + $0x18] sm:$0xf]
        %v1478 = vld [vmem:[%s3 + $0x1c] sm:$0xf]
        %v1479 = vld [vmem:[%s3 + $0x20] sm:$0xf]
        %v1480 = vld [vmem:[%s3 + $0x24] sm:$0xf]
        %v1481 = vld [vmem:[%s3 + $0x28] sm:$0xf]
        %v1482 = vld [vmem:[%s3 + $0x2c] sm:$0xf]
        %v1483 = vld [vmem:[%s3 + $0x30] sm:$0xf]
        %v1484 = vld [vmem:[%s3 + $0x34] sm:$0xf]
        %v1485 = vld [vmem:[%s3 + $0x38] sm:$0xf]
        %v1486 = vld [vmem:[%s3 + $0x3c] sm:$0xf]
        %v1503 = vunpack.c.l.b16 %v1471
        %v1504 = vunpack.c.l.b16 %v1472
        %v1505 = vunpack.c.l.b16 %v1473
        %v1506 = vunpack.c.l.b16 %v1474
        %v1507 = vunpack.c.l.b16 %v1475
        %v1508 = vunpack.c.l.b16 %v1476
        %v1509 = vunpack.c.l.b16 %v1477
        %v1510 = vunpack.c.l.b16 %v1478
        %v1511 = vunpack.c.l.b16 %v1479
        %v1512 = vunpack.c.l.b16 %v1480
        %v1513 = vunpack.c.l.b16 %v1481
        %v1514 = vunpack.c.l.b16 %v1482
        %v1515 = vunpack.c.l.b16 %v1483
        %v1516 = vunpack.c.l.b16 %v1484
        %v1517 = vunpack.c.l.b16 %v1485
        %v1518 = vunpack.c.l.b16 %v1486
        %v1519 = vpack.c.b16 %v1504, %v1503
        %v1520 = vpack.c.b16 %v1506, %v1505
        %v1521 = vpack.c.b16 %v1508, %v1507
        %v1522 = vpack.c.b16 %v1510, %v1509
        %v1523 = vpack.c.b16 %v1512, %v1511
        %v1524 = vpack.c.b16 %v1514, %v1513
        %v1525 = vpack.c.b16 %v1516, %v1515
        %v1526 = vpack.c.b16 %v1518, %v1517
        %1535 = vmatprep.subr.bf16.mxu0 0
        %1536 = vmatpush1.bf16.msra.mxu0 %v1519
        %1537 = vmatprep.subr.bf16.mxu0 0
        %1538 = vmatpush1.bf16.msra.mxu0 %v1520
        %1539 = vmatprep.subr.bf16.mxu0 0
        %1540 = vmatpush1.bf16.msra.mxu0 %v1521
        %1541 = vmatprep.subr.bf16.mxu0 0
        %1542 = vmatpush1.bf16.msra.mxu0 %v1522
        %1543 = vmatprep.subr.bf16.mxu0 0
        %1544 = vmatpush1.bf16.msra.mxu0 %v1523
        %1545 = vmatprep.subr.bf16.mxu0 0
        %1546 = vmatpush1.bf16.msra.mxu0 %v1524
        %1547 = vmatprep.subr.bf16.mxu0 0
        %1548 = vmatpush1.bf16.msra.mxu0 %v1525
        %1549 = vmatprep.subr.bf16.mxu0 0
        %1550 = vmatpush1.bf16.msra.mxu0 %v1526
        %1551 = vmatprep.subr.bf16.mxu0 0
        %1552 = vmatpush1.bf16.msra.mxu0 0
        %1553 = vmatprep.subr.bf16.mxu0 0
        %1554 = vmatpush1.bf16.msra.mxu0 0
        %1555 = vmatprep.subr.bf16.mxu0 0
        %1556 = vmatpush1.bf16.msra.mxu0 0
        %1557 = vmatprep.subr.bf16.mxu0 0
        %1558 = vmatpush1.bf16.msra.mxu0 0
        %1559 = vmatprep.subr.bf16.mxu0 0
        %1560 = vmatpush1.bf16.msra.mxu0 0
        %1561 = vmatprep.subr.bf16.mxu0 0
        %1562 = vmatpush1.bf16.msra.mxu0 0
        %1563 = vmatprep.subr.bf16.mxu0 0
        %1564 = vmatpush1.bf16.msra.mxu0 0
        %1565 = vmatprep.subr.bf16.mxu0 0
        %1566 = vmatpush1.bf16.msra.mxu0 0
        %1567 = vmatprep.mubr.bf16.mxu0 0
        %1568 = vmatmul.mubr.bf16.gmra.mrb[0].mxu0 %v1455
        %v1569 = vpop.f32.mrb[0].mxu0
        %v1570 = vadd.f32 0.0, %v1569
        %v1571 = vpop.f32.mrb[0].mxu0
        %v1572 = vpop.f32.mrb[0].mxu0
        %v1573 = vadd.f32 0.0, %v1572
        %v1574 = vpop.f32.mrb[0].mxu0
        %1575 = vmatprep.mubr.bf16.mxu0 0
        %1576 = vmatmul.mubr.bf16.gmra.mrb[0].mxu0 %v1456
        %v1577 = vpop.f32.mrb[0].mxu0
        %v1578 = vadd.f32 0.0, %v1577
        %v1579 = vpop.f32.mrb[0].mxu0
        %v1580 = vpop.f32.mrb[0].mxu0
        %v1581 = vadd.f32 0.0, %v1580
        %v1582 = vpop.f32.mrb[0].mxu0
        %1583 = vmatprep.mubr.bf16.mxu0 0
        %1584 = vmatmul.mubr.bf16.gmra.mrb[0].mxu0 %v1457
        %v1585 = vpop.f32.mrb[0].mxu0
        %v1586 = vadd.f32 0.0, %v1585
        %v1587 = vpop.f32.mrb[0].mxu0
        %v1588 = vpop.f32.mrb[0].mxu0
        %v1589 = vadd.f32 0.0, %v1588
        %v1590 = vpop.f32.mrb[0].mxu0
        %1591 = vmatprep.mubr.bf16.mxu0 0
        %1592 = vmatmul.mubr.bf16.gmra.mrb[0].mxu0 %v1458
        %v1593 = vpop.f32.mrb[0].mxu0
        %v1594 = vadd.f32 0.0, %v1593
        %v1595 = vpop.f32.mrb[0].mxu0
        %v1596 = vpop.f32.mrb[0].mxu0
        %v1597 = vadd.f32 0.0, %v1596
        %v1598 = vpop.f32.mrb[0].mxu0
        %1599 = vmatprep.mubr.bf16.mxu0 0
        %1600 = vmatmul.mubr.bf16.gmra.mrb[0].mxu0 %v1459
        %v1601 = vpop.f32.mrb[0].mxu0
        %v1602 = vadd.f32 0.0, %v1601
        %v1603 = vpop.f32.mrb[0].mxu0
        %v1604 = vpop.f32.mrb[0].mxu0
        %v1605 = vadd.f32 0.0, %v1604
        %v1606 = vpop.f32.mrb[0].mxu0
        %1607 = vmatprep.mubr.bf16.mxu0 0
        %1608 = vmatmul.mubr.bf16.gmra.mrb[0].mxu0 %v1460
        %v1609 = vpop.f32.mrb[0].mxu0
        %v1610 = vadd.f32 0.0, %v1609
        %v1611 = vpop.f32.mrb[0].mxu0
        %v1612 = vpop.f32.mrb[0].mxu0
        %v1613 = vadd.f32 0.0, %v1612
        %v1614 = vpop.f32.mrb[0].mxu0
        %1615 = vmatprep.mubr.bf16.mxu0 0
        %1616 = vmatmul.mubr.bf16.gmra.mrb[0].mxu0 %v1461
        %v1617 = vpop.f32.mrb[0].mxu0
        %v1618 = vadd.f32 0.0, %v1617
        %v1619 = vpop.f32.mrb[0].mxu0
        %v1620 = vpop.f32.mrb[0].mxu0
        %v1621 = vadd.f32 0.0, %v1620
        %v1622 = vpop.f32.mrb[0].mxu0
        %1623 = vmatprep.mubr.bf16.mxu0 0
        %1624 = vmatmul.mubr.bf16.gmra.mrb[0].mxu0 %v1462
        %v1625 = vpop.f32.mrb[0].mxu0
        %v1626 = vadd.f32 0.0, %v1625
        %v1627 = vpop.f32.mrb[0].mxu0
        %v1628 = vpop.f32.mrb[0].mxu0
        %v1629 = vadd.f32 0.0, %v1628
        %v1630 = vpop.f32.mrb[0].mxu0
        %1631 = vmatprep.mubr.bf16.mxu0 0
        %1632 = vmatmul.mubr.bf16.gmra.mrb[0].mxu0 %v1463
        %v1633 = vpop.f32.mrb[0].mxu0
        %v1634 = vadd.f32 0.0, %v1633
        %v1635 = vpop.f32.mrb[0].mxu0
        %v1636 = vpop.f32.mrb[0].mxu0
        %v1637 = vadd.f32 0.0, %v1636
        %v1638 = vpop.f32.mrb[0].mxu0
        %1639 = vmatprep.mubr.bf16.mxu0 0
        %1640 = vmatmul.mubr.bf16.gmra.mrb[0].mxu0 %v1464
        %v1641 = vpop.f32.mrb[0].mxu0
        %v1642 = vadd.f32 0.0, %v1641
        %v1643 = vpop.f32.mrb[0].mxu0
        %v1644 = vpop.f32.mrb[0].mxu0
        %v1645 = vadd.f32 0.0, %v1644
        %v1646 = vpop.f32.mrb[0].mxu0
        %1647 = vmatprep.mubr.bf16.mxu0 0
        %1648 = vmatmul.mubr.bf16.gmra.mrb[0].mxu0 %v1465
        %v1649 = vpop.f32.mrb[0].mxu0
        %v1650 = vadd.f32 0.0, %v1649
        %v1651 = vpop.f32.mrb[0].mxu0
        %v1652 = vpop.f32.mrb[0].mxu0
        %v1653 = vadd.f32 0.0, %v1652
        %v1654 = vpop.f32.mrb[0].mxu0
        %1655 = vmatprep.mubr.bf16.mxu0 0
        %1656 = vmatmul.mubr.bf16.gmra.mrb[0].mxu0 %v1466
        %v1657 = vpop.f32.mrb[0].mxu0
        %v1658 = vadd.f32 0.0, %v1657
        %v1659 = vpop.f32.mrb[0].mxu0
        %v1660 = vpop.f32.mrb[0].mxu0
        %v1661 = vadd.f32 0.0, %v1660
        %v1662 = vpop.f32.mrb[0].mxu0
        %1663 = vmatprep.mubr.bf16.mxu0 0
        %1664 = vmatmul.mubr.bf16.gmra.mrb[0].mxu0 %v1467
        %v1665 = vpop.f32.mrb[0].mxu0
        %v1666 = vadd.f32 0.0, %v1665
        %v1667 = vpop.f32.mrb[0].mxu0
        %v1668 = vpop.f32.mrb[0].mxu0
        %v1669 = vadd.f32 0.0, %v1668
        %v1670 = vpop.f32.mrb[0].mxu0
        %1671 = vmatprep.mubr.bf16.mxu0 0
        %1672 = vmatmul.mubr.bf16.gmra.mrb[0].mxu0 %v1468
        %v1673 = vpop.f32.mrb[0].mxu0
        %v1674 = vadd.f32 0.0, %v1673
        %v1675 = vpop.f32.mrb[0].mxu0
        %v1676 = vpop.f32.mrb[0].mxu0
        %v1677 = vadd.f32 0.0, %v1676
        %v1678 = vpop.f32.mrb[0].mxu0
        %1679 = vmatprep.mubr.bf16.mxu0 0
        %1680 = vmatmul.mubr.bf16.gmra.mrb[0].mxu0 %v1469
        %v1681 = vpop.f32.mrb[0].mxu0
        %v1682 = vadd.f32 0.0, %v1681
        %v1683 = vpop.f32.mrb[0].mxu0
        %v1684 = vpop.f32.mrb[0].mxu0
        %v1685 = vadd.f32 0.0, %v1684
        %v1686 = vpop.f32.mrb[0].mxu0
        %1687 = vmatprep.mubr.bf16.mxu0 0
        %1688 = vmatmul.mubr.bf16.gmra.mrb[0].mxu0 %v1470
        %v1689 = vpop.f32.mrb[0].mxu0
        %v1690 = vadd.f32 0.0, %v1689
        %v1691 = vpop.f32.mrb[0].mxu0
        %v1692 = vpop.f32.mrb[0].mxu0
        %v1693 = vadd.f32 0.0, %v1692
        %v1694 = vpop.f32.mrb[0].mxu0
        %1695 = vdwg.mxu0
        %v1696 = vpack.c.bf16 %v1573, %v1570
        %v1697 = vpack.c.bf16 %v1581, %v1578
        %v1698 = vpack.c.bf16 %v1589, %v1586
        %v1699 = vpack.c.bf16 %v1597, %v1594
        %v1700 = vpack.c.bf16 %v1605, %v1602
        %v1701 = vpack.c.bf16 %v1613, %v1610
        %v1702 = vpack.c.bf16 %v1621, %v1618
        %v1703 = vpack.c.bf16 %v1629, %v1626
        %v1704 = vpack.c.bf16 %v1637, %v1634
        %v1705 = vpack.c.bf16 %v1645, %v1642
        %v1706 = vpack.c.bf16 %v1653, %v1650
        %v1707 = vpack.c.bf16 %v1661, %v1658
        %v1708 = vpack.c.bf16 %v1669, %v1666
        %v1709 = vpack.c.bf16 %v1677, %v1674
        %v1710 = vpack.c.bf16 %v1685, %v1682
        %v1711 = vpack.c.bf16 %v1693, %v1690
        %v1728 = vunpack.c.l.b16 %v1696
        %v1729 = vunpack.c.h.b16 %v1696
        %v1730 = vunpack.c.l.b16 %v1697
        %v1731 = vunpack.c.h.b16 %v1697
        %v1732 = vunpack.c.l.b16 %v1698
        %v1733 = vunpack.c.h.b16 %v1698
        %v1734 = vunpack.c.l.b16 %v1699
        %v1735 = vunpack.c.h.b16 %v1699
        %v1736 = vunpack.c.l.b16 %v1700
        %v1737 = vunpack.c.h.b16 %v1700
        %v1738 = vunpack.c.l.b16 %v1701
        %v1739 = vunpack.c.h.b16 %v1701
        %v1740 = vunpack.c.l.b16 %v1702
        %v1741 = vunpack.c.h.b16 %v1702
        %v1742 = vunpack.c.l.b16 %v1703
        %v1743 = vunpack.c.h.b16 %v1703
        %v1744 = vunpack.c.l.b16 %v1704
        %v1745 = vunpack.c.h.b16 %v1704
        %v1746 = vunpack.c.l.b16 %v1705
        %v1747 = vunpack.c.h.b16 %v1705
        %v1748 = vunpack.c.l.b16 %v1706
        %v1749 = vunpack.c.h.b16 %v1706
        %v1750 = vunpack.c.l.b16 %v1707
        %v1751 = vunpack.c.h.b16 %v1707
        %v1752 = vunpack.c.l.b16 %v1708
        %v1753 = vunpack.c.h.b16 %v1708
        %v1754 = vunpack.c.l.b16 %v1709
        %v1755 = vunpack.c.h.b16 %v1709
        %v1756 = vunpack.c.l.b16 %v1710
        %v1757 = vunpack.c.h.b16 %v1710
        %v1758 = vunpack.c.l.b16 %v1711
        %v1759 = vunpack.c.h.b16 %v1711
        %v1760 = vpack.c.b16 %v1728, %v1728
        %v1761 = vpack.c.b16 %v1729, %v1729
        %v1762 = vpack.c.b16 %v1730, %v1730
        %v1763 = vpack.c.b16 %v1731, %v1731
        %v1764 = vpack.c.b16 %v1732, %v1732
        %v1765 = vpack.c.b16 %v1733, %v1733
        %v1766 = vpack.c.b16 %v1734, %v1734
        %v1767 = vpack.c.b16 %v1735, %v1735
        %v1768 = vpack.c.b16 %v1736, %v1736
        %v1769 = vpack.c.b16 %v1737, %v1737
        %v1770 = vpack.c.b16 %v1738, %v1738
        %v1771 = vpack.c.b16 %v1739, %v1739
        %v1772 = vpack.c.b16 %v1740, %v1740
        %v1773 = vpack.c.b16 %v1741, %v1741
        %v1774 = vpack.c.b16 %v1742, %v1742
        %v1775 = vpack.c.b16 %v1743, %v1743
        %v1776 = vpack.c.b16 %v1744, %v1744
        %v1777 = vpack.c.b16 %v1745, %v1745
        %v1778 = vpack.c.b16 %v1746, %v1746
        %v1779 = vpack.c.b16 %v1747, %v1747
        %v1780 = vpack.c.b16 %v1748, %v1748
        %v1781 = vpack.c.b16 %v1749, %v1749
        %v1782 = vpack.c.b16 %v1750, %v1750
        %v1783 = vpack.c.b16 %v1751, %v1751
        %v1784 = vpack.c.b16 %v1752, %v1752
        %v1785 = vpack.c.b16 %v1753, %v1753
        %v1786 = vpack.c.b16 %v1754, %v1754
        %v1787 = vpack.c.b16 %v1755, %v1755
        %v1788 = vpack.c.b16 %v1756, %v1756
        %v1789 = vpack.c.b16 %v1757, %v1757
        %v1790 = vpack.c.b16 %v1758, %v1758
        %v1791 = vpack.c.b16 %v1759, %v1759
        %1824 = vst [vmem:[%s252] sm:$0xf] %v1760
        %1825 = vst [vmem:[%s252 + $0x4] sm:$0xf] %v1761
        %1826 = vst [vmem:[%s252 + $0x8] sm:$0xf] %v1762
        %1827 = vst [vmem:[%s252 + $0xc] sm:$0xf] %v1763
        %1828 = vst [vmem:[%s252 + $0x10] sm:$0xf] %v1764
        %1829 = vst [vmem:[%s252 + $0x14] sm:$0xf] %v1765
        %1830 = vst [vmem:[%s252 + $0x18] sm:$0xf] %v1766
        %1831 = vst [vmem:[%s252 + $0x1c] sm:$0xf] %v1767
        %1832 = vst [vmem:[%s252 + $0x20] sm:$0xf] %v1768
        %1833 = vst [vmem:[%s252 + $0x24] sm:$0xf] %v1769
        %1834 = vst [vmem:[%s252 + $0x28] sm:$0xf] %v1770
        %1835 = vst [vmem:[%s252 + $0x2c] sm:$0xf] %v1771
        %1836 = vst [vmem:[%s252 + $0x30] sm:$0xf] %v1772
        %1837 = vst [vmem:[%s252 + $0x34] sm:$0xf] %v1773
        %1838 = vst [vmem:[%s252 + $0x38] sm:$0xf] %v1774
        %1839 = vst [vmem:[%s252 + $0x3c] sm:$0xf] %v1775
        %1840 = vst [vmem:[%s252 + $0x40] sm:$0xf] %v1776
        %1841 = vst [vmem:[%s252 + $0x44] sm:$0xf] %v1777
        %1842 = vst [vmem:[%s252 + $0x48] sm:$0xf] %v1778
        %1843 = vst [vmem:[%s252 + $0x4c] sm:$0xf] %v1779
        %1844 = vst [vmem:[%s252 + $0x50] sm:$0xf] %v1780
        %1845 = vst [vmem:[%s252 + $0x54] sm:$0xf] %v1781
        %1846 = vst [vmem:[%s252 + $0x58] sm:$0xf] %v1782
        %1847 = vst [vmem:[%s252 + $0x5c] sm:$0xf] %v1783
        %1848 = vst [vmem:[%s252 + $0x60] sm:$0xf] %v1784
        %1849 = vst [vmem:[%s252 + $0x64] sm:$0xf] %v1785
        %1850 = vst [vmem:[%s252 + $0x68] sm:$0xf] %v1786
        %1851 = vst [vmem:[%s252 + $0x6c] sm:$0xf] %v1787
        %1852 = vst [vmem:[%s252 + $0x70] sm:$0xf] %v1788
        %1853 = vst [vmem:[%s252 + $0x74] sm:$0xf] %v1789
        %1854 = vst [vmem:[%s252 + $0x78] sm:$0xf] %v1790
        %1855 = vst [vmem:[%s252 + $0x7c] sm:$0xf] %v1791
      $region44: #{gcn_forward.4} parent=35 // pred_fallthru
        _
      %s1856 = smul.u32 32, %s19
      %p1857 = scmp.lt.s32.totalorder %s1856, 63
      %s1858 = scalar_select %p1857, %s1856, 63
      %s1859 = smul.addr %s1858, 4
      %s1860 = scalar_lea.vmem %s4, %s1859
      // Predicated region
      $region45: #{gcn_forward.4} parent=35 // pred_check
        %p1861 = pneg %p141
      $region46: #{gcn_forward.4} parent=35 // pred_check_branch
        %1863 = sbr.rel (%p1861) target = $region48
      $region47: #{gcn_forward.4} parent=35 // pred_region
        %s1864 = smul.u32 32, %s19
      $region48: #{gcn_forward.4} parent=35 // pred_fallthru
        _
    $region36: #{gcn_forward.4} parent=5 // pred_fallthru
      _
    %p1865 = scmp.le.s32.totalorder 2, %s10
    // Predicated region
    $region49: #{gcn_forward.4} parent=5 // pred_check
      %p1866 = pneg %p1865
    $region50: #{gcn_forward.4} parent=5 // pred_check_branch
      %1868 = sbr.rel (%p1866) target = $region52
    $region51: #{gcn_forward.4} parent=5 // pred_region
      %s1869 = ssub.s32 %s10, 2
      // Predicated region
      $region53: #{gcn_forward.4} parent=51 // pred_check
        %p1870 = pneg %p147
      $region54: #{gcn_forward.4} parent=51 // pred_check_branch
        %1872 = sbr.rel (%p1870) target = $region56
      $region55: #{gcn_forward.4} parent=51 // pred_region
        %s1873 = smul.u32 32, %s21
        %p1874 = scmp.lt.s32.totalorder %s1873, 63
        %s1875 = scalar_select %p1874, %s1873, 63
        %s1876 = smul.addr %s1875, 4
        %s1877 = scalar_lea.vmem %s4, %s1876
      $region56: #{gcn_forward.4} parent=51 // pred_fallthru
        _
    $region52: #{gcn_forward.4} parent=5 // pred_fallthru
      _
  $region6: #{gcn_forward.4} parent=0 // loop_footer
    %s14 = sadd.s32 1, %s10
  $region7: #{gcn_forward.4} parent=0 // loop_footer_branch
    %9 = sbr.rel target = $region3
  $region8: #{gcn_forward.4} parent=0 // loop_exit
    _

</llo_original>
